<compile_context>
chip_gen: v7x
topology: tpu7x:2x2x1
jax: 0.10.0
libtpu: 0.0.40
codegen_flags: <defaults>
</compile_context>

<pallas_src>
import jax
import jax.numpy as jnp
from jax.experimental import pallas as pl
from jax.experimental.pallas import tpu as pltpu

D_IN, D_H1, D_H2, D_OUT = 768, 768, 512, 6
D_OUT_PAD = 128  # lane-dense padded output width (multiple of 128)


def _round_up(n, m):
    return ((n + m - 1) // m) * m


def qhd_regressor_kernel(x_ref, w1_ref, b1_ref, w2_ref, b2_ref, w3_ref, b3_ref, o_ref):
    # f32 -> bf16 cast on the VPU (hidden under MXU time); all accumulation f32.
    x = x_ref[...].astype(jnp.bfloat16)
    # Layer 1: [TB,768](bf16) @ [768,768](bf16) -> f32 acc, +bias, ReLU
    h1 = jnp.dot(x, w1_ref[...], preferred_element_type=jnp.float32)
    h1 = jnp.maximum(h1 + b1_ref[...], 0.0).astype(jnp.bfloat16)
    # Layer 2: [TB,768] @ [768,512]
    h2 = jnp.dot(h1, w2_ref[...], preferred_element_type=jnp.float32)
    h2 = jnp.maximum(h2 + b2_ref[...], 0.0).astype(jnp.bfloat16)
    # Layer 3: [TB,512] @ [512,128]  (cols 6..127 are zero padding)
    out = jnp.dot(h2, w3_ref[...], preferred_element_type=jnp.float32)
    o_ref[...] = (out + b3_ref[...]).astype(o_ref.dtype)


def qhd_regressor(x, params, *, block_b=512):
    """x: [B, 768] float32; params from init_params(). Returns [B, 6] float32."""
    w1, b1 = params["w1"], params["b1"]
    w2, b2 = params["w2"], params["b2"]
    w3p, b3p = params["w3_pad"], params["b3_pad"]

    B = x.shape[0]
    # Batch tile: multiple of 16 (bf16 sublane packing), capped at block_b.
    TB = min(block_b, _round_up(max(B, 1), 16))
    # Guarantee >=2 grid steps for mid/large batches so v7x's two TensorCores
    # both participate (costs only one extra ~0.35us step on 1-TC v5e/v6e).
    if B >= 256 and pl.cdiv(B, TB) < 2:
        TB = _round_up(pl.cdiv(B, 2), 16)

    grid = (pl.cdiv(B, TB),)
    const = lambda i: (0, 0)  # weights/biases resident across all batch tiles

    flops = 2 * B * (D_IN * D_H1 + D_H1 * D_H2 + D_H2 * D_OUT_PAD)
    bytes_accessed = (
        (w1.size + w2.size + w3p.size) * 2      # bf16 weights
        + (b1.size + b2.size + b3p.size) * 4    # f32 biases
        + x.size * 4                            # f32 activations in
        + B * D_OUT_PAD * 4                     # f32 output out
    )

    out_padded = pl.pallas_call(
        qhd_regressor_kernel,
        out_shape=jax.ShapeDtypeStruct((B, D_OUT_PAD), jnp.float32),
        grid=grid,
        in_specs=[
            pl.BlockSpec((TB, D_IN), lambda i: (i, 0)),
            pl.BlockSpec((D_IN, D_H1), const, pipeline_mode=pl.Buffered(1)),
            pl.BlockSpec((1, D_H1), const, pipeline_mode=pl.Buffered(1)),
            pl.BlockSpec((D_H1, D_H2), const, pipeline_mode=pl.Buffered(1)),
            pl.BlockSpec((1, D_H2), const, pipeline_mode=pl.Buffered(1)),
            pl.BlockSpec((D_H2, D_OUT_PAD), const, pipeline_mode=pl.Buffered(1)),
            pl.BlockSpec((1, D_OUT_PAD), const, pipeline_mode=pl.Buffered(1)),
        ],
        out_specs=pl.BlockSpec((TB, D_OUT_PAD), lambda i: (i, 0)),
        compiler_params=pltpu.CompilerParams(
            dimension_semantics=("parallel",),
            vmem_limit_bytes=24 << 20,
        ),
        cost_estimate=pl.CostEstimate(
            flops=flops, bytes_accessed=bytes_accessed, transcendentals=0),
    )(x.astype(jnp.float32), w1, b1, w2, b2, w3p, b3p)

    return out_padded[:, :D_OUT]


def init_params(key):
    """Deterministic synthetic init, PyTorch-Linear-style U(-1/sqrt(fan_in), +).

    Weights stored [in_features, out_features] (transposed vs. torch) in bf16;
    biases kept f32 as [1, out_features].  Layer-3 params also provided padded
    to 128 lanes for the kernel."""
    shapes = [(D_IN, D_H1), (D_H1, D_H2), (D_H2, D_OUT)]
    params = {}
    keys = jax.random.split(key, 2 * len(shapes))
    for i, (fan_in, fan_out) in enumerate(shapes):
        bound = 1.0 / jnp.sqrt(jnp.float32(fan_in))
        w = jax.random.uniform(keys[2 * i], (fan_in, fan_out), jnp.float32, -bound, bound)
        b = jax.random.uniform(keys[2 * i + 1], (1, fan_out), jnp.float32, -bound, bound)
        params[f"w{i+1}"] = w.astype(jnp.bfloat16)
        params[f"b{i+1}"] = b
    params["w3_pad"] = jnp.pad(params["w3"], ((0, 0), (0, D_OUT_PAD - D_OUT)))
    params["b3_pad"] = jnp.pad(params["b3"], ((0, 0), (0, D_OUT_PAD - D_OUT)))
    return params


def reference_forward(x, params):
    """Pure-JAX reference mirroring the kernel's bf16 rounding, f32 accumulation."""
    xb = x.astype(jnp.bfloat16).astype(jnp.float32)
    w1 = params["w1"].astype(jnp.float32)
    w2 = params["w2"].astype(jnp.float32)
    w3 = params["w3"].astype(jnp.float32)
    h1 = jnp.maximum(xb @ w1 + params["b1"], 0.0)
    h1 = h1.astype(jnp.bfloat16).astype(jnp.float32)
    h2 = jnp.maximum(h1 @ w2 + params["b2"], 0.0)
    h2 = h2.astype(jnp.bfloat16).astype(jnp.float32)
    return h2 @ w3 + params["b3"]


if __name__ == "__main__":
    key = jax.random.PRNGKey(0)
    k_param, k_x1, k_x2, k_x3 = jax.random.split(key, 4)
    params = init_params(k_param)

    # Small batch (sublane-aligned, single grid step).
    B = 8
    x = jax.random.normal(k_x1, (B, D_IN), jnp.float32)
    out = jax.block_until_ready(qhd_regressor(x, params))
    ref = reference_forward(x, params)
    assert out.shape == (B, D_OUT), out.shape
    assert jnp.allclose(out, ref, atol=1e-2, rtol=1e-2), "mismatch vs reference (B=8)"

    # Ragged batch exercises the masked tail-block path (no wrapper padding).
    B2 = 5
    x2 = jax.random.normal(k_x2, (B2, D_IN), jnp.float32)
    out2 = jax.block_until_ready(qhd_regressor(x2, params))
    ref2 = reference_forward(x2, params)
    assert out2.shape == (B2, D_OUT), out2.shape
    assert jnp.allclose(out2, ref2, atol=1e-2, rtol=1e-2), "mismatch vs reference (B=5)"

    # Multi-step grid path (small TB forced to exercise the pipeline).
    B3 = 40
    x3 = jax.random.normal(k_x3, (B3, D_IN), jnp.float32)
    out3 = jax.block_until_ready(qhd_regressor(x3, params, block_b=16))
    ref3 = reference_forward(x3, params)
    assert out3.shape == (B3, D_OUT), out3.shape
    assert jnp.allclose(out3, ref3, atol=1e-2, rtol=1e-2), "mismatch vs reference (B=40)"

    print("KERNEL_OK")
</pallas_src>

<mosaic_0001>
module attributes {stable_mosaic.version = 11 : i64} {
  func.func @qhd_regressor_kernel(%arg0: i32, %arg1: memref<16x768xf32, #tpu.memory_space<vmem>>, %arg2: memref<768x768xbf16, #tpu.memory_space<vmem>>, %arg3: memref<1x768xf32, #tpu.memory_space<vmem>>, %arg4: memref<768x512xbf16, #tpu.memory_space<vmem>>, %arg5: memref<1x512xf32, #tpu.memory_space<vmem>>, %arg6: memref<512x128xbf16, #tpu.memory_space<vmem>>, %arg7: memref<1x128xf32, #tpu.memory_space<vmem>>, %arg8: memref<16x128xf32, #tpu.memory_space<vmem>>) attributes {dimension_semantics = [#tpu.dimension_semantics<parallel>], iteration_bounds = array<i64: 1>, scalar_prefetch = 0 : i64, scratch_operands = 0 : i64, tpu.core_type = #tpu.core_type<tc>, window_params = [{transform_indices = @transform_0, window_bounds = array<i64: 16, 768>}, {pipeline_mode = #tpu.pipeline_mode<synchronous>, transform_indices = @transform_1, window_bounds = array<i64: 768, 768>}, {pipeline_mode = #tpu.pipeline_mode<synchronous>, transform_indices = @transform_2, window_bounds = array<i64: 1, 768>}, {pipeline_mode = #tpu.pipeline_mode<synchronous>, transform_indices = @transform_3, window_bounds = array<i64: 768, 512>}, {pipeline_mode = #tpu.pipeline_mode<synchronous>, transform_indices = @transform_4, window_bounds = array<i64: 1, 512>}, {pipeline_mode = #tpu.pipeline_mode<synchronous>, transform_indices = @transform_5, window_bounds = array<i64: 512, 128>}, {pipeline_mode = #tpu.pipeline_mode<synchronous>, transform_indices = @transform_6, window_bounds = array<i64: 1, 128>}, {transform_indices = @transform_7, window_bounds = array<i64: 16, 128>}]} {
    %c0 = arith.constant 0 : index
    %c0_0 = arith.constant 0 : index
    %0 = vector.load %arg1[%c0, %c0_0] : memref<16x768xf32, #tpu.memory_space<vmem>>, vector<16x768xf32>
    %1 = arith.truncf %0 : vector<16x768xf32> to vector<16x768xbf16>
    %c0_1 = arith.constant 0 : index
    %c0_2 = arith.constant 0 : index
    %2 = vector.load %arg2[%c0_1, %c0_2] : memref<768x768xbf16, #tpu.memory_space<vmem>>, vector<768x768xbf16>
    %cst = arith.constant dense<0.000000e+00> : vector<16x768xf32>
    %3 = tpu.matmul %1, %2, %cst {dimension_numbers = #tpu.dot_dimension_numbers<[1], [0], [0], [1], [0, 0, 1, 1], [], []>} : vector<16x768xbf16>, vector<768x768xbf16>, vector<16x768xf32> -> vector<16x768xf32>
    %c0_3 = arith.constant 0 : index
    %c0_4 = arith.constant 0 : index
    %4 = vector.load %arg3[%c0_3, %c0_4] : memref<1x768xf32, #tpu.memory_space<vmem>>, vector<1x768xf32>
    %5 = vector.broadcast %4 : vector<1x768xf32> to vector<16x768xf32>
    %6 = arith.addf %3, %5 : vector<16x768xf32>
    %cst_5 = arith.constant 0.000000e+00 : f32
    %7 = vector.broadcast %cst_5 : f32 to vector<16x768xf32>
    %8 = arith.maximumf %6, %7 : vector<16x768xf32>
    %9 = arith.truncf %8 : vector<16x768xf32> to vector<16x768xbf16>
    %c0_6 = arith.constant 0 : index
    %c0_7 = arith.constant 0 : index
    %10 = vector.load %arg4[%c0_6, %c0_7] : memref<768x512xbf16, #tpu.memory_space<vmem>>, vector<768x512xbf16>
    %cst_8 = arith.constant dense<0.000000e+00> : vector<16x512xf32>
    %11 = tpu.matmul %9, %10, %cst_8 {dimension_numbers = #tpu.dot_dimension_numbers<[1], [0], [0], [1], [0, 0, 1, 1], [], []>} : vector<16x768xbf16>, vector<768x512xbf16>, vector<16x512xf32> -> vector<16x512xf32>
    %c0_9 = arith.constant 0 : index
    %c0_10 = arith.constant 0 : index
    %12 = vector.load %arg5[%c0_9, %c0_10] : memref<1x512xf32, #tpu.memory_space<vmem>>, vector<1x512xf32>
    %13 = vector.broadcast %12 : vector<1x512xf32> to vector<16x512xf32>
    %14 = arith.addf %11, %13 : vector<16x512xf32>
    %cst_11 = arith.constant 0.000000e+00 : f32
    %15 = vector.broadcast %cst_11 : f32 to vector<16x512xf32>
    %16 = arith.maximumf %14, %15 : vector<16x512xf32>
    %17 = arith.truncf %16 : vector<16x512xf32> to vector<16x512xbf16>
    %c0_12 = arith.constant 0 : index
    %c0_13 = arith.constant 0 : index
    %18 = vector.load %arg6[%c0_12, %c0_13] : memref<512x128xbf16, #tpu.memory_space<vmem>>, vector<512x128xbf16>
    %cst_14 = arith.constant dense<0.000000e+00> : vector<16x128xf32>
    %19 = tpu.matmul %17, %18, %cst_14 {dimension_numbers = #tpu.dot_dimension_numbers<[1], [0], [0], [1], [0, 0, 1, 1], [], []>} : vector<16x512xbf16>, vector<512x128xbf16>, vector<16x128xf32> -> vector<16x128xf32>
    %c0_15 = arith.constant 0 : index
    %c0_16 = arith.constant 0 : index
    %20 = vector.load %arg7[%c0_15, %c0_16] : memref<1x128xf32, #tpu.memory_space<vmem>>, vector<1x128xf32>
    %21 = vector.broadcast %20 : vector<1x128xf32> to vector<16x128xf32>
    %22 = arith.addf %19, %21 : vector<16x128xf32>
    %c0_17 = arith.constant 0 : index
    %c0_18 = arith.constant 0 : index
    %23 = vector.load %arg8[%c0_17, %c0_18] : memref<16x128xf32, #tpu.memory_space<vmem>>, vector<16x128xf32>
    tpu.vector_store %arg8[%c0_17, %c0_18], %22 {strides = array<i32>} : memref<16x128xf32, #tpu.memory_space<vmem>>, vector<16x128xf32>,
    return
  }
  func.func @transform_0(%arg0: i32) -> (i32, i32) {
    %c0_i32 = arith.constant 0 : i32
    %c0_i32_0 = arith.constant 0 : i32
    return %arg0, %c0_i32 : i32, i32
  }
  func.func @transform_1(%arg0: i32) -> (i32, i32) {
    %c0_i32 = arith.constant 0 : i32
    %c0_i32_0 = arith.constant 0 : i32
    %c0_i32_1 = arith.constant 0 : i32
    return %c0_i32, %c0_i32_0 : i32, i32
  }
  func.func @transform_2(%arg0: i32) -> (i32, i32) {
    %c0_i32 = arith.constant 0 : i32
    %c0_i32_0 = arith.constant 0 : i32
    %c0_i32_1 = arith.constant 0 : i32
    return %c0_i32, %c0_i32_0 : i32, i32
  }
  func.func @transform_3(%arg0: i32) -> (i32, i32) {
    %c0_i32 = arith.constant 0 : i32
    %c0_i32_0 = arith.constant 0 : i32
    %c0_i32_1 = arith.constant 0 : i32
    return %c0_i32, %c0_i32_0 : i32, i32
  }
  func.func @transform_4(%arg0: i32) -> (i32, i32) {
    %c0_i32 = arith.constant 0 : i32
    %c0_i32_0 = arith.constant 0 : i32
    %c0_i32_1 = arith.constant 0 : i32
    return %c0_i32, %c0_i32_0 : i32, i32
  }
  func.func @transform_5(%arg0: i32) -> (i32, i32) {
    %c0_i32 = arith.constant 0 : i32
    %c0_i32_0 = arith.constant 0 : i32
    %c0_i32_1 = arith.constant 0 : i32
    return %c0_i32, %c0_i32_0 : i32, i32
  }
  func.func @transform_6(%arg0: i32) -> (i32, i32) {
    %c0_i32 = arith.constant 0 : i32
    %c0_i32_0 = arith.constant 0 : i32
    %c0_i32_1 = arith.constant 0 : i32
    return %c0_i32, %c0_i32_0 : i32, i32
  }
  func.func @transform_7(%arg0: i32) -> (i32, i32) {
    %c0_i32 = arith.constant 0 : i32
    %c0_i32_0 = arith.constant 0 : i32
    return %arg0, %c0_i32 : i32, i32
  }
}

</mosaic_0001>

<llo_original>
// kernel: tpu_custom_call.1
$region0: #{tpu_custom_call.1}
  #allocation0 [shape = 'u32[]', space=smem, size = 0x4, offset = 0x4, fixed_abs, tag = 'smem constant byte address 0x4 - core index']
  #allocation1 [shape = 'u32[144,128]{1,0:T(1,128)}', space=vmem, size = 0x12000, scoped, tag = 'internal scratch']
  %s0 = inlined_call_operand.hbm [shape: f32[8,768], index: 0, kind: input, shape index: {}]
  %s1 = inlined_call_operand.hbm [shape: bf16[768,768], index: 1, kind: input, shape index: {}]
  %s2 = inlined_call_operand.hbm [shape: f32[1,768], index: 2, kind: input, shape index: {}]
  %s3 = inlined_call_operand.hbm [shape: bf16[768,512], index: 3, kind: input, shape index: {}]
  %s4 = inlined_call_operand.hbm [shape: f32[1,512], index: 4, kind: input, shape index: {}]
  %s5 = inlined_call_operand.hbm [shape: bf16[512,128], index: 5, kind: input, shape index: {}]
  %s6 = inlined_call_operand.hbm [shape: f32[1,128], index: 6, kind: input, shape index: {}]
  %s7 = inlined_call_operand.hbm [shape: f32[8,128], index: 7, kind: output, shape index: {}]
  %s8 = sld [smem:[#allocation0]]
  $region66: #{tpu_custom_call.1} parent=0
    _
  %s10 = ssub.s32 1, %s8
  %s11 = scalar_select 0, %s10, %s8
  $region1: #{tpu_custom_call.1} parent=0
    #allocation2 [shape = 'u8[49152]{0}', space=vmem, size = 0xc000, scoped, tag = 'input window, operand 0, single buffered']
    #allocation3 [shape = 's32[1]{0}', space=sflag, size = 0x4, scoped, tag = 'scoped memory for tpu_custom_call.1']
    #allocation4 [shape = 's32[1]{0}', space=sflag, size = 0x4, scoped, tag = 'scoped memory for tpu_custom_call.1']
    #allocation5 [shape = 'u8[1179648]{0}', space=vmem, size = 0x120000, scoped, tag = 'input window, operand 1, single buffered']
    #allocation6 [shape = 's32[1]{0}', space=sflag, size = 0x4, scoped, tag = 'scoped memory for tpu_custom_call.1']
    #allocation7 [shape = 'u8[3072]{0}', space=vmem, size = 0xc00, scoped, tag = 'input window, operand 2, single buffered']
    #allocation8 [shape = 'u8[786432]{0}', space=vmem, size = 0xc0000, scoped, tag = 'input window, operand 3, single buffered']
    #allocation9 [shape = 's32[1]{0}', space=sflag, size = 0x4, scoped, tag = 'scoped memory for tpu_custom_call.1']
    #allocation10 [shape = 'u8[2048]{0}', space=vmem, size = 0x800, scoped, tag = 'input window, operand 4, single buffered']
    #allocation11 [shape = 'u8[131072]{0}', space=vmem, size = 0x20000, scoped, tag = 'input window, operand 5, single buffered']
    #allocation12 [shape = 's32[1]{0}', space=sflag, size = 0x4, scoped, tag = 'scoped memory for tpu_custom_call.1']
    #allocation13 [shape = 'u8[512]{0}', space=vmem, size = 0x400, scoped, tag = 'input window, operand 6, single buffered']
    #allocation14 [shape = 'u8[8192]{0}', space=vmem, size = 0x2000, scoped, tag = 'output window, operand 0, single buffered']
    %12 = vsyncpa [#allocation3], 0
    %13 = vsyncpa [#allocation6], 0
    %14 = vsyncpa [#allocation9], 0
    %15 = vsyncpa [#allocation12], 0
    %16 = vsyncpa [#allocation4], 0
    // Predicated region
    $region2: #{tpu_custom_call.1} parent=1 // pred_check
      _
    $region3: #{tpu_custom_call.1} parent=1 // pred_check_branch
      %18 = sbr.rel (0) target = $region5
    $region4: #{tpu_custom_call.1} parent=1 // pred_region
      %s20 = ssub.s32 1536, 768
      %21 = vsyncadd [#allocation3], %s20
      %s22 = sshll.u32 [#allocation2], 4
      %s23 = int_to_ptr.vmem [resolvable:$true] %s22
      %28 = dma.hbm_to_vmem [thread:$0]  %s0, 768, %s23, [#allocation3], 768, 768, 48
    $region5: #{tpu_custom_call.1} parent=1 // pred_fallthru
      _
    // Predicated region
    $region6: #{tpu_custom_call.1} parent=1 // pred_check
      _
    $region7: #{tpu_custom_call.1} parent=1 // pred_check_branch
      %30 = sbr.rel (0) target = $region9
    $region8: #{tpu_custom_call.1} parent=1 // pred_region
      %s32 = ssub.s32 36864, 36864
      %33 = vsyncadd [#allocation6], %s32
      %s34 = sshll.u32 [#allocation5], 4
      %s35 = int_to_ptr.vmem [resolvable:$true] %s34
      %40 = dma.hbm_to_vmem [thread:$0]  %s1, 36864, %s35, [#allocation6], 384, 384, 24
    $region9: #{tpu_custom_call.1} parent=1 // pred_fallthru
      _
    // Predicated region
    $region10: #{tpu_custom_call.1} parent=1 // pred_check
      _
    $region11: #{tpu_custom_call.1} parent=1 // pred_check_branch
      %42 = sbr.rel (0) target = $region13
    $region12: #{tpu_custom_call.1} parent=1 // pred_region
      %s44 = ssub.s32 96, 96
      %45 = vsyncadd [#allocation6], %s44
      %s47 = sshll.u32 [#allocation7], 4
      %s48 = int_to_ptr.vmem [resolvable:$true] %s47
      %50 = dma.hbm_to_vmem [thread:$0]  %s2, 96, %s48, [#allocation6]
    $region13: #{tpu_custom_call.1} parent=1 // pred_fallthru
      _
    // Predicated region
    $region14: #{tpu_custom_call.1} parent=1 // pred_check
      _
    $region15: #{tpu_custom_call.1} parent=1 // pred_check_branch
      %52 = sbr.rel (0) target = $region17
    $region16: #{tpu_custom_call.1} parent=1 // pred_region
      %s54 = ssub.s32 24576, 24576
      %55 = vsyncadd [#allocation9], %s54
      %s56 = sshll.u32 [#allocation8], 4
      %s57 = int_to_ptr.vmem [resolvable:$true] %s56
      %62 = dma.hbm_to_vmem [thread:$0]  %s3, 24576, %s57, [#allocation9], 256, 256, 16
    $region17: #{tpu_custom_call.1} parent=1 // pred_fallthru
      _
    // Predicated region
    $region18: #{tpu_custom_call.1} parent=1 // pred_check
      _
    $region19: #{tpu_custom_call.1} parent=1 // pred_check_branch
      %64 = sbr.rel (0) target = $region21
    $region20: #{tpu_custom_call.1} parent=1 // pred_region
      %s66 = ssub.s32 64, 64
      %67 = vsyncadd [#allocation9], %s66
      %s69 = sshll.u32 [#allocation10], 4
      %s70 = int_to_ptr.vmem [resolvable:$true] %s69
      %72 = dma.hbm_to_vmem [thread:$0]  %s4, 64, %s70, [#allocation9]
    $region21: #{tpu_custom_call.1} parent=1 // pred_fallthru
      _
    // Predicated region
    $region22: #{tpu_custom_call.1} parent=1 // pred_check
      _
    $region23: #{tpu_custom_call.1} parent=1 // pred_check_branch
      %74 = sbr.rel (0) target = $region25
    $region24: #{tpu_custom_call.1} parent=1 // pred_region
      %s76 = ssub.s32 4096, 4096
      %77 = vsyncadd [#allocation12], %s76
      %s78 = sshll.u32 [#allocation11], 4
      %s79 = int_to_ptr.vmem [resolvable:$true] %s78
      %84 = dma.hbm_to_vmem [thread:$0]  %s5, 4096, %s79, [#allocation12], 64, 64, 4
    $region25: #{tpu_custom_call.1} parent=1 // pred_fallthru
      _
    // Predicated region
    $region26: #{tpu_custom_call.1} parent=1 // pred_check
      _
    $region27: #{tpu_custom_call.1} parent=1 // pred_check_branch
      %86 = sbr.rel (0) target = $region29
    $region28: #{tpu_custom_call.1} parent=1 // pred_region
      %s88 = ssub.s32 16, 16
      %89 = vsyncadd [#allocation12], %s88
      %s91 = sshll.u32 [#allocation13], 4
      %s92 = int_to_ptr.vmem [resolvable:$true] %s91
      %94 = dma.hbm_to_vmem [thread:$0]  %s6, 16, %s92, [#allocation12]
    $region29: #{tpu_custom_call.1} parent=1 // pred_fallthru
      _
    // Predicated region
    $region30: #{tpu_custom_call.1} parent=1 // pred_check
      _
    $region31: #{tpu_custom_call.1} parent=1 // pred_check_branch
      %96 = sbr.rel (0) target = $region33
    $region32: #{tpu_custom_call.1} parent=1 // pred_region
      %97 = dma.done [#allocation3], 1536
    $region33: #{tpu_custom_call.1} parent=1 // pred_fallthru
      _
    // Predicated region
    $region34: #{tpu_custom_call.1} parent=1 // pred_check
      _
    $region35: #{tpu_custom_call.1} parent=1 // pred_check_branch
      %99 = sbr.rel (0) target = $region37
    $region36: #{tpu_custom_call.1} parent=1 // pred_region
      %100 = dma.done [#allocation6], 36864
    $region37: #{tpu_custom_call.1} parent=1 // pred_fallthru
      _
    // Predicated region
    $region38: #{tpu_custom_call.1} parent=1 // pred_check
      _
    $region39: #{tpu_custom_call.1} parent=1 // pred_check_branch
      %102 = sbr.rel (0) target = $region41
    $region40: #{tpu_custom_call.1} parent=1 // pred_region
      %103 = dma.done [#allocation6], 96
    $region41: #{tpu_custom_call.1} parent=1 // pred_fallthru
      _
    // Predicated region
    $region42: #{tpu_custom_call.1} parent=1 // pred_check
      _
    $region43: #{tpu_custom_call.1} parent=1 // pred_check_branch
      %105 = sbr.rel (0) target = $region45
    $region44: #{tpu_custom_call.1} parent=1 // pred_region
      %106 = dma.done [#allocation9], 24576
    $region45: #{tpu_custom_call.1} parent=1 // pred_fallthru
      _
    // Predicated region
    $region46: #{tpu_custom_call.1} parent=1 // pred_check
      _
    $region47: #{tpu_custom_call.1} parent=1 // pred_check_branch
      %108 = sbr.rel (0) target = $region49
    $region48: #{tpu_custom_call.1} parent=1 // pred_region
      %109 = dma.done [#allocation9], 64
    $region49: #{tpu_custom_call.1} parent=1 // pred_fallthru
      _
    // Predicated region
    $region50: #{tpu_custom_call.1} parent=1 // pred_check
      _
    $region51: #{tpu_custom_call.1} parent=1 // pred_check_branch
      %111 = sbr.rel (0) target = $region53
    $region52: #{tpu_custom_call.1} parent=1 // pred_region
      %112 = dma.done [#allocation12], 4096
    $region53: #{tpu_custom_call.1} parent=1 // pred_fallthru
      _
    // Predicated region
    $region54: #{tpu_custom_call.1} parent=1 // pred_check
      _
    $region55: #{tpu_custom_call.1} parent=1 // pred_check_branch
      %114 = sbr.rel (0) target = $region57
    $region56: #{tpu_custom_call.1} parent=1 // pred_region
      %115 = dma.done [#allocation12], 16
    $region57: #{tpu_custom_call.1} parent=1 // pred_fallthru
      _
    %v117 = vld [vmem:[#allocation2] sm:$0xff]
    %v118 = vld [vmem:[#allocation2 + $0x8] sm:$0xff]
    %v119 = vld [vmem:[#allocation2 + $0x10] sm:$0xff]
    %v120 = vld [vmem:[#allocation2 + $0x18] sm:$0xff]
    %v121 = vld [vmem:[#allocation2 + $0x20] sm:$0xff]
    %v122 = vld [vmem:[#allocation2 + $0x28] sm:$0xff]
    %v123 = vld [vmem:[#allocation2 + $0x30] sm:$0xff]
    %v124 = vld [vmem:[#allocation2 + $0x38] sm:$0xff]
    %v125 = vld [vmem:[#allocation2 + $0x40] sm:$0xff]
    %v126 = vld [vmem:[#allocation2 + $0x48] sm:$0xff]
    %v127 = vld [vmem:[#allocation2 + $0x50] sm:$0xff]
    %v128 = vld [vmem:[#allocation2 + $0x58] sm:$0xff]
    %v129 = vpack.c.bf16 %v123, %v117
    %v130 = vpack.c.bf16 %v124, %v118
    %v131 = vpack.c.bf16 %v125, %v119
    %v132 = vpack.c.bf16 %v126, %v120
    %v133 = vpack.c.bf16 %v127, %v121
    %v134 = vpack.c.bf16 %v128, %v122
    %v135 = vld [vmem:[#allocation5] sm:$0xff]
    %v136 = vld [vmem:[#allocation5 + $0x8] sm:$0xff]
    %v137 = vld [vmem:[#allocation5 + $0x10] sm:$0xff]
    %v138 = vld [vmem:[#allocation5 + $0x18] sm:$0xff]
    %v139 = vld [vmem:[#allocation5 + $0x20] sm:$0xff]
    %v140 = vld [vmem:[#allocation5 + $0x28] sm:$0xff]
    %v141 = vld [vmem:[#allocation5 + $0x30] sm:$0xff]
    %v142 = vld [vmem:[#allocation5 + $0x38] sm:$0xff]
    %v143 = vld [vmem:[#allocation5 + $0x40] sm:$0xff]
    %v144 = vld [vmem:[#allocation5 + $0x48] sm:$0xff]
    %v145 = vld [vmem:[#allocation5 + $0x50] sm:$0xff]
    %v146 = vld [vmem:[#allocation5 + $0x58] sm:$0xff]
    %v147 = vld [vmem:[#allocation5 + $0x60] sm:$0xff]
    %v148 = vld [vmem:[#allocation5 + $0x68] sm:$0xff]
    %v149 = vld [vmem:[#allocation5 + $0x70] sm:$0xff]
    %v150 = vld [vmem:[#allocation5 + $0x78] sm:$0xff]
    %v151 = vld [vmem:[#allocation5 + $0x80] sm:$0xff]
    %v152 = vld [vmem:[#allocation5 + $0x88] sm:$0xff]
    %v153 = vld [vmem:[#allocation5 + $0x90] sm:$0xff]
    %v154 = vld [vmem:[#allocation5 + $0x98] sm:$0xff]
    %v155 = vld [vmem:[#allocation5 + $0xa0] sm:$0xff]
    %v156 = vld [vmem:[#allocation5 + $0xa8] sm:$0xff]
    %v157 = vld [vmem:[#allocation5 + $0xb0] sm:$0xff]
    %v158 = vld [vmem:[#allocation5 + $0xb8] sm:$0xff]
    %v159 = vld [vmem:[#allocation5 + $0xc0] sm:$0xff]
    %v160 = vld [vmem:[#allocation5 + $0xc8] sm:$0xff]
    %v161 = vld [vmem:[#allocation5 + $0xd0] sm:$0xff]
    %v162 = vld [vmem:[#allocation5 + $0xd8] sm:$0xff]
    %v163 = vld [vmem:[#allocation5 + $0xe0] sm:$0xff]
    %v164 = vld [vmem:[#allocation5 + $0xe8] sm:$0xff]
    %v165 = vld [vmem:[#allocation5 + $0xf0] sm:$0xff]
    %v166 = vld [vmem:[#allocation5 + $0xf8] sm:$0xff]
    %v167 = vld [vmem:[#allocation5 + $0x100] sm:$0xff]
    %v168 = vld [vmem:[#allocation5 + $0x108] sm:$0xff]
    %v169 = vld [vmem:[#allocation5 + $0x110] sm:$0xff]
    %v170 = vld [vmem:[#allocation5 + $0x118] sm:$0xff]
    %v171 = vld [vmem:[#allocation5 + $0x120] sm:$0xff]
    %v172 = vld [vmem:[#allocation5 + $0x128] sm:$0xff]
    %v173 = vld [vmem:[#allocation5 + $0x130] sm:$0xff]
    %v174 = vld [vmem:[#allocation5 + $0x138] sm:$0xff]
    %v175 = vld [vmem:[#allocation5 + $0x140] sm:$0xff]
    %v176 = vld [vmem:[#allocation5 + $0x148] sm:$0xff]
    %v177 = vld [vmem:[#allocation5 + $0x150] sm:$0xff]
    %v178 = vld [vmem:[#allocation5 + $0x158] sm:$0xff]
    %v179 = vld [vmem:[#allocation5 + $0x160] sm:$0xff]
    %v180 = vld [vmem:[#allocation5 + $0x168] sm:$0xff]
    %v181 = vld [vmem:[#allocation5 + $0x170] sm:$0xff]
    %v182 = vld [vmem:[#allocation5 + $0x178] sm:$0xff]
    %v183 = vld [vmem:[#allocation5 + $0x180] sm:$0xff]
    %v184 = vld [vmem:[#allocation5 + $0x188] sm:$0xff]
    %v185 = vld [vmem:[#allocation5 + $0x190] sm:$0xff]
    %v186 = vld [vmem:[#allocation5 + $0x198] sm:$0xff]
    %v187 = vld [vmem:[#allocation5 + $0x1a0] sm:$0xff]
    %v188 = vld [vmem:[#allocation5 + $0x1a8] sm:$0xff]
    %v189 = vld [vmem:[#allocation5 + $0x1b0] sm:$0xff]
    %v190 = vld [vmem:[#allocation5 + $0x1b8] sm:$0xff]
    %v191 = vld [vmem:[#allocation5 + $0x1c0] sm:$0xff]
    %v192 = vld [vmem:[#allocation5 + $0x1c8] sm:$0xff]
    %v193 = vld [vmem:[#allocation5 + $0x1d0] sm:$0xff]
    %v194 = vld [vmem:[#allocation5 + $0x1d8] sm:$0xff]
    %v195 = vld [vmem:[#allocation5 + $0x1e0] sm:$0xff]
    %v196 = vld [vmem:[#allocation5 + $0x1e8] sm:$0xff]
    %v197 = vld [vmem:[#allocation5 + $0x1f0] sm:$0xff]
    %v198 = vld [vmem:[#allocation5 + $0x1f8] sm:$0xff]
    %v199 = vld [vmem:[#allocation5 + $0x200] sm:$0xff]
    %v200 = vld [vmem:[#allocation5 + $0x208] sm:$0xff]
    %v201 = vld [vmem:[#allocation5 + $0x210] sm:$0xff]
    %v202 = vld [vmem:[#allocation5 + $0x218] sm:$0xff]
    %v203 = vld [vmem:[#allocation5 + $0x220] sm:$0xff]
    %v204 = vld [vmem:[#allocation5 + $0x228] sm:$0xff]
    %v205 = vld [vmem:[#allocation5 + $0x230] sm:$0xff]
    %v206 = vld [vmem:[#allocation5 + $0x238] sm:$0xff]
    %v207 = vld [vmem:[#allocation5 + $0x240] sm:$0xff]
    %v208 = vld [vmem:[#allocation5 + $0x248] sm:$0xff]
    %v209 = vld [vmem:[#allocation5 + $0x250] sm:$0xff]
    %v210 = vld [vmem:[#allocation5 + $0x258] sm:$0xff]
    %v211 = vld [vmem:[#allocation5 + $0x260] sm:$0xff]
    %v212 = vld [vmem:[#allocation5 + $0x268] sm:$0xff]
    %v213 = vld [vmem:[#allocation5 + $0x270] sm:$0xff]
    %v214 = vld [vmem:[#allocation5 + $0x278] sm:$0xff]
    %v215 = vld [vmem:[#allocation5 + $0x280] sm:$0xff]
    %v216 = vld [vmem:[#allocation5 + $0x288] sm:$0xff]
    %v217 = vld [vmem:[#allocation5 + $0x290] sm:$0xff]
    %v218 = vld [vmem:[#allocation5 + $0x298] sm:$0xff]
    %v219 = vld [vmem:[#allocation5 + $0x2a0] sm:$0xff]
    %v220 = vld [vmem:[#allocation5 + $0x2a8] sm:$0xff]
    %v221 = vld [vmem:[#allocation5 + $0x2b0] sm:$0xff]
    %v222 = vld [vmem:[#allocation5 + $0x2b8] sm:$0xff]
    %v223 = vld [vmem:[#allocation5 + $0x2c0] sm:$0xff]
    %v224 = vld [vmem:[#allocation5 + $0x2c8] sm:$0xff]
    %v225 = vld [vmem:[#allocation5 + $0x2d0] sm:$0xff]
    %v226 = vld [vmem:[#allocation5 + $0x2d8] sm:$0xff]
    %v227 = vld [vmem:[#allocation5 + $0x2e0] sm:$0xff]
    %v228 = vld [vmem:[#allocation5 + $0x2e8] sm:$0xff]
    %v229 = vld [vmem:[#allocation5 + $0x2f0] sm:$0xff]
    %v230 = vld [vmem:[#allocation5 + $0x2f8] sm:$0xff]
    %v231 = vld [vmem:[#allocation5 + $0x300] sm:$0xff]
    %v232 = vld [vmem:[#allocation5 + $0x308] sm:$0xff]
    %v233 = vld [vmem:[#allocation5 + $0x310] sm:$0xff]
    %v234 = vld [vmem:[#allocation5 + $0x318] sm:$0xff]
    %v235 = vld [vmem:[#allocation5 + $0x320] sm:$0xff]
    %v236 = vld [vmem:[#allocation5 + $0x328] sm:$0xff]
    %v237 = vld [vmem:[#allocation5 + $0x330] sm:$0xff]
    %v238 = vld [vmem:[#allocation5 + $0x338] sm:$0xff]
    %v239 = vld [vmem:[#allocation5 + $0x340] sm:$0xff]
    %v240 = vld [vmem:[#allocation5 + $0x348] sm:$0xff]
    %v241 = vld [vmem:[#allocation5 + $0x350] sm:$0xff]
    %v242 = vld [vmem:[#allocation5 + $0x358] sm:$0xff]
    %v243 = vld [vmem:[#allocation5 + $0x360] sm:$0xff]
    %v244 = vld [vmem:[#allocation5 + $0x368] sm:$0xff]
    %v245 = vld [vmem:[#allocation5 + $0x370] sm:$0xff]
    %v246 = vld [vmem:[#allocation5 + $0x378] sm:$0xff]
    %v247 = vld [vmem:[#allocation5 + $0x380] sm:$0xff]
    %v248 = vld [vmem:[#allocation5 + $0x388] sm:$0xff]
    %v249 = vld [vmem:[#allocation5 + $0x390] sm:$0xff]
    %v250 = vld [vmem:[#allocation5 + $0x398] sm:$0xff]
    %v251 = vld [vmem:[#allocation5 + $0x3a0] sm:$0xff]
    %v252 = vld [vmem:[#allocation5 + $0x3a8] sm:$0xff]
    %v253 = vld [vmem:[#allocation5 + $0x3b0] sm:$0xff]
    %v254 = vld [vmem:[#allocation5 + $0x3b8] sm:$0xff]
    %v255 = vld [vmem:[#allocation5 + $0x3c0] sm:$0xff]
    %v256 = vld [vmem:[#allocation5 + $0x3c8] sm:$0xff]
    %v257 = vld [vmem:[#allocation5 + $0x3d0] sm:$0xff]
    %v258 = vld [vmem:[#allocation5 + $0x3d8] sm:$0xff]
    %v259 = vld [vmem:[#allocation5 + $0x3e0] sm:$0xff]
    %v260 = vld [vmem:[#allocation5 + $0x3e8] sm:$0xff]
    %v261 = vld [vmem:[#allocation5 + $0x3f0] sm:$0xff]
    %v262 = vld [vmem:[#allocation5 + $0x3f8] sm:$0xff]
    %v263 = vld [vmem:[#allocation5 + $0x400] sm:$0xff]
    %v264 = vld [vmem:[#allocation5 + $0x408] sm:$0xff]
    %v265 = vld [vmem:[#allocation5 + $0x410] sm:$0xff]
    %v266 = vld [vmem:[#allocation5 + $0x418] sm:$0xff]
    %v267 = vld [vmem:[#allocation5 + $0x420] sm:$0xff]
    %v268 = vld [vmem:[#allocation5 + $0x428] sm:$0xff]
    %v269 = vld [vmem:[#allocation5 + $0x430] sm:$0xff]
    %v270 = vld [vmem:[#allocation5 + $0x438] sm:$0xff]
    %v271 = vld [vmem:[#allocation5 + $0x440] sm:$0xff]
    %v272 = vld [vmem:[#allocation5 + $0x448] sm:$0xff]
    %v273 = vld [vmem:[#allocation5 + $0x450] sm:$0xff]
    %v274 = vld [vmem:[#allocation5 + $0x458] sm:$0xff]
    %v275 = vld [vmem:[#allocation5 + $0x460] sm:$0xff]
    %v276 = vld [vmem:[#allocation5 + $0x468] sm:$0xff]
    %v277 = vld [vmem:[#allocation5 + $0x470] sm:$0xff]
    %v278 = vld [vmem:[#allocation5 + $0x478] sm:$0xff]
    %v279 = vld [vmem:[#allocation5 + $0x480] sm:$0xff]
    %v280 = vld [vmem:[#allocation5 + $0x488] sm:$0xff]
    %v281 = vld [vmem:[#allocation5 + $0x490] sm:$0xff]
    %v282 = vld [vmem:[#allocation5 + $0x498] sm:$0xff]
    %v283 = vld [vmem:[#allocation5 + $0x4a0] sm:$0xff]
    %v284 = vld [vmem:[#allocation5 + $0x4a8] sm:$0xff]
    %v285 = vld [vmem:[#allocation5 + $0x4b0] sm:$0xff]
    %v286 = vld [vmem:[#allocation5 + $0x4b8] sm:$0xff]
    %v287 = vld [vmem:[#allocation5 + $0x4c0] sm:$0xff]
    %v288 = vld [vmem:[#allocation5 + $0x4c8] sm:$0xff]
    %v289 = vld [vmem:[#allocation5 + $0x4d0] sm:$0xff]
    %v290 = vld [vmem:[#allocation5 + $0x4d8] sm:$0xff]
    %v291 = vld [vmem:[#allocation5 + $0x4e0] sm:$0xff]
    %v292 = vld [vmem:[#allocation5 + $0x4e8] sm:$0xff]
    %v293 = vld [vmem:[#allocation5 + $0x4f0] sm:$0xff]
    %v294 = vld [vmem:[#allocation5 + $0x4f8] sm:$0xff]
    %v295 = vld [vmem:[#allocation5 + $0x500] sm:$0xff]
    %v296 = vld [vmem:[#allocation5 + $0x508] sm:$0xff]
    %v297 = vld [vmem:[#allocation5 + $0x510] sm:$0xff]
    %v298 = vld [vmem:[#allocation5 + $0x518] sm:$0xff]
    %v299 = vld [vmem:[#allocation5 + $0x520] sm:$0xff]
    %v300 = vld [vmem:[#allocation5 + $0x528] sm:$0xff]
    %v301 = vld [vmem:[#allocation5 + $0x530] sm:$0xff]
    %v302 = vld [vmem:[#allocation5 + $0x538] sm:$0xff]
    %v303 = vld [vmem:[#allocation5 + $0x540] sm:$0xff]
    %v304 = vld [vmem:[#allocation5 + $0x548] sm:$0xff]
    %v305 = vld [vmem:[#allocation5 + $0x550] sm:$0xff]
    %v306 = vld [vmem:[#allocation5 + $0x558] sm:$0xff]
    %v307 = vld [vmem:[#allocation5 + $0x560] sm:$0xff]
    %v308 = vld [vmem:[#allocation5 + $0x568] sm:$0xff]
    %v309 = vld [vmem:[#allocation5 + $0x570] sm:$0xff]
    %v310 = vld [vmem:[#allocation5 + $0x578] sm:$0xff]
    %v311 = vld [vmem:[#allocation5 + $0x580] sm:$0xff]
    %v312 = vld [vmem:[#allocation5 + $0x588] sm:$0xff]
    %v313 = vld [vmem:[#allocation5 + $0x590] sm:$0xff]
    %v314 = vld [vmem:[#allocation5 + $0x598] sm:$0xff]
    %v315 = vld [vmem:[#allocation5 + $0x5a0] sm:$0xff]
    %v316 = vld [vmem:[#allocation5 + $0x5a8] sm:$0xff]
    %v317 = vld [vmem:[#allocation5 + $0x5b0] sm:$0xff]
    %v318 = vld [vmem:[#allocation5 + $0x5b8] sm:$0xff]
    %v319 = vld [vmem:[#allocation5 + $0x5c0] sm:$0xff]
    %v320 = vld [vmem:[#allocation5 + $0x5c8] sm:$0xff]
    %v321 = vld [vmem:[#allocation5 + $0x5d0] sm:$0xff]
    %v322 = vld [vmem:[#allocation5 + $0x5d8] sm:$0xff]
    %v323 = vld [vmem:[#allocation5 + $0x5e0] sm:$0xff]
    %v324 = vld [vmem:[#allocation5 + $0x5e8] sm:$0xff]
    %v325 = vld [vmem:[#allocation5 + $0x5f0] sm:$0xff]
    %v326 = vld [vmem:[#allocation5 + $0x5f8] sm:$0xff]
    %v327 = vld [vmem:[#allocation5 + $0x600] sm:$0xff]
    %v328 = vld [vmem:[#allocation5 + $0x608] sm:$0xff]
    %v329 = vld [vmem:[#allocation5 + $0x610] sm:$0xff]
    %v330 = vld [vmem:[#allocation5 + $0x618] sm:$0xff]
    %v331 = vld [vmem:[#allocation5 + $0x620] sm:$0xff]
    %v332 = vld [vmem:[#allocation5 + $0x628] sm:$0xff]
    %v333 = vld [vmem:[#allocation5 + $0x630] sm:$0xff]
    %v334 = vld [vmem:[#allocation5 + $0x638] sm:$0xff]
    %v335 = vld [vmem:[#allocation5 + $0x640] sm:$0xff]
    %v336 = vld [vmem:[#allocation5 + $0x648] sm:$0xff]
    %v337 = vld [vmem:[#allocation5 + $0x650] sm:$0xff]
    %v338 = vld [vmem:[#allocation5 + $0x658] sm:$0xff]
    %v339 = vld [vmem:[#allocation5 + $0x660] sm:$0xff]
    %v340 = vld [vmem:[#allocation5 + $0x668] sm:$0xff]
    %v341 = vld [vmem:[#allocation5 + $0x670] sm:$0xff]
    %v342 = vld [vmem:[#allocation5 + $0x678] sm:$0xff]
    %v343 = vld [vmem:[#allocation5 + $0x680] sm:$0xff]
    %v344 = vld [vmem:[#allocation5 + $0x688] sm:$0xff]
    %v345 = vld [vmem:[#allocation5 + $0x690] sm:$0xff]
    %v346 = vld [vmem:[#allocation5 + $0x698] sm:$0xff]
    %v347 = vld [vmem:[#allocation5 + $0x6a0] sm:$0xff]
    %v348 = vld [vmem:[#allocation5 + $0x6a8] sm:$0xff]
    %v349 = vld [vmem:[#allocation5 + $0x6b0] sm:$0xff]
    %v350 = vld [vmem:[#allocation5 + $0x6b8] sm:$0xff]
    %v351 = vld [vmem:[#allocation5 + $0x6c0] sm:$0xff]
    %v352 = vld [vmem:[#allocation5 + $0x6c8] sm:$0xff]
    %v353 = vld [vmem:[#allocation5 + $0x6d0] sm:$0xff]
    %v354 = vld [vmem:[#allocation5 + $0x6d8] sm:$0xff]
    %v355 = vld [vmem:[#allocation5 + $0x6e0] sm:$0xff]
    %v356 = vld [vmem:[#allocation5 + $0x6e8] sm:$0xff]
    %v357 = vld [vmem:[#allocation5 + $0x6f0] sm:$0xff]
    %v358 = vld [vmem:[#allocation5 + $0x6f8] sm:$0xff]
    %v359 = vld [vmem:[#allocation5 + $0x700] sm:$0xff]
    %v360 = vld [vmem:[#allocation5 + $0x708] sm:$0xff]
    %v361 = vld [vmem:[#allocation5 + $0x710] sm:$0xff]
    %v362 = vld [vmem:[#allocation5 + $0x718] sm:$0xff]
    %v363 = vld [vmem:[#allocation5 + $0x720] sm:$0xff]
    %v364 = vld [vmem:[#allocation5 + $0x728] sm:$0xff]
    %v365 = vld [vmem:[#allocation5 + $0x730] sm:$0xff]
    %v366 = vld [vmem:[#allocation5 + $0x738] sm:$0xff]
    %v367 = vld [vmem:[#allocation5 + $0x740] sm:$0xff]
    %v368 = vld [vmem:[#allocation5 + $0x748] sm:$0xff]
    %v369 = vld [vmem:[#allocation5 + $0x750] sm:$0xff]
    %v370 = vld [vmem:[#allocation5 + $0x758] sm:$0xff]
    %v371 = vld [vmem:[#allocation5 + $0x760] sm:$0xff]
    %v372 = vld [vmem:[#allocation5 + $0x768] sm:$0xff]
    %v373 = vld [vmem:[#allocation5 + $0x770] sm:$0xff]
    %v374 = vld [vmem:[#allocation5 + $0x778] sm:$0xff]
    %v375 = vld [vmem:[#allocation5 + $0x780] sm:$0xff]
    %v376 = vld [vmem:[#allocation5 + $0x788] sm:$0xff]
    %v377 = vld [vmem:[#allocation5 + $0x790] sm:$0xff]
    %v378 = vld [vmem:[#allocation5 + $0x798] sm:$0xff]
    %v379 = vld [vmem:[#allocation5 + $0x7a0] sm:$0xff]
    %v380 = vld [vmem:[#allocation5 + $0x7a8] sm:$0xff]
    %v381 = vld [vmem:[#allocation5 + $0x7b0] sm:$0xff]
    %v382 = vld [vmem:[#allocation5 + $0x7b8] sm:$0xff]
    %v383 = vld [vmem:[#allocation5 + $0x7c0] sm:$0xff]
    %v384 = vld [vmem:[#allocation5 + $0x7c8] sm:$0xff]
    %v385 = vld [vmem:[#allocation5 + $0x7d0] sm:$0xff]
    %v386 = vld [vmem:[#allocation5 + $0x7d8] sm:$0xff]
    %v387 = vld [vmem:[#allocation5 + $0x7e0] sm:$0xff]
    %v388 = vld [vmem:[#allocation5 + $0x7e8] sm:$0xff]
    %v389 = vld [vmem:[#allocation5 + $0x7f0] sm:$0xff]
    %v390 = vld [vmem:[#allocation5 + $0x7f8] sm:$0xff]
    %v391 = vld [vmem:[#allocation5 + $0x800] sm:$0xff]
    %v392 = vld [vmem:[#allocation5 + $0x808] sm:$0xff]
    %v393 = vld [vmem:[#allocation5 + $0x810] sm:$0xff]
    %v394 = vld [vmem:[#allocation5 + $0x818] sm:$0xff]
    %v395 = vld [vmem:[#allocation5 + $0x820] sm:$0xff]
    %v396 = vld [vmem:[#allocation5 + $0x828] sm:$0xff]
    %v397 = vld [vmem:[#allocation5 + $0x830] sm:$0xff]
    %v398 = vld [vmem:[#allocation5 + $0x838] sm:$0xff]
    %v399 = vld [vmem:[#allocation5 + $0x840] sm:$0xff]
    %v400 = vld [vmem:[#allocation5 + $0x848] sm:$0xff]
    %v401 = vld [vmem:[#allocation5 + $0x850] sm:$0xff]
    %v402 = vld [vmem:[#allocation5 + $0x858] sm:$0xff]
    %v403 = vld [vmem:[#allocation5 + $0x860] sm:$0xff]
    %v404 = vld [vmem:[#allocation5 + $0x868] sm:$0xff]
    %v405 = vld [vmem:[#allocation5 + $0x870] sm:$0xff]
    %v406 = vld [vmem:[#allocation5 + $0x878] sm:$0xff]
    %v407 = vld [vmem:[#allocation5 + $0x880] sm:$0xff]
    %v408 = vld [vmem:[#allocation5 + $0x888] sm:$0xff]
    %v409 = vld [vmem:[#allocation5 + $0x890] sm:$0xff]
    %v410 = vld [vmem:[#allocation5 + $0x898] sm:$0xff]
    %v411 = vld [vmem:[#allocation5 + $0x8a0] sm:$0xff]
    %v412 = vld [vmem:[#allocation5 + $0x8a8] sm:$0xff]
    %v413 = vld [vmem:[#allocation5 + $0x8b0] sm:$0xff]
    %v414 = vld [vmem:[#allocation5 + $0x8b8] sm:$0xff]
    %v415 = vld [vmem:[#allocation5 + $0x8c0] sm:$0xff]
    %v416 = vld [vmem:[#allocation5 + $0x8c8] sm:$0xff]
    %v417 = vld [vmem:[#allocation5 + $0x8d0] sm:$0xff]
    %v418 = vld [vmem:[#allocation5 + $0x8d8] sm:$0xff]
    %v419 = vld [vmem:[#allocation5 + $0x8e0] sm:$0xff]
    %v420 = vld [vmem:[#allocation5 + $0x8e8] sm:$0xff]
    %v421 = vld [vmem:[#allocation5 + $0x8f0] sm:$0xff]
    %v422 = vld [vmem:[#allocation5 + $0x8f8] sm:$0xff]
    %v423 = vld [vmem:[#allocation7] sm:$0x3f]
    %v425 = vlaneseq
    %v426 = vshrl.u32 %v425, 7
    %v427 = vsub.s32 0, %v426
    %v428 = vrot.slane %v423, %v427
    %v429 = vlaneseq
    %v430 = vshrl.u32 %v429, 7
    %v431 = vsub.s32 1, %v430
    %v432 = vrot.slane %v423, %v431
    %v433 = vlaneseq
    %v434 = vshrl.u32 %v433, 7
    %v435 = vsub.s32 2, %v434
    %v436 = vrot.slane %v423, %v435
    %v437 = vlaneseq
    %v438 = vshrl.u32 %v437, 7
    %v439 = vsub.s32 3, %v438
    %v440 = vrot.slane %v423, %v439
    %v441 = vlaneseq
    %v442 = vshrl.u32 %v441, 7
    %v443 = vsub.s32 4, %v442
    %v444 = vrot.slane %v423, %v443
    %v445 = vlaneseq
    %v446 = vshrl.u32 %v445, 7
    %v447 = vsub.s32 5, %v446
    %v448 = vrot.slane %v423, %v447
    %v743 = vunpack.c.l.b16 %v135
    %v744 = vunpack.c.h.b16 %v135
    %v745 = vunpack.c.l.b16 %v136
    %v746 = vunpack.c.h.b16 %v136
    %v747 = vunpack.c.l.b16 %v137
    %v748 = vunpack.c.h.b16 %v137
    %v749 = vunpack.c.l.b16 %v138
    %v750 = vunpack.c.h.b16 %v138
    %v751 = vunpack.c.l.b16 %v139
    %v752 = vunpack.c.h.b16 %v139
    %v753 = vunpack.c.l.b16 %v140
    %v754 = vunpack.c.h.b16 %v140
    %v755 = vunpack.c.l.b16 %v141
    %v756 = vunpack.c.h.b16 %v141
    %v757 = vunpack.c.l.b16 %v142
    %v758 = vunpack.c.h.b16 %v142
    %v759 = vunpack.c.l.b16 %v143
    %v760 = vunpack.c.h.b16 %v143
    %v761 = vunpack.c.l.b16 %v144
    %v762 = vunpack.c.h.b16 %v144
    %v763 = vunpack.c.l.b16 %v145
    %v764 = vunpack.c.h.b16 %v145
    %v765 = vunpack.c.l.b16 %v146
    %v766 = vunpack.c.h.b16 %v146
    %v767 = vunpack.c.l.b16 %v147
    %v768 = vunpack.c.h.b16 %v147
    %v769 = vunpack.c.l.b16 %v148
    %v770 = vunpack.c.h.b16 %v148
    %v771 = vunpack.c.l.b16 %v149
    %v772 = vunpack.c.h.b16 %v149
    %v773 = vunpack.c.l.b16 %v150
    %v774 = vunpack.c.h.b16 %v150
    %v775 = vunpack.c.l.b16 %v151
    %v776 = vunpack.c.h.b16 %v151
    %v777 = vunpack.c.l.b16 %v152
    %v778 = vunpack.c.h.b16 %v152
    %v779 = vunpack.c.l.b16 %v153
    %v780 = vunpack.c.h.b16 %v153
    %v781 = vunpack.c.l.b16 %v154
    %v782 = vunpack.c.h.b16 %v154
    %v783 = vunpack.c.l.b16 %v155
    %v784 = vunpack.c.h.b16 %v155
    %v785 = vunpack.c.l.b16 %v156
    %v786 = vunpack.c.h.b16 %v156
    %v787 = vunpack.c.l.b16 %v157
    %v788 = vunpack.c.h.b16 %v157
    %v789 = vunpack.c.l.b16 %v158
    %v790 = vunpack.c.h.b16 %v158
    %v791 = vunpack.c.l.b16 %v159
    %v792 = vunpack.c.h.b16 %v159
    %v793 = vunpack.c.l.b16 %v160
    %v794 = vunpack.c.h.b16 %v160
    %v795 = vunpack.c.l.b16 %v161
    %v796 = vunpack.c.h.b16 %v161
    %v797 = vunpack.c.l.b16 %v162
    %v798 = vunpack.c.h.b16 %v162
    %v799 = vunpack.c.l.b16 %v163
    %v800 = vunpack.c.h.b16 %v163
    %v801 = vunpack.c.l.b16 %v164
    %v802 = vunpack.c.h.b16 %v164
    %v803 = vunpack.c.l.b16 %v165
    %v804 = vunpack.c.h.b16 %v165
    %v805 = vunpack.c.l.b16 %v166
    %v806 = vunpack.c.h.b16 %v166
    %v807 = vunpack.c.l.b16 %v167
    %v808 = vunpack.c.h.b16 %v167
    %v809 = vunpack.c.l.b16 %v168
    %v810 = vunpack.c.h.b16 %v168
    %v811 = vunpack.c.l.b16 %v169
    %v812 = vunpack.c.h.b16 %v169
    %v813 = vunpack.c.l.b16 %v170
    %v814 = vunpack.c.h.b16 %v170
    %v815 = vunpack.c.l.b16 %v171
    %v816 = vunpack.c.h.b16 %v171
    %v817 = vunpack.c.l.b16 %v172
    %v818 = vunpack.c.h.b16 %v172
    %v819 = vunpack.c.l.b16 %v173
    %v820 = vunpack.c.h.b16 %v173
    %v821 = vunpack.c.l.b16 %v174
    %v822 = vunpack.c.h.b16 %v174
    %v823 = vunpack.c.l.b16 %v175
    %v824 = vunpack.c.h.b16 %v175
    %v825 = vunpack.c.l.b16 %v176
    %v826 = vunpack.c.h.b16 %v176
    %v827 = vunpack.c.l.b16 %v177
    %v828 = vunpack.c.h.b16 %v177
    %v829 = vunpack.c.l.b16 %v178
    %v830 = vunpack.c.h.b16 %v178
    %v831 = vunpack.c.l.b16 %v179
    %v832 = vunpack.c.h.b16 %v179
    %v833 = vunpack.c.l.b16 %v180
    %v834 = vunpack.c.h.b16 %v180
    %v835 = vunpack.c.l.b16 %v181
    %v836 = vunpack.c.h.b16 %v181
    %v837 = vunpack.c.l.b16 %v182
    %v838 = vunpack.c.h.b16 %v182
    %v839 = vunpack.c.l.b16 %v183
    %v840 = vunpack.c.h.b16 %v183
    %v841 = vunpack.c.l.b16 %v184
    %v842 = vunpack.c.h.b16 %v184
    %v843 = vunpack.c.l.b16 %v185
    %v844 = vunpack.c.h.b16 %v185
    %v845 = vunpack.c.l.b16 %v186
    %v846 = vunpack.c.h.b16 %v186
    %v847 = vunpack.c.l.b16 %v187
    %v848 = vunpack.c.h.b16 %v187
    %v849 = vunpack.c.l.b16 %v188
    %v850 = vunpack.c.h.b16 %v188
    %v851 = vunpack.c.l.b16 %v189
    %v852 = vunpack.c.h.b16 %v189
    %v853 = vunpack.c.l.b16 %v190
    %v854 = vunpack.c.h.b16 %v190
    %v855 = vunpack.c.l.b16 %v191
    %v856 = vunpack.c.h.b16 %v191
    %v857 = vunpack.c.l.b16 %v192
    %v858 = vunpack.c.h.b16 %v192
    %v859 = vunpack.c.l.b16 %v193
    %v860 = vunpack.c.h.b16 %v193
    %v861 = vunpack.c.l.b16 %v194
    %v862 = vunpack.c.h.b16 %v194
    %v863 = vunpack.c.l.b16 %v195
    %v864 = vunpack.c.h.b16 %v195
    %v865 = vunpack.c.l.b16 %v196
    %v866 = vunpack.c.h.b16 %v196
    %v867 = vunpack.c.l.b16 %v197
    %v868 = vunpack.c.h.b16 %v197
    %v869 = vunpack.c.l.b16 %v198
    %v870 = vunpack.c.h.b16 %v198
    %v871 = vunpack.c.l.b16 %v199
    %v872 = vunpack.c.h.b16 %v199
    %v873 = vunpack.c.l.b16 %v200
    %v874 = vunpack.c.h.b16 %v200
    %v875 = vunpack.c.l.b16 %v201
    %v876 = vunpack.c.h.b16 %v201
    %v877 = vunpack.c.l.b16 %v202
    %v878 = vunpack.c.h.b16 %v202
    %v879 = vunpack.c.l.b16 %v203
    %v880 = vunpack.c.h.b16 %v203
    %v881 = vunpack.c.l.b16 %v204
    %v882 = vunpack.c.h.b16 %v204
    %v883 = vunpack.c.l.b16 %v205
    %v884 = vunpack.c.h.b16 %v205
    %v885 = vunpack.c.l.b16 %v206
    %v886 = vunpack.c.h.b16 %v206
    %v887 = vunpack.c.l.b16 %v207
    %v888 = vunpack.c.h.b16 %v207
    %v889 = vunpack.c.l.b16 %v208
    %v890 = vunpack.c.h.b16 %v208
    %v891 = vunpack.c.l.b16 %v209
    %v892 = vunpack.c.h.b16 %v209
    %v893 = vunpack.c.l.b16 %v210
    %v894 = vunpack.c.h.b16 %v210
    %v895 = vunpack.c.l.b16 %v211
    %v896 = vunpack.c.h.b16 %v211
    %v897 = vunpack.c.l.b16 %v212
    %v898 = vunpack.c.h.b16 %v212
    %v899 = vunpack.c.l.b16 %v213
    %v900 = vunpack.c.h.b16 %v213
    %v901 = vunpack.c.l.b16 %v214
    %v902 = vunpack.c.h.b16 %v214
    %v903 = vunpack.c.l.b16 %v215
    %v904 = vunpack.c.h.b16 %v215
    %v905 = vunpack.c.l.b16 %v216
    %v906 = vunpack.c.h.b16 %v216
    %v907 = vunpack.c.l.b16 %v217
    %v908 = vunpack.c.h.b16 %v217
    %v909 = vunpack.c.l.b16 %v218
    %v910 = vunpack.c.h.b16 %v218
    %v911 = vunpack.c.l.b16 %v219
    %v912 = vunpack.c.h.b16 %v219
    %v913 = vunpack.c.l.b16 %v220
    %v914 = vunpack.c.h.b16 %v220
    %v915 = vunpack.c.l.b16 %v221
    %v916 = vunpack.c.h.b16 %v221
    %v917 = vunpack.c.l.b16 %v222
    %v918 = vunpack.c.h.b16 %v222
    %v919 = vunpack.c.l.b16 %v223
    %v920 = vunpack.c.h.b16 %v223
    %v921 = vunpack.c.l.b16 %v224
    %v922 = vunpack.c.h.b16 %v224
    %v923 = vunpack.c.l.b16 %v225
    %v924 = vunpack.c.h.b16 %v225
    %v925 = vunpack.c.l.b16 %v226
    %v926 = vunpack.c.h.b16 %v226
    %v927 = vunpack.c.l.b16 %v227
    %v928 = vunpack.c.h.b16 %v227
    %v929 = vunpack.c.l.b16 %v228
    %v930 = vunpack.c.h.b16 %v228
    %v931 = vunpack.c.l.b16 %v229
    %v932 = vunpack.c.h.b16 %v229
    %v933 = vunpack.c.l.b16 %v230
    %v934 = vunpack.c.h.b16 %v230
    %v935 = vunpack.c.l.b16 %v231
    %v936 = vunpack.c.h.b16 %v231
    %v937 = vunpack.c.l.b16 %v232
    %v938 = vunpack.c.h.b16 %v232
    %v939 = vunpack.c.l.b16 %v233
    %v940 = vunpack.c.h.b16 %v233
    %v941 = vunpack.c.l.b16 %v234
    %v942 = vunpack.c.h.b16 %v234
    %v943 = vunpack.c.l.b16 %v235
    %v944 = vunpack.c.h.b16 %v235
    %v945 = vunpack.c.l.b16 %v236
    %v946 = vunpack.c.h.b16 %v236
    %v947 = vunpack.c.l.b16 %v237
    %v948 = vunpack.c.h.b16 %v237
    %v949 = vunpack.c.l.b16 %v238
    %v950 = vunpack.c.h.b16 %v238
    %v951 = vunpack.c.l.b16 %v239
    %v952 = vunpack.c.h.b16 %v239
    %v953 = vunpack.c.l.b16 %v240
    %v954 = vunpack.c.h.b16 %v240
    %v955 = vunpack.c.l.b16 %v241
    %v956 = vunpack.c.h.b16 %v241
    %v957 = vunpack.c.l.b16 %v242
    %v958 = vunpack.c.h.b16 %v242
    %v959 = vunpack.c.l.b16 %v243
    %v960 = vunpack.c.h.b16 %v243
    %v961 = vunpack.c.l.b16 %v244
    %v962 = vunpack.c.h.b16 %v244
    %v963 = vunpack.c.l.b16 %v245
    %v964 = vunpack.c.h.b16 %v245
    %v965 = vunpack.c.l.b16 %v246
    %v966 = vunpack.c.h.b16 %v246
    %v967 = vunpack.c.l.b16 %v247
    %v968 = vunpack.c.h.b16 %v247
    %v969 = vunpack.c.l.b16 %v248
    %v970 = vunpack.c.h.b16 %v248
    %v971 = vunpack.c.l.b16 %v249
    %v972 = vunpack.c.h.b16 %v249
    %v973 = vunpack.c.l.b16 %v250
    %v974 = vunpack.c.h.b16 %v250
    %v975 = vunpack.c.l.b16 %v251
    %v976 = vunpack.c.h.b16 %v251
    %v977 = vunpack.c.l.b16 %v252
    %v978 = vunpack.c.h.b16 %v252
    %v979 = vunpack.c.l.b16 %v253
    %v980 = vunpack.c.h.b16 %v253
    %v981 = vunpack.c.l.b16 %v254
    %v982 = vunpack.c.h.b16 %v254
    %v983 = vunpack.c.l.b16 %v255
    %v984 = vunpack.c.h.b16 %v255
    %v985 = vunpack.c.l.b16 %v256
    %v986 = vunpack.c.h.b16 %v256
    %v987 = vunpack.c.l.b16 %v257
    %v988 = vunpack.c.h.b16 %v257
    %v989 = vunpack.c.l.b16 %v258
    %v990 = vunpack.c.h.b16 %v258
    %v991 = vunpack.c.l.b16 %v259
    %v992 = vunpack.c.h.b16 %v259
    %v993 = vunpack.c.l.b16 %v260
    %v994 = vunpack.c.h.b16 %v260
    %v995 = vunpack.c.l.b16 %v261
    %v996 = vunpack.c.h.b16 %v261
    %v997 = vunpack.c.l.b16 %v262
    %v998 = vunpack.c.h.b16 %v262
    %v999 = vunpack.c.l.b16 %v263
    %v1000 = vunpack.c.h.b16 %v263
    %v1001 = vunpack.c.l.b16 %v264
    %v1002 = vunpack.c.h.b16 %v264
    %v1003 = vunpack.c.l.b16 %v265
    %v1004 = vunpack.c.h.b16 %v265
    %v1005 = vunpack.c.l.b16 %v266
    %v1006 = vunpack.c.h.b16 %v266
    %v1007 = vunpack.c.l.b16 %v267
    %v1008 = vunpack.c.h.b16 %v267
    %v1009 = vunpack.c.l.b16 %v268
    %v1010 = vunpack.c.h.b16 %v268
    %v1011 = vunpack.c.l.b16 %v269
    %v1012 = vunpack.c.h.b16 %v269
    %v1013 = vunpack.c.l.b16 %v270
    %v1014 = vunpack.c.h.b16 %v270
    %v1015 = vunpack.c.l.b16 %v271
    %v1016 = vunpack.c.h.b16 %v271
    %v1017 = vunpack.c.l.b16 %v272
    %v1018 = vunpack.c.h.b16 %v272
    %v1019 = vunpack.c.l.b16 %v273
    %v1020 = vunpack.c.h.b16 %v273
    %v1021 = vunpack.c.l.b16 %v274
    %v1022 = vunpack.c.h.b16 %v274
    %v1023 = vunpack.c.l.b16 %v275
    %v1024 = vunpack.c.h.b16 %v275
    %v1025 = vunpack.c.l.b16 %v276
    %v1026 = vunpack.c.h.b16 %v276
    %v1027 = vunpack.c.l.b16 %v277
    %v1028 = vunpack.c.h.b16 %v277
    %v1029 = vunpack.c.l.b16 %v278
    %v1030 = vunpack.c.h.b16 %v278
    %v1031 = vunpack.c.l.b16 %v279
    %v1032 = vunpack.c.h.b16 %v279
    %v1033 = vunpack.c.l.b16 %v280
    %v1034 = vunpack.c.h.b16 %v280
    %v1035 = vunpack.c.l.b16 %v281
    %v1036 = vunpack.c.h.b16 %v281
    %v1037 = vunpack.c.l.b16 %v282
    %v1038 = vunpack.c.h.b16 %v282
    %v1039 = vunpack.c.l.b16 %v283
    %v1040 = vunpack.c.h.b16 %v283
    %v1041 = vunpack.c.l.b16 %v284
    %v1042 = vunpack.c.h.b16 %v284
    %v1043 = vunpack.c.l.b16 %v285
    %v1044 = vunpack.c.h.b16 %v285
    %v1045 = vunpack.c.l.b16 %v286
    %v1046 = vunpack.c.h.b16 %v286
    %v1047 = vunpack.c.l.b16 %v287
    %v1048 = vunpack.c.h.b16 %v287
    %v1049 = vunpack.c.l.b16 %v288
    %v1050 = vunpack.c.h.b16 %v288
    %v1051 = vunpack.c.l.b16 %v289
    %v1052 = vunpack.c.h.b16 %v289
    %v1053 = vunpack.c.l.b16 %v290
    %v1054 = vunpack.c.h.b16 %v290
    %v1055 = vunpack.c.l.b16 %v291
    %v1056 = vunpack.c.h.b16 %v291
    %v1057 = vunpack.c.l.b16 %v292
    %v1058 = vunpack.c.h.b16 %v292
    %v1059 = vunpack.c.l.b16 %v293
    %v1060 = vunpack.c.h.b16 %v293
    %v1061 = vunpack.c.l.b16 %v294
    %v1062 = vunpack.c.h.b16 %v294
    %v1063 = vunpack.c.l.b16 %v295
    %v1064 = vunpack.c.h.b16 %v295
    %v1065 = vunpack.c.l.b16 %v296
    %v1066 = vunpack.c.h.b16 %v296
    %v1067 = vunpack.c.l.b16 %v297
    %v1068 = vunpack.c.h.b16 %v297
    %v1069 = vunpack.c.l.b16 %v298
    %v1070 = vunpack.c.h.b16 %v298
    %v1071 = vunpack.c.l.b16 %v299
    %v1072 = vunpack.c.h.b16 %v299
    %v1073 = vunpack.c.l.b16 %v300
    %v1074 = vunpack.c.h.b16 %v300
    %v1075 = vunpack.c.l.b16 %v301
    %v1076 = vunpack.c.h.b16 %v301
    %v1077 = vunpack.c.l.b16 %v302
    %v1078 = vunpack.c.h.b16 %v302
    %v1079 = vunpack.c.l.b16 %v303
    %v1080 = vunpack.c.h.b16 %v303
    %v1081 = vunpack.c.l.b16 %v304
    %v1082 = vunpack.c.h.b16 %v304
    %v1083 = vunpack.c.l.b16 %v305
    %v1084 = vunpack.c.h.b16 %v305
    %v1085 = vunpack.c.l.b16 %v306
    %v1086 = vunpack.c.h.b16 %v306
    %v1087 = vunpack.c.l.b16 %v307
    %v1088 = vunpack.c.h.b16 %v307
    %v1089 = vunpack.c.l.b16 %v308
    %v1090 = vunpack.c.h.b16 %v308
    %v1091 = vunpack.c.l.b16 %v309
    %v1092 = vunpack.c.h.b16 %v309
    %v1093 = vunpack.c.l.b16 %v310
    %v1094 = vunpack.c.h.b16 %v310
    %v1095 = vunpack.c.l.b16 %v311
    %v1096 = vunpack.c.h.b16 %v311
    %v1097 = vunpack.c.l.b16 %v312
    %v1098 = vunpack.c.h.b16 %v312
    %v1099 = vunpack.c.l.b16 %v313
    %v1100 = vunpack.c.h.b16 %v313
    %v1101 = vunpack.c.l.b16 %v314
    %v1102 = vunpack.c.h.b16 %v314
    %v1103 = vunpack.c.l.b16 %v315
    %v1104 = vunpack.c.h.b16 %v315
    %v1105 = vunpack.c.l.b16 %v316
    %v1106 = vunpack.c.h.b16 %v316
    %v1107 = vunpack.c.l.b16 %v317
    %v1108 = vunpack.c.h.b16 %v317
    %v1109 = vunpack.c.l.b16 %v318
    %v1110 = vunpack.c.h.b16 %v318
    %v1111 = vunpack.c.l.b16 %v319
    %v1112 = vunpack.c.h.b16 %v319
    %v1113 = vunpack.c.l.b16 %v320
    %v1114 = vunpack.c.h.b16 %v320
    %v1115 = vunpack.c.l.b16 %v321
    %v1116 = vunpack.c.h.b16 %v321
    %v1117 = vunpack.c.l.b16 %v322
    %v1118 = vunpack.c.h.b16 %v322
    %v1119 = vunpack.c.l.b16 %v323
    %v1120 = vunpack.c.h.b16 %v323
    %v1121 = vunpack.c.l.b16 %v324
    %v1122 = vunpack.c.h.b16 %v324
    %v1123 = vunpack.c.l.b16 %v325
    %v1124 = vunpack.c.h.b16 %v325
    %v1125 = vunpack.c.l.b16 %v326
    %v1126 = vunpack.c.h.b16 %v326
    %v1127 = vunpack.c.l.b16 %v327
    %v1128 = vunpack.c.h.b16 %v327
    %v1129 = vunpack.c.l.b16 %v328
    %v1130 = vunpack.c.h.b16 %v328
    %v1131 = vunpack.c.l.b16 %v329
    %v1132 = vunpack.c.h.b16 %v329
    %v1133 = vunpack.c.l.b16 %v330
    %v1134 = vunpack.c.h.b16 %v330
    %v1135 = vunpack.c.l.b16 %v331
    %v1136 = vunpack.c.h.b16 %v331
    %v1137 = vunpack.c.l.b16 %v332
    %v1138 = vunpack.c.h.b16 %v332
    %v1139 = vunpack.c.l.b16 %v333
    %v1140 = vunpack.c.h.b16 %v333
    %v1141 = vunpack.c.l.b16 %v334
    %v1142 = vunpack.c.h.b16 %v334
    %v1143 = vunpack.c.l.b16 %v335
    %v1144 = vunpack.c.h.b16 %v335
    %v1145 = vunpack.c.l.b16 %v336
    %v1146 = vunpack.c.h.b16 %v336
    %v1147 = vunpack.c.l.b16 %v337
    %v1148 = vunpack.c.h.b16 %v337
    %v1149 = vunpack.c.l.b16 %v338
    %v1150 = vunpack.c.h.b16 %v338
    %v1151 = vunpack.c.l.b16 %v339
    %v1152 = vunpack.c.h.b16 %v339
    %v1153 = vunpack.c.l.b16 %v340
    %v1154 = vunpack.c.h.b16 %v340
    %v1155 = vunpack.c.l.b16 %v341
    %v1156 = vunpack.c.h.b16 %v341
    %v1157 = vunpack.c.l.b16 %v342
    %v1158 = vunpack.c.h.b16 %v342
    %v1159 = vunpack.c.l.b16 %v343
    %v1160 = vunpack.c.h.b16 %v343
    %v1161 = vunpack.c.l.b16 %v344
    %v1162 = vunpack.c.h.b16 %v344
    %v1163 = vunpack.c.l.b16 %v345
    %v1164 = vunpack.c.h.b16 %v345
    %v1165 = vunpack.c.l.b16 %v346
    %v1166 = vunpack.c.h.b16 %v346
    %v1167 = vunpack.c.l.b16 %v347
    %v1168 = vunpack.c.h.b16 %v347
    %v1169 = vunpack.c.l.b16 %v348
    %v1170 = vunpack.c.h.b16 %v348
    %v1171 = vunpack.c.l.b16 %v349
    %v1172 = vunpack.c.h.b16 %v349
    %v1173 = vunpack.c.l.b16 %v350
    %v1174 = vunpack.c.h.b16 %v350
    %v1175 = vunpack.c.l.b16 %v351
    %v1176 = vunpack.c.h.b16 %v351
    %v1177 = vunpack.c.l.b16 %v352
    %v1178 = vunpack.c.h.b16 %v352
    %v1179 = vunpack.c.l.b16 %v353
    %v1180 = vunpack.c.h.b16 %v353
    %v1181 = vunpack.c.l.b16 %v354
    %v1182 = vunpack.c.h.b16 %v354
    %v1183 = vunpack.c.l.b16 %v355
    %v1184 = vunpack.c.h.b16 %v355
    %v1185 = vunpack.c.l.b16 %v356
    %v1186 = vunpack.c.h.b16 %v356
    %v1187 = vunpack.c.l.b16 %v357
    %v1188 = vunpack.c.h.b16 %v357
    %v1189 = vunpack.c.l.b16 %v358
    %v1190 = vunpack.c.h.b16 %v358
    %v1191 = vunpack.c.l.b16 %v359
    %v1192 = vunpack.c.h.b16 %v359
    %v1193 = vunpack.c.l.b16 %v360
    %v1194 = vunpack.c.h.b16 %v360
    %v1195 = vunpack.c.l.b16 %v361
    %v1196 = vunpack.c.h.b16 %v361
    %v1197 = vunpack.c.l.b16 %v362
    %v1198 = vunpack.c.h.b16 %v362
    %v1199 = vunpack.c.l.b16 %v363
    %v1200 = vunpack.c.h.b16 %v363
    %v1201 = vunpack.c.l.b16 %v364
    %v1202 = vunpack.c.h.b16 %v364
    %v1203 = vunpack.c.l.b16 %v365
    %v1204 = vunpack.c.h.b16 %v365
    %v1205 = vunpack.c.l.b16 %v366
    %v1206 = vunpack.c.h.b16 %v366
    %v1207 = vunpack.c.l.b16 %v367
    %v1208 = vunpack.c.h.b16 %v367
    %v1209 = vunpack.c.l.b16 %v368
    %v1210 = vunpack.c.h.b16 %v368
    %v1211 = vunpack.c.l.b16 %v369
    %v1212 = vunpack.c.h.b16 %v369
    %v1213 = vunpack.c.l.b16 %v370
    %v1214 = vunpack.c.h.b16 %v370
    %v1215 = vunpack.c.l.b16 %v371
    %v1216 = vunpack.c.h.b16 %v371
    %v1217 = vunpack.c.l.b16 %v372
    %v1218 = vunpack.c.h.b16 %v372
    %v1219 = vunpack.c.l.b16 %v373
    %v1220 = vunpack.c.h.b16 %v373
    %v1221 = vunpack.c.l.b16 %v374
    %v1222 = vunpack.c.h.b16 %v374
    %v1223 = vunpack.c.l.b16 %v375
    %v1224 = vunpack.c.h.b16 %v375
    %v1225 = vunpack.c.l.b16 %v376
    %v1226 = vunpack.c.h.b16 %v376
    %v1227 = vunpack.c.l.b16 %v377
    %v1228 = vunpack.c.h.b16 %v377
    %v1229 = vunpack.c.l.b16 %v378
    %v1230 = vunpack.c.h.b16 %v378
    %v1231 = vunpack.c.l.b16 %v379
    %v1232 = vunpack.c.h.b16 %v379
    %v1233 = vunpack.c.l.b16 %v380
    %v1234 = vunpack.c.h.b16 %v380
    %v1235 = vunpack.c.l.b16 %v381
    %v1236 = vunpack.c.h.b16 %v381
    %v1237 = vunpack.c.l.b16 %v382
    %v1238 = vunpack.c.h.b16 %v382
    %v1239 = vunpack.c.l.b16 %v383
    %v1240 = vunpack.c.h.b16 %v383
    %v1241 = vunpack.c.l.b16 %v384
    %v1242 = vunpack.c.h.b16 %v384
    %v1243 = vunpack.c.l.b16 %v385
    %v1244 = vunpack.c.h.b16 %v385
    %v1245 = vunpack.c.l.b16 %v386
    %v1246 = vunpack.c.h.b16 %v386
    %v1247 = vunpack.c.l.b16 %v387
    %v1248 = vunpack.c.h.b16 %v387
    %v1249 = vunpack.c.l.b16 %v388
    %v1250 = vunpack.c.h.b16 %v388
    %v1251 = vunpack.c.l.b16 %v389
    %v1252 = vunpack.c.h.b16 %v389
    %v1253 = vunpack.c.l.b16 %v390
    %v1254 = vunpack.c.h.b16 %v390
    %v1255 = vunpack.c.l.b16 %v391
    %v1256 = vunpack.c.h.b16 %v391
    %v1257 = vunpack.c.l.b16 %v392
    %v1258 = vunpack.c.h.b16 %v392
    %v1259 = vunpack.c.l.b16 %v393
    %v1260 = vunpack.c.h.b16 %v393
    %v1261 = vunpack.c.l.b16 %v394
    %v1262 = vunpack.c.h.b16 %v394
    %v1263 = vunpack.c.l.b16 %v395
    %v1264 = vunpack.c.h.b16 %v395
    %v1265 = vunpack.c.l.b16 %v396
    %v1266 = vunpack.c.h.b16 %v396
    %v1267 = vunpack.c.l.b16 %v397
    %v1268 = vunpack.c.h.b16 %v397
    %v1269 = vunpack.c.l.b16 %v398
    %v1270 = vunpack.c.h.b16 %v398
    %v1271 = vunpack.c.l.b16 %v399
    %v1272 = vunpack.c.h.b16 %v399
    %v1273 = vunpack.c.l.b16 %v400
    %v1274 = vunpack.c.h.b16 %v400
    %v1275 = vunpack.c.l.b16 %v401
    %v1276 = vunpack.c.h.b16 %v401
    %v1277 = vunpack.c.l.b16 %v402
    %v1278 = vunpack.c.h.b16 %v402
    %v1279 = vunpack.c.l.b16 %v403
    %v1280 = vunpack.c.h.b16 %v403
    %v1281 = vunpack.c.l.b16 %v404
    %v1282 = vunpack.c.h.b16 %v404
    %v1283 = vunpack.c.l.b16 %v405
    %v1284 = vunpack.c.h.b16 %v405
    %v1285 = vunpack.c.l.b16 %v406
    %v1286 = vunpack.c.h.b16 %v406
    %v1287 = vunpack.c.l.b16 %v407
    %v1288 = vunpack.c.h.b16 %v407
    %v1289 = vunpack.c.l.b16 %v408
    %v1290 = vunpack.c.h.b16 %v408
    %v1291 = vunpack.c.l.b16 %v409
    %v1292 = vunpack.c.h.b16 %v409
    %v1293 = vunpack.c.l.b16 %v410
    %v1294 = vunpack.c.h.b16 %v410
    %v1295 = vunpack.c.l.b16 %v411
    %v1296 = vunpack.c.h.b16 %v411
    %v1297 = vunpack.c.l.b16 %v412
    %v1298 = vunpack.c.h.b16 %v412
    %v1299 = vunpack.c.l.b16 %v413
    %v1300 = vunpack.c.h.b16 %v413
    %v1301 = vunpack.c.l.b16 %v414
    %v1302 = vunpack.c.h.b16 %v414
    %v1303 = vunpack.c.l.b16 %v415
    %v1304 = vunpack.c.h.b16 %v415
    %v1305 = vunpack.c.l.b16 %v416
    %v1306 = vunpack.c.h.b16 %v416
    %v1307 = vunpack.c.l.b16 %v417
    %v1308 = vunpack.c.h.b16 %v417
    %v1309 = vunpack.c.l.b16 %v418
    %v1310 = vunpack.c.h.b16 %v418
    %v1311 = vunpack.c.l.b16 %v419
    %v1312 = vunpack.c.h.b16 %v419
    %v1313 = vunpack.c.l.b16 %v420
    %v1314 = vunpack.c.h.b16 %v420
    %v1315 = vunpack.c.l.b16 %v421
    %v1316 = vunpack.c.h.b16 %v421
    %v1317 = vunpack.c.l.b16 %v422
    %v1318 = vunpack.c.h.b16 %v422
    %v1319 = vpack.c.b16 %v749, %v743
    %v1320 = vpack.c.b16 %v750, %v744
    %v1321 = vpack.c.b16 %v751, %v745
    %v1322 = vpack.c.b16 %v752, %v746
    %v1323 = vpack.c.b16 %v753, %v747
    %v1324 = vpack.c.b16 %v754, %v748
    %v1325 = vpack.c.b16 %v761, %v755
    %v1326 = vpack.c.b16 %v762, %v756
    %v1327 = vpack.c.b16 %v763, %v757
    %v1328 = vpack.c.b16 %v764, %v758
    %v1329 = vpack.c.b16 %v765, %v759
    %v1330 = vpack.c.b16 %v766, %v760
    %v1331 = vpack.c.b16 %v773, %v767
    %v1332 = vpack.c.b16 %v774, %v768
    %v1333 = vpack.c.b16 %v775, %v769
    %v1334 = vpack.c.b16 %v776, %v770
    %v1335 = vpack.c.b16 %v777, %v771
    %v1336 = vpack.c.b16 %v778, %v772
    %v1337 = vpack.c.b16 %v785, %v779
    %v1338 = vpack.c.b16 %v786, %v780
    %v1339 = vpack.c.b16 %v787, %v781
    %v1340 = vpack.c.b16 %v788, %v782
    %v1341 = vpack.c.b16 %v789, %v783
    %v1342 = vpack.c.b16 %v790, %v784
    %v1343 = vpack.c.b16 %v797, %v791
    %v1344 = vpack.c.b16 %v798, %v792
    %v1345 = vpack.c.b16 %v799, %v793
    %v1346 = vpack.c.b16 %v800, %v794
    %v1347 = vpack.c.b16 %v801, %v795
    %v1348 = vpack.c.b16 %v802, %v796
    %v1349 = vpack.c.b16 %v809, %v803
    %v1350 = vpack.c.b16 %v810, %v804
    %v1351 = vpack.c.b16 %v811, %v805
    %v1352 = vpack.c.b16 %v812, %v806
    %v1353 = vpack.c.b16 %v813, %v807
    %v1354 = vpack.c.b16 %v814, %v808
    %v1355 = vpack.c.b16 %v821, %v815
    %v1356 = vpack.c.b16 %v822, %v816
    %v1357 = vpack.c.b16 %v823, %v817
    %v1358 = vpack.c.b16 %v824, %v818
    %v1359 = vpack.c.b16 %v825, %v819
    %v1360 = vpack.c.b16 %v826, %v820
    %v1361 = vpack.c.b16 %v833, %v827
    %v1362 = vpack.c.b16 %v834, %v828
    %v1363 = vpack.c.b16 %v835, %v829
    %v1364 = vpack.c.b16 %v836, %v830
    %v1365 = vpack.c.b16 %v837, %v831
    %v1366 = vpack.c.b16 %v838, %v832
    %v1367 = vpack.c.b16 %v845, %v839
    %v1368 = vpack.c.b16 %v846, %v840
    %v1369 = vpack.c.b16 %v847, %v841
    %v1370 = vpack.c.b16 %v848, %v842
    %v1371 = vpack.c.b16 %v849, %v843
    %v1372 = vpack.c.b16 %v850, %v844
    %v1373 = vpack.c.b16 %v857, %v851
    %v1374 = vpack.c.b16 %v858, %v852
    %v1375 = vpack.c.b16 %v859, %v853
    %v1376 = vpack.c.b16 %v860, %v854
    %v1377 = vpack.c.b16 %v861, %v855
    %v1378 = vpack.c.b16 %v862, %v856
    %v1379 = vpack.c.b16 %v869, %v863
    %v1380 = vpack.c.b16 %v870, %v864
    %v1381 = vpack.c.b16 %v871, %v865
    %v1382 = vpack.c.b16 %v872, %v866
    %v1383 = vpack.c.b16 %v873, %v867
    %v1384 = vpack.c.b16 %v874, %v868
    %v1385 = vpack.c.b16 %v881, %v875
    %v1386 = vpack.c.b16 %v882, %v876
    %v1387 = vpack.c.b16 %v883, %v877
    %v1388 = vpack.c.b16 %v884, %v878
    %v1389 = vpack.c.b16 %v885, %v879
    %v1390 = vpack.c.b16 %v886, %v880
    %v1391 = vpack.c.b16 %v893, %v887
    %v1392 = vpack.c.b16 %v894, %v888
    %v1393 = vpack.c.b16 %v895, %v889
    %v1394 = vpack.c.b16 %v896, %v890
    %v1395 = vpack.c.b16 %v897, %v891
    %v1396 = vpack.c.b16 %v898, %v892
    %v1397 = vpack.c.b16 %v905, %v899
    %v1398 = vpack.c.b16 %v906, %v900
    %v1399 = vpack.c.b16 %v907, %v901
    %v1400 = vpack.c.b16 %v908, %v902
    %v1401 = vpack.c.b16 %v909, %v903
    %v1402 = vpack.c.b16 %v910, %v904
    %v1403 = vpack.c.b16 %v917, %v911
    %v1404 = vpack.c.b16 %v918, %v912
    %v1405 = vpack.c.b16 %v919, %v913
    %v1406 = vpack.c.b16 %v920, %v914
    %v1407 = vpack.c.b16 %v921, %v915
    %v1408 = vpack.c.b16 %v922, %v916
    %v1409 = vpack.c.b16 %v929, %v923
    %v1410 = vpack.c.b16 %v930, %v924
    %v1411 = vpack.c.b16 %v931, %v925
    %v1412 = vpack.c.b16 %v932, %v926
    %v1413 = vpack.c.b16 %v933, %v927
    %v1414 = vpack.c.b16 %v934, %v928
    %v1415 = vpack.c.b16 %v941, %v935
    %v1416 = vpack.c.b16 %v942, %v936
    %v1417 = vpack.c.b16 %v943, %v937
    %v1418 = vpack.c.b16 %v944, %v938
    %v1419 = vpack.c.b16 %v945, %v939
    %v1420 = vpack.c.b16 %v946, %v940
    %v1421 = vpack.c.b16 %v953, %v947
    %v1422 = vpack.c.b16 %v954, %v948
    %v1423 = vpack.c.b16 %v955, %v949
    %v1424 = vpack.c.b16 %v956, %v950
    %v1425 = vpack.c.b16 %v957, %v951
    %v1426 = vpack.c.b16 %v958, %v952
    %v1427 = vpack.c.b16 %v965, %v959
    %v1428 = vpack.c.b16 %v966, %v960
    %v1429 = vpack.c.b16 %v967, %v961
    %v1430 = vpack.c.b16 %v968, %v962
    %v1431 = vpack.c.b16 %v969, %v963
    %v1432 = vpack.c.b16 %v970, %v964
    %v1433 = vpack.c.b16 %v977, %v971
    %v1434 = vpack.c.b16 %v978, %v972
    %v1435 = vpack.c.b16 %v979, %v973
    %v1436 = vpack.c.b16 %v980, %v974
    %v1437 = vpack.c.b16 %v981, %v975
    %v1438 = vpack.c.b16 %v982, %v976
    %v1439 = vpack.c.b16 %v989, %v983
    %v1440 = vpack.c.b16 %v990, %v984
    %v1441 = vpack.c.b16 %v991, %v985
    %v1442 = vpack.c.b16 %v992, %v986
    %v1443 = vpack.c.b16 %v993, %v987
    %v1444 = vpack.c.b16 %v994, %v988
    %v1445 = vpack.c.b16 %v1001, %v995
    %v1446 = vpack.c.b16 %v1002, %v996
    %v1447 = vpack.c.b16 %v1003, %v997
    %v1448 = vpack.c.b16 %v1004, %v998
    %v1449 = vpack.c.b16 %v1005, %v999
    %v1450 = vpack.c.b16 %v1006, %v1000
    %v1451 = vpack.c.b16 %v1013, %v1007
    %v1452 = vpack.c.b16 %v1014, %v1008
    %v1453 = vpack.c.b16 %v1015, %v1009
    %v1454 = vpack.c.b16 %v1016, %v1010
    %v1455 = vpack.c.b16 %v1017, %v1011
    %v1456 = vpack.c.b16 %v1018, %v1012
    %v1457 = vpack.c.b16 %v1025, %v1019
    %v1458 = vpack.c.b16 %v1026, %v1020
    %v1459 = vpack.c.b16 %v1027, %v1021
    %v1460 = vpack.c.b16 %v1028, %v1022
    %v1461 = vpack.c.b16 %v1029, %v1023
    %v1462 = vpack.c.b16 %v1030, %v1024
    %v1463 = vpack.c.b16 %v1037, %v1031
    %v1464 = vpack.c.b16 %v1038, %v1032
    %v1465 = vpack.c.b16 %v1039, %v1033
    %v1466 = vpack.c.b16 %v1040, %v1034
    %v1467 = vpack.c.b16 %v1041, %v1035
    %v1468 = vpack.c.b16 %v1042, %v1036
    %v1469 = vpack.c.b16 %v1049, %v1043
    %v1470 = vpack.c.b16 %v1050, %v1044
    %v1471 = vpack.c.b16 %v1051, %v1045
    %v1472 = vpack.c.b16 %v1052, %v1046
    %v1473 = vpack.c.b16 %v1053, %v1047
    %v1474 = vpack.c.b16 %v1054, %v1048
    %v1475 = vpack.c.b16 %v1061, %v1055
    %v1476 = vpack.c.b16 %v1062, %v1056
    %v1477 = vpack.c.b16 %v1063, %v1057
    %v1478 = vpack.c.b16 %v1064, %v1058
    %v1479 = vpack.c.b16 %v1065, %v1059
    %v1480 = vpack.c.b16 %v1066, %v1060
    %v1481 = vpack.c.b16 %v1073, %v1067
    %v1482 = vpack.c.b16 %v1074, %v1068
    %v1483 = vpack.c.b16 %v1075, %v1069
    %v1484 = vpack.c.b16 %v1076, %v1070
    %v1485 = vpack.c.b16 %v1077, %v1071
    %v1486 = vpack.c.b16 %v1078, %v1072
    %v1487 = vpack.c.b16 %v1085, %v1079
    %v1488 = vpack.c.b16 %v1086, %v1080
    %v1489 = vpack.c.b16 %v1087, %v1081
    %v1490 = vpack.c.b16 %v1088, %v1082
    %v1491 = vpack.c.b16 %v1089, %v1083
    %v1492 = vpack.c.b16 %v1090, %v1084
    %v1493 = vpack.c.b16 %v1097, %v1091
    %v1494 = vpack.c.b16 %v1098, %v1092
    %v1495 = vpack.c.b16 %v1099, %v1093
    %v1496 = vpack.c.b16 %v1100, %v1094
    %v1497 = vpack.c.b16 %v1101, %v1095
    %v1498 = vpack.c.b16 %v1102, %v1096
    %v1499 = vpack.c.b16 %v1109, %v1103
    %v1500 = vpack.c.b16 %v1110, %v1104
    %v1501 = vpack.c.b16 %v1111, %v1105
    %v1502 = vpack.c.b16 %v1112, %v1106
    %v1503 = vpack.c.b16 %v1113, %v1107
    %v1504 = vpack.c.b16 %v1114, %v1108
    %v1505 = vpack.c.b16 %v1121, %v1115
    %v1506 = vpack.c.b16 %v1122, %v1116
    %v1507 = vpack.c.b16 %v1123, %v1117
    %v1508 = vpack.c.b16 %v1124, %v1118
    %v1509 = vpack.c.b16 %v1125, %v1119
    %v1510 = vpack.c.b16 %v1126, %v1120
    %v1511 = vpack.c.b16 %v1133, %v1127
    %v1512 = vpack.c.b16 %v1134, %v1128
    %v1513 = vpack.c.b16 %v1135, %v1129
    %v1514 = vpack.c.b16 %v1136, %v1130
    %v1515 = vpack.c.b16 %v1137, %v1131
    %v1516 = vpack.c.b16 %v1138, %v1132
    %v1517 = vpack.c.b16 %v1145, %v1139
    %v1518 = vpack.c.b16 %v1146, %v1140
    %v1519 = vpack.c.b16 %v1147, %v1141
    %v1520 = vpack.c.b16 %v1148, %v1142
    %v1521 = vpack.c.b16 %v1149, %v1143
    %v1522 = vpack.c.b16 %v1150, %v1144
    %v1523 = vpack.c.b16 %v1157, %v1151
    %v1524 = vpack.c.b16 %v1158, %v1152
    %v1525 = vpack.c.b16 %v1159, %v1153
    %v1526 = vpack.c.b16 %v1160, %v1154
    %v1527 = vpack.c.b16 %v1161, %v1155
    %v1528 = vpack.c.b16 %v1162, %v1156
    %v1529 = vpack.c.b16 %v1169, %v1163
    %v1530 = vpack.c.b16 %v1170, %v1164
    %v1531 = vpack.c.b16 %v1171, %v1165
    %v1532 = vpack.c.b16 %v1172, %v1166
    %v1533 = vpack.c.b16 %v1173, %v1167
    %v1534 = vpack.c.b16 %v1174, %v1168
    %v1535 = vpack.c.b16 %v1181, %v1175
    %v1536 = vpack.c.b16 %v1182, %v1176
    %v1537 = vpack.c.b16 %v1183, %v1177
    %v1538 = vpack.c.b16 %v1184, %v1178
    %v1539 = vpack.c.b16 %v1185, %v1179
    %v1540 = vpack.c.b16 %v1186, %v1180
    %v1541 = vpack.c.b16 %v1193, %v1187
    %v1542 = vpack.c.b16 %v1194, %v1188
    %v1543 = vpack.c.b16 %v1195, %v1189
    %v1544 = vpack.c.b16 %v1196, %v1190
    %v1545 = vpack.c.b16 %v1197, %v1191
    %v1546 = vpack.c.b16 %v1198, %v1192
    %v1547 = vpack.c.b16 %v1205, %v1199
    %v1548 = vpack.c.b16 %v1206, %v1200
    %v1549 = vpack.c.b16 %v1207, %v1201
    %v1550 = vpack.c.b16 %v1208, %v1202
    %v1551 = vpack.c.b16 %v1209, %v1203
    %v1552 = vpack.c.b16 %v1210, %v1204
    %v1553 = vpack.c.b16 %v1217, %v1211
    %v1554 = vpack.c.b16 %v1218, %v1212
    %v1555 = vpack.c.b16 %v1219, %v1213
    %v1556 = vpack.c.b16 %v1220, %v1214
    %v1557 = vpack.c.b16 %v1221, %v1215
    %v1558 = vpack.c.b16 %v1222, %v1216
    %v1559 = vpack.c.b16 %v1229, %v1223
    %v1560 = vpack.c.b16 %v1230, %v1224
    %v1561 = vpack.c.b16 %v1231, %v1225
    %v1562 = vpack.c.b16 %v1232, %v1226
    %v1563 = vpack.c.b16 %v1233, %v1227
    %v1564 = vpack.c.b16 %v1234, %v1228
    %v1565 = vpack.c.b16 %v1241, %v1235
    %v1566 = vpack.c.b16 %v1242, %v1236
    %v1567 = vpack.c.b16 %v1243, %v1237
    %v1568 = vpack.c.b16 %v1244, %v1238
    %v1569 = vpack.c.b16 %v1245, %v1239
    %v1570 = vpack.c.b16 %v1246, %v1240
    %v1571 = vpack.c.b16 %v1253, %v1247
    %v1572 = vpack.c.b16 %v1254, %v1248
    %v1573 = vpack.c.b16 %v1255, %v1249
    %v1574 = vpack.c.b16 %v1256, %v1250
    %v1575 = vpack.c.b16 %v1257, %v1251
    %v1576 = vpack.c.b16 %v1258, %v1252
    %v1577 = vpack.c.b16 %v1265, %v1259
    %v1578 = vpack.c.b16 %v1266, %v1260
    %v1579 = vpack.c.b16 %v1267, %v1261
    %v1580 = vpack.c.b16 %v1268, %v1262
    %v1581 = vpack.c.b16 %v1269, %v1263
    %v1582 = vpack.c.b16 %v1270, %v1264
    %v1583 = vpack.c.b16 %v1277, %v1271
    %v1584 = vpack.c.b16 %v1278, %v1272
    %v1585 = vpack.c.b16 %v1279, %v1273
    %v1586 = vpack.c.b16 %v1280, %v1274
    %v1587 = vpack.c.b16 %v1281, %v1275
    %v1588 = vpack.c.b16 %v1282, %v1276
    %v1589 = vpack.c.b16 %v1289, %v1283
    %v1590 = vpack.c.b16 %v1290, %v1284
    %v1591 = vpack.c.b16 %v1291, %v1285
    %v1592 = vpack.c.b16 %v1292, %v1286
    %v1593 = vpack.c.b16 %v1293, %v1287
    %v1594 = vpack.c.b16 %v1294, %v1288
    %v1595 = vpack.c.b16 %v1301, %v1295
    %v1596 = vpack.c.b16 %v1302, %v1296
    %v1597 = vpack.c.b16 %v1303, %v1297
    %v1598 = vpack.c.b16 %v1304, %v1298
    %v1599 = vpack.c.b16 %v1305, %v1299
    %v1600 = vpack.c.b16 %v1306, %v1300
    %v1601 = vpack.c.b16 %v1313, %v1307
    %v1602 = vpack.c.b16 %v1314, %v1308
    %v1603 = vpack.c.b16 %v1315, %v1309
    %v1604 = vpack.c.b16 %v1316, %v1310
    %v1605 = vpack.c.b16 %v1317, %v1311
    %v1606 = vpack.c.b16 %v1318, %v1312
    %1895 = vmatprep.subr.bf16.mxu0 %v1320
    %1896 = vmatpush1.bf16.msra.mxu0 %v1319
    %1897 = vmatprep.subr.bf16.mxu0 %v1326
    %1898 = vmatpush1.bf16.msra.mxu0 %v1325
    %1899 = vmatprep.subr.bf16.mxu0 %v1332
    %1900 = vmatpush1.bf16.msra.mxu0 %v1331
    %1901 = vmatprep.subr.bf16.mxu0 %v1338
    %1902 = vmatpush1.bf16.msra.mxu0 %v1337
    %1903 = vmatprep.subr.bf16.mxu0 %v1344
    %1904 = vmatpush1.bf16.msra.mxu0 %v1343
    %1905 = vmatprep.subr.bf16.mxu0 %v1350
    %1906 = vmatpush1.bf16.msra.mxu0 %v1349
    %1907 = vmatprep.subr.bf16.mxu0 %v1356
    %1908 = vmatpush1.bf16.msra.mxu0 %v1355
    %1909 = vmatprep.subr.bf16.mxu0 %v1362
    %1910 = vmatpush1.bf16.msra.mxu0 %v1361
    %1911 = vmatprep.subr.bf16.mxu0 %v1368
    %1912 = vmatpush1.bf16.msra.mxu0 %v1367
    %1913 = vmatprep.subr.bf16.mxu0 %v1374
    %1914 = vmatpush1.bf16.msra.mxu0 %v1373
    %1915 = vmatprep.subr.bf16.mxu0 %v1380
    %1916 = vmatpush1.bf16.msra.mxu0 %v1379
    %1917 = vmatprep.subr.bf16.mxu0 %v1386
    %1918 = vmatpush1.bf16.msra.mxu0 %v1385
    %1919 = vmatprep.subr.bf16.mxu0 %v1392
    %1920 = vmatpush1.bf16.msra.mxu0 %v1391
    %1921 = vmatprep.subr.bf16.mxu0 %v1398
    %1922 = vmatpush1.bf16.msra.mxu0 %v1397
    %1923 = vmatprep.subr.bf16.mxu0 %v1404
    %1924 = vmatpush1.bf16.msra.mxu0 %v1403
    %1925 = vmatprep.subr.bf16.mxu0 %v1410
    %1926 = vmatpush1.bf16.msra.mxu0 %v1409
    %1927 = vmatprep.mubr.bf16.mxu0 %v130
    %1928 = vmatmul.mubr.bf16.gmra.mrb[0].mxu0 %v129
    %v1929 = vpop.f32.mrb[0].mxu0
    %v1930 = vadd.f32 %v428, %v1929
    %v1931 = vpop.f32.mrb[0].mxu0
    %v1932 = vadd.f32 %v432, %v1931
    %v1933 = vpop.f32.mrb[0].mxu0
    %v1934 = vadd.f32 %v428, %v1933
    %v1935 = vpop.f32.mrb[0].mxu0
    %v1936 = vadd.f32 %v432, %v1935
    %1937 = vdwg.mxu0
    %1938 = vmatprep.subr.bf16.mxu0 %v1416
    %1939 = vmatpush1.bf16.msra.mxu0 %v1415
    %1940 = vmatprep.subr.bf16.mxu0 %v1422
    %1941 = vmatpush1.bf16.msra.mxu0 %v1421
    %1942 = vmatprep.subr.bf16.mxu0 %v1428
    %1943 = vmatpush1.bf16.msra.mxu0 %v1427
    %1944 = vmatprep.subr.bf16.mxu0 %v1434
    %1945 = vmatpush1.bf16.msra.mxu0 %v1433
    %1946 = vmatprep.subr.bf16.mxu0 %v1440
    %1947 = vmatpush1.bf16.msra.mxu0 %v1439
    %1948 = vmatprep.subr.bf16.mxu0 %v1446
    %1949 = vmatpush1.bf16.msra.mxu0 %v1445
    %1950 = vmatprep.subr.bf16.mxu0 %v1452
    %1951 = vmatpush1.bf16.msra.mxu0 %v1451
    %1952 = vmatprep.subr.bf16.mxu0 %v1458
    %1953 = vmatpush1.bf16.msra.mxu0 %v1457
    %1954 = vmatprep.subr.bf16.mxu0 %v1464
    %1955 = vmatpush1.bf16.msra.mxu0 %v1463
    %1956 = vmatprep.subr.bf16.mxu0 %v1470
    %1957 = vmatpush1.bf16.msra.mxu0 %v1469
    %1958 = vmatprep.subr.bf16.mxu0 %v1476
    %1959 = vmatpush1.bf16.msra.mxu0 %v1475
    %1960 = vmatprep.subr.bf16.mxu0 %v1482
    %1961 = vmatpush1.bf16.msra.mxu0 %v1481
    %1962 = vmatprep.subr.bf16.mxu0 %v1488
    %1963 = vmatpush1.bf16.msra.mxu0 %v1487
    %1964 = vmatprep.subr.bf16.mxu0 %v1494
    %1965 = vmatpush1.bf16.msra.mxu0 %v1493
    %1966 = vmatprep.subr.bf16.mxu0 %v1500
    %1967 = vmatpush1.bf16.msra.mxu0 %v1499
    %1968 = vmatprep.subr.bf16.mxu0 %v1506
    %1969 = vmatpush1.bf16.msra.mxu0 %v1505
    %1970 = vmatprep.mubr.bf16.mxu0 %v132
    %1971 = vmatmul.mubr.bf16.gmra.mrb[0].mxu0 %v131
    %v1972 = vpop.f32.mrb[0].mxu0
    %v1973 = vadd.f32 %v1930, %v1972
    %v1974 = vpop.f32.mrb[0].mxu0
    %v1975 = vadd.f32 %v1932, %v1974
    %v1976 = vpop.f32.mrb[0].mxu0
    %v1977 = vadd.f32 %v1934, %v1976
    %v1978 = vpop.f32.mrb[0].mxu0
    %v1979 = vadd.f32 %v1936, %v1978
    %1980 = vdwg.mxu0
    %1981 = vmatprep.subr.bf16.mxu0 %v1512
    %1982 = vmatpush1.bf16.msra.mxu0 %v1511
    %1983 = vmatprep.subr.bf16.mxu0 %v1518
    %1984 = vmatpush1.bf16.msra.mxu0 %v1517
    %1985 = vmatprep.subr.bf16.mxu0 %v1524
    %1986 = vmatpush1.bf16.msra.mxu0 %v1523
    %1987 = vmatprep.subr.bf16.mxu0 %v1530
    %1988 = vmatpush1.bf16.msra.mxu0 %v1529
    %1989 = vmatprep.subr.bf16.mxu0 %v1536
    %1990 = vmatpush1.bf16.msra.mxu0 %v1535
    %1991 = vmatprep.subr.bf16.mxu0 %v1542
    %1992 = vmatpush1.bf16.msra.mxu0 %v1541
    %1993 = vmatprep.subr.bf16.mxu0 %v1548
    %1994 = vmatpush1.bf16.msra.mxu0 %v1547
    %1995 = vmatprep.subr.bf16.mxu0 %v1554
    %1996 = vmatpush1.bf16.msra.mxu0 %v1553
    %1997 = vmatprep.subr.bf16.mxu0 %v1560
    %1998 = vmatpush1.bf16.msra.mxu0 %v1559
    %1999 = vmatprep.subr.bf16.mxu0 %v1566
    %2000 = vmatpush1.bf16.msra.mxu0 %v1565
    %2001 = vmatprep.subr.bf16.mxu0 %v1572
    %2002 = vmatpush1.bf16.msra.mxu0 %v1571
    %2003 = vmatprep.subr.bf16.mxu0 %v1578
    %2004 = vmatpush1.bf16.msra.mxu0 %v1577
    %2005 = vmatprep.subr.bf16.mxu0 %v1584
    %2006 = vmatpush1.bf16.msra.mxu0 %v1583
    %2007 = vmatprep.subr.bf16.mxu0 %v1590
    %2008 = vmatpush1.bf16.msra.mxu0 %v1589
    %2009 = vmatprep.subr.bf16.mxu0 %v1596
    %2010 = vmatpush1.bf16.msra.mxu0 %v1595
    %2011 = vmatprep.subr.bf16.mxu0 %v1602
    %2012 = vmatpush1.bf16.msra.mxu0 %v1601
    %2013 = vmatprep.mubr.bf16.mxu0 %v134
    %2014 = vmatmul.mubr.bf16.gmra.mrb[0].mxu0 %v133
    %v2015 = vpop.f32.mrb[0].mxu0
    %v2016 = vadd.f32 %v1973, %v2015
    %v2017 = vpop.f32.mrb[0].mxu0
    %v2018 = vadd.f32 %v1975, %v2017
    %v2019 = vpop.f32.mrb[0].mxu0
    %v2020 = vadd.f32 %v1977, %v2019
    %v2021 = vpop.f32.mrb[0].mxu0
    %v2022 = vadd.f32 %v1979, %v2021
    %2023 = vdwg.mxu0
    %2024 = vmatprep.subr.bf16.mxu0 %v1322
    %2025 = vmatpush1.bf16.msra.mxu0 %v1321
    %2026 = vmatprep.subr.bf16.mxu0 %v1328
    %2027 = vmatpush1.bf16.msra.mxu0 %v1327
    %2028 = vmatprep.subr.bf16.mxu0 %v1334
    %2029 = vmatpush1.bf16.msra.mxu0 %v1333
    %2030 = vmatprep.subr.bf16.mxu0 %v1340
    %2031 = vmatpush1.bf16.msra.mxu0 %v1339
    %2032 = vmatprep.subr.bf16.mxu0 %v1346
    %2033 = vmatpush1.bf16.msra.mxu0 %v1345
    %2034 = vmatprep.subr.bf16.mxu0 %v1352
    %2035 = vmatpush1.bf16.msra.mxu0 %v1351
    %2036 = vmatprep.subr.bf16.mxu0 %v1358
    %2037 = vmatpush1.bf16.msra.mxu0 %v1357
    %2038 = vmatprep.subr.bf16.mxu0 %v1364
    %2039 = vmatpush1.bf16.msra.mxu0 %v1363
    %2040 = vmatprep.subr.bf16.mxu0 %v1370
    %2041 = vmatpush1.bf16.msra.mxu0 %v1369
    %2042 = vmatprep.subr.bf16.mxu0 %v1376
    %2043 = vmatpush1.bf16.msra.mxu0 %v1375
    %2044 = vmatprep.subr.bf16.mxu0 %v1382
    %2045 = vmatpush1.bf16.msra.mxu0 %v1381
    %2046 = vmatprep.subr.bf16.mxu0 %v1388
    %2047 = vmatpush1.bf16.msra.mxu0 %v1387
    %2048 = vmatprep.subr.bf16.mxu0 %v1394
    %2049 = vmatpush1.bf16.msra.mxu0 %v1393
    %2050 = vmatprep.subr.bf16.mxu0 %v1400
    %2051 = vmatpush1.bf16.msra.mxu0 %v1399
    %2052 = vmatprep.subr.bf16.mxu0 %v1406
    %2053 = vmatpush1.bf16.msra.mxu0 %v1405
    %2054 = vmatprep.subr.bf16.mxu0 %v1412
    %2055 = vmatpush1.bf16.msra.mxu0 %v1411
    %2056 = vmatprep.mubr.bf16.mxu0 %v130
    %2057 = vmatmul.mubr.bf16.gmra.mrb[0].mxu0 %v129
    %v2058 = vpop.f32.mrb[0].mxu0
    %v2059 = vadd.f32 %v436, %v2058
    %v2060 = vpop.f32.mrb[0].mxu0
    %v2061 = vadd.f32 %v440, %v2060
    %v2062 = vpop.f32.mrb[0].mxu0
    %v2063 = vadd.f32 %v436, %v2062
    %v2064 = vpop.f32.mrb[0].mxu0
    %v2065 = vadd.f32 %v440, %v2064
    %2066 = vdwg.mxu0
    %2067 = vmatprep.subr.bf16.mxu0 %v1418
    %2068 = vmatpush1.bf16.msra.mxu0 %v1417
    %2069 = vmatprep.subr.bf16.mxu0 %v1424
    %2070 = vmatpush1.bf16.msra.mxu0 %v1423
    %2071 = vmatprep.subr.bf16.mxu0 %v1430
    %2072 = vmatpush1.bf16.msra.mxu0 %v1429
    %2073 = vmatprep.subr.bf16.mxu0 %v1436
    %2074 = vmatpush1.bf16.msra.mxu0 %v1435
    %2075 = vmatprep.subr.bf16.mxu0 %v1442
    %2076 = vmatpush1.bf16.msra.mxu0 %v1441
    %2077 = vmatprep.subr.bf16.mxu0 %v1448
    %2078 = vmatpush1.bf16.msra.mxu0 %v1447
    %2079 = vmatprep.subr.bf16.mxu0 %v1454
    %2080 = vmatpush1.bf16.msra.mxu0 %v1453
    %2081 = vmatprep.subr.bf16.mxu0 %v1460
    %2082 = vmatpush1.bf16.msra.mxu0 %v1459
    %2083 = vmatprep.subr.bf16.mxu0 %v1466
    %2084 = vmatpush1.bf16.msra.mxu0 %v1465
    %2085 = vmatprep.subr.bf16.mxu0 %v1472
    %2086 = vmatpush1.bf16.msra.mxu0 %v1471
    %2087 = vmatprep.subr.bf16.mxu0 %v1478
    %2088 = vmatpush1.bf16.msra.mxu0 %v1477
    %2089 = vmatprep.subr.bf16.mxu0 %v1484
    %2090 = vmatpush1.bf16.msra.mxu0 %v1483
    %2091 = vmatprep.subr.bf16.mxu0 %v1490
    %2092 = vmatpush1.bf16.msra.mxu0 %v1489
    %2093 = vmatprep.subr.bf16.mxu0 %v1496
    %2094 = vmatpush1.bf16.msra.mxu0 %v1495
    %2095 = vmatprep.subr.bf16.mxu0 %v1502
    %2096 = vmatpush1.bf16.msra.mxu0 %v1501
    %2097 = vmatprep.subr.bf16.mxu0 %v1508
    %2098 = vmatpush1.bf16.msra.mxu0 %v1507
    %2099 = vmatprep.mubr.bf16.mxu0 %v132
    %2100 = vmatmul.mubr.bf16.gmra.mrb[0].mxu0 %v131
    %v2101 = vpop.f32.mrb[0].mxu0
    %v2102 = vadd.f32 %v2059, %v2101
    %v2103 = vpop.f32.mrb[0].mxu0
    %v2104 = vadd.f32 %v2061, %v2103
    %v2105 = vpop.f32.mrb[0].mxu0
    %v2106 = vadd.f32 %v2063, %v2105
    %v2107 = vpop.f32.mrb[0].mxu0
    %v2108 = vadd.f32 %v2065, %v2107
    %2109 = vdwg.mxu0
    %2110 = vmatprep.subr.bf16.mxu0 %v1514
    %2111 = vmatpush1.bf16.msra.mxu0 %v1513
    %2112 = vmatprep.subr.bf16.mxu0 %v1520
    %2113 = vmatpush1.bf16.msra.mxu0 %v1519
    %2114 = vmatprep.subr.bf16.mxu0 %v1526
    %2115 = vmatpush1.bf16.msra.mxu0 %v1525
    %2116 = vmatprep.subr.bf16.mxu0 %v1532
    %2117 = vmatpush1.bf16.msra.mxu0 %v1531
    %2118 = vmatprep.subr.bf16.mxu0 %v1538
    %2119 = vmatpush1.bf16.msra.mxu0 %v1537
    %2120 = vmatprep.subr.bf16.mxu0 %v1544
    %2121 = vmatpush1.bf16.msra.mxu0 %v1543
    %2122 = vmatprep.subr.bf16.mxu0 %v1550
    %2123 = vmatpush1.bf16.msra.mxu0 %v1549
    %2124 = vmatprep.subr.bf16.mxu0 %v1556
    %2125 = vmatpush1.bf16.msra.mxu0 %v1555
    %2126 = vmatprep.subr.bf16.mxu0 %v1562
    %2127 = vmatpush1.bf16.msra.mxu0 %v1561
    %2128 = vmatprep.subr.bf16.mxu0 %v1568
    %2129 = vmatpush1.bf16.msra.mxu0 %v1567
    %2130 = vmatprep.subr.bf16.mxu0 %v1574
    %2131 = vmatpush1.bf16.msra.mxu0 %v1573
    %2132 = vmatprep.subr.bf16.mxu0 %v1580
    %2133 = vmatpush1.bf16.msra.mxu0 %v1579
    %2134 = vmatprep.subr.bf16.mxu0 %v1586
    %2135 = vmatpush1.bf16.msra.mxu0 %v1585
    %2136 = vmatprep.subr.bf16.mxu0 %v1592
    %2137 = vmatpush1.bf16.msra.mxu0 %v1591
    %2138 = vmatprep.subr.bf16.mxu0 %v1598
    %2139 = vmatpush1.bf16.msra.mxu0 %v1597
    %2140 = vmatprep.subr.bf16.mxu0 %v1604
    %2141 = vmatpush1.bf16.msra.mxu0 %v1603
    %2142 = vmatprep.mubr.bf16.mxu0 %v134
    %2143 = vmatmul.mubr.bf16.gmra.mrb[0].mxu0 %v133
    %v2144 = vpop.f32.mrb[0].mxu0
    %v2145 = vadd.f32 %v2102, %v2144
    %v2146 = vpop.f32.mrb[0].mxu0
    %v2147 = vadd.f32 %v2104, %v2146
    %v2148 = vpop.f32.mrb[0].mxu0
    %v2149 = vadd.f32 %v2106, %v2148
    %v2150 = vpop.f32.mrb[0].mxu0
    %v2151 = vadd.f32 %v2108, %v2150
    %2152 = vdwg.mxu0
    %2153 = vmatprep.subr.bf16.mxu0 %v1324
    %2154 = vmatpush1.bf16.msra.mxu0 %v1323
    %2155 = vmatprep.subr.bf16.mxu0 %v1330
    %2156 = vmatpush1.bf16.msra.mxu0 %v1329
    %2157 = vmatprep.subr.bf16.mxu0 %v1336
    %2158 = vmatpush1.bf16.msra.mxu0 %v1335
    %2159 = vmatprep.subr.bf16.mxu0 %v1342
    %2160 = vmatpush1.bf16.msra.mxu0 %v1341
    %2161 = vmatprep.subr.bf16.mxu0 %v1348
    %2162 = vmatpush1.bf16.msra.mxu0 %v1347
    %2163 = vmatprep.subr.bf16.mxu0 %v1354
    %2164 = vmatpush1.bf16.msra.mxu0 %v1353
    %2165 = vmatprep.subr.bf16.mxu0 %v1360
    %2166 = vmatpush1.bf16.msra.mxu0 %v1359
    %2167 = vmatprep.subr.bf16.mxu0 %v1366
    %2168 = vmatpush1.bf16.msra.mxu0 %v1365
    %2169 = vmatprep.subr.bf16.mxu0 %v1372
    %2170 = vmatpush1.bf16.msra.mxu0 %v1371
    %2171 = vmatprep.subr.bf16.mxu0 %v1378
    %2172 = vmatpush1.bf16.msra.mxu0 %v1377
    %2173 = vmatprep.subr.bf16.mxu0 %v1384
    %2174 = vmatpush1.bf16.msra.mxu0 %v1383
    %2175 = vmatprep.subr.bf16.mxu0 %v1390
    %2176 = vmatpush1.bf16.msra.mxu0 %v1389
    %2177 = vmatprep.subr.bf16.mxu0 %v1396
    %2178 = vmatpush1.bf16.msra.mxu0 %v1395
    %2179 = vmatprep.subr.bf16.mxu0 %v1402
    %2180 = vmatpush1.bf16.msra.mxu0 %v1401
    %2181 = vmatprep.subr.bf16.mxu0 %v1408
    %2182 = vmatpush1.bf16.msra.mxu0 %v1407
    %2183 = vmatprep.subr.bf16.mxu0 %v1414
    %2184 = vmatpush1.bf16.msra.mxu0 %v1413
    %2185 = vmatprep.mubr.bf16.mxu0 %v130
    %2186 = vmatmul.mubr.bf16.gmra.mrb[0].mxu0 %v129
    %v2187 = vpop.f32.mrb[0].mxu0
    %v2188 = vadd.f32 %v444, %v2187
    %v2189 = vpop.f32.mrb[0].mxu0
    %v2190 = vadd.f32 %v448, %v2189
    %v2191 = vpop.f32.mrb[0].mxu0
    %v2192 = vadd.f32 %v444, %v2191
    %v2193 = vpop.f32.mrb[0].mxu0
    %v2194 = vadd.f32 %v448, %v2193
    %2195 = vdwg.mxu0
    %2196 = vmatprep.subr.bf16.mxu0 %v1420
    %2197 = vmatpush1.bf16.msra.mxu0 %v1419
    %2198 = vmatprep.subr.bf16.mxu0 %v1426
    %2199 = vmatpush1.bf16.msra.mxu0 %v1425
    %2200 = vmatprep.subr.bf16.mxu0 %v1432
    %2201 = vmatpush1.bf16.msra.mxu0 %v1431
    %2202 = vmatprep.subr.bf16.mxu0 %v1438
    %2203 = vmatpush1.bf16.msra.mxu0 %v1437
    %2204 = vmatprep.subr.bf16.mxu0 %v1444
    %2205 = vmatpush1.bf16.msra.mxu0 %v1443
    %2206 = vmatprep.subr.bf16.mxu0 %v1450
    %2207 = vmatpush1.bf16.msra.mxu0 %v1449
    %2208 = vmatprep.subr.bf16.mxu0 %v1456
    %2209 = vmatpush1.bf16.msra.mxu0 %v1455
    %2210 = vmatprep.subr.bf16.mxu0 %v1462
    %2211 = vmatpush1.bf16.msra.mxu0 %v1461
    %2212 = vmatprep.subr.bf16.mxu0 %v1468
    %2213 = vmatpush1.bf16.msra.mxu0 %v1467
    %2214 = vmatprep.subr.bf16.mxu0 %v1474
    %2215 = vmatpush1.bf16.msra.mxu0 %v1473
    %2216 = vmatprep.subr.bf16.mxu0 %v1480
    %2217 = vmatpush1.bf16.msra.mxu0 %v1479
    %2218 = vmatprep.subr.bf16.mxu0 %v1486
    %2219 = vmatpush1.bf16.msra.mxu0 %v1485
    %2220 = vmatprep.subr.bf16.mxu0 %v1492
    %2221 = vmatpush1.bf16.msra.mxu0 %v1491
    %2222 = vmatprep.subr.bf16.mxu0 %v1498
    %2223 = vmatpush1.bf16.msra.mxu0 %v1497
    %2224 = vmatprep.subr.bf16.mxu0 %v1504
    %2225 = vmatpush1.bf16.msra.mxu0 %v1503
    %2226 = vmatprep.subr.bf16.mxu0 %v1510
    %2227 = vmatpush1.bf16.msra.mxu0 %v1509
    %2228 = vmatprep.mubr.bf16.mxu0 %v132
    %2229 = vmatmul.mubr.bf16.gmra.mrb[0].mxu0 %v131
    %v2230 = vpop.f32.mrb[0].mxu0
    %v2231 = vadd.f32 %v2188, %v2230
    %v2232 = vpop.f32.mrb[0].mxu0
    %v2233 = vadd.f32 %v2190, %v2232
    %v2234 = vpop.f32.mrb[0].mxu0
    %v2235 = vadd.f32 %v2192, %v2234
    %v2236 = vpop.f32.mrb[0].mxu0
    %v2237 = vadd.f32 %v2194, %v2236
    %2238 = vdwg.mxu0
    %2239 = vmatprep.subr.bf16.mxu0 %v1516
    %2240 = vmatpush1.bf16.msra.mxu0 %v1515
    %2241 = vmatprep.subr.bf16.mxu0 %v1522
    %2242 = vmatpush1.bf16.msra.mxu0 %v1521
    %2243 = vmatprep.subr.bf16.mxu0 %v1528
    %2244 = vmatpush1.bf16.msra.mxu0 %v1527
    %2245 = vmatprep.subr.bf16.mxu0 %v1534
    %2246 = vmatpush1.bf16.msra.mxu0 %v1533
    %2247 = vmatprep.subr.bf16.mxu0 %v1540
    %2248 = vmatpush1.bf16.msra.mxu0 %v1539
    %2249 = vmatprep.subr.bf16.mxu0 %v1546
    %2250 = vmatpush1.bf16.msra.mxu0 %v1545
    %2251 = vmatprep.subr.bf16.mxu0 %v1552
    %2252 = vmatpush1.bf16.msra.mxu0 %v1551
    %2253 = vmatprep.subr.bf16.mxu0 %v1558
    %2254 = vmatpush1.bf16.msra.mxu0 %v1557
    %2255 = vmatprep.subr.bf16.mxu0 %v1564
    %2256 = vmatpush1.bf16.msra.mxu0 %v1563
    %2257 = vmatprep.subr.bf16.mxu0 %v1570
    %2258 = vmatpush1.bf16.msra.mxu0 %v1569
    %2259 = vmatprep.subr.bf16.mxu0 %v1576
    %2260 = vmatpush1.bf16.msra.mxu0 %v1575
    %2261 = vmatprep.subr.bf16.mxu0 %v1582
    %2262 = vmatpush1.bf16.msra.mxu0 %v1581
    %2263 = vmatprep.subr.bf16.mxu0 %v1588
    %2264 = vmatpush1.bf16.msra.mxu0 %v1587
    %2265 = vmatprep.subr.bf16.mxu0 %v1594
    %2266 = vmatpush1.bf16.msra.mxu0 %v1593
    %2267 = vmatprep.subr.bf16.mxu0 %v1600
    %2268 = vmatpush1.bf16.msra.mxu0 %v1599
    %2269 = vmatprep.subr.bf16.mxu0 %v1606
    %2270 = vmatpush1.bf16.msra.mxu0 %v1605
    %2271 = vmatprep.mubr.bf16.mxu0 %v134
    %2272 = vmatmul.mubr.bf16.gmra.mrb[0].mxu0 %v133
    %v2273 = vpop.f32.mrb[0].mxu0
    %v2274 = vadd.f32 %v2231, %v2273
    %v2275 = vpop.f32.mrb[0].mxu0
    %v2276 = vadd.f32 %v2233, %v2275
    %v2277 = vpop.f32.mrb[0].mxu0
    %v2278 = vadd.f32 %v2235, %v2277
    %v2279 = vpop.f32.mrb[0].mxu0
    %v2280 = vadd.f32 %v2237, %v2279
    %2281 = vdwg.mxu0
    %v2282 = vmax.f32 %v2016, 0.0
    %v2283 = vmax.f32 %v2018, 0.0
    %v2284 = vmax.f32 %v2145, 0.0
    %v2285 = vmax.f32 %v2147, 0.0
    %v2286 = vmax.f32 %v2274, 0.0
    %v2287 = vmax.f32 %v2276, 0.0
    %v2288 = vmax.f32 %v2020, 0.0
    %v2289 = vmax.f32 %v2022, 0.0
    %v2290 = vmax.f32 %v2149, 0.0
    %v2291 = vmax.f32 %v2151, 0.0
    %v2292 = vmax.f32 %v2278, 0.0
    %v2293 = vmax.f32 %v2280, 0.0
    %v2294 = vpack.c.bf16 %v2288, %v2282
    %v2295 = vpack.c.bf16 %v2289, %v2283
    %v2296 = vpack.c.bf16 %v2290, %v2284
    %v2297 = vpack.c.bf16 %v2291, %v2285
    %v2298 = vpack.c.bf16 %v2292, %v2286
    %v2299 = vpack.c.bf16 %v2293, %v2287
    %v2300 = vld [vmem:[#allocation8] sm:$0xff]
    %v2301 = vld [vmem:[#allocation8 + $0x8] sm:$0xff]
    %v2302 = vld [vmem:[#allocation8 + $0x10] sm:$0xff]
    %v2303 = vld [vmem:[#allocation8 + $0x18] sm:$0xff]
    %v2304 = vld [vmem:[#allocation8 + $0x20] sm:$0xff]
    %v2305 = vld [vmem:[#allocation8 + $0x28] sm:$0xff]
    %v2306 = vld [vmem:[#allocation8 + $0x30] sm:$0xff]
    %v2307 = vld [vmem:[#allocation8 + $0x38] sm:$0xff]
    %v2308 = vld [vmem:[#allocation8 + $0x40] sm:$0xff]
    %v2309 = vld [vmem:[#allocation8 + $0x48] sm:$0xff]
    %v2310 = vld [vmem:[#allocation8 + $0x50] sm:$0xff]
    %v2311 = vld [vmem:[#allocation8 + $0x58] sm:$0xff]
    %v2312 = vld [vmem:[#allocation8 + $0x60] sm:$0xff]
    %v2313 = vld [vmem:[#allocation8 + $0x68] sm:$0xff]
    %v2314 = vld [vmem:[#allocation8 + $0x70] sm:$0xff]
    %v2315 = vld [vmem:[#allocation8 + $0x78] sm:$0xff]
    %v2316 = vld [vmem:[#allocation8 + $0x80] sm:$0xff]
    %v2317 = vld [vmem:[#allocation8 + $0x88] sm:$0xff]
    %v2318 = vld [vmem:[#allocation8 + $0x90] sm:$0xff]
    %v2319 = vld [vmem:[#allocation8 + $0x98] sm:$0xff]
    %v2320 = vld [vmem:[#allocation8 + $0xa0] sm:$0xff]
    %v2321 = vld [vmem:[#allocation8 + $0xa8] sm:$0xff]
    %v2322 = vld [vmem:[#allocation8 + $0xb0] sm:$0xff]
    %v2323 = vld [vmem:[#allocation8 + $0xb8] sm:$0xff]
    %v2324 = vld [vmem:[#allocation8 + $0xc0] sm:$0xff]
    %v2325 = vld [vmem:[#allocation8 + $0xc8] sm:$0xff]
    %v2326 = vld [vmem:[#allocation8 + $0xd0] sm:$0xff]
    %v2327 = vld [vmem:[#allocation8 + $0xd8] sm:$0xff]
    %v2328 = vld [vmem:[#allocation8 + $0xe0] sm:$0xff]
    %v2329 = vld [vmem:[#allocation8 + $0xe8] sm:$0xff]
    %v2330 = vld [vmem:[#allocation8 + $0xf0] sm:$0xff]
    %v2331 = vld [vmem:[#allocation8 + $0xf8] sm:$0xff]
    %v2332 = vld [vmem:[#allocation8 + $0x100] sm:$0xff]
    %v2333 = vld [vmem:[#allocation8 + $0x108] sm:$0xff]
    %v2334 = vld [vmem:[#allocation8 + $0x110] sm:$0xff]
    %v2335 = vld [vmem:[#allocation8 + $0x118] sm:$0xff]
    %v2336 = vld [vmem:[#allocation8 + $0x120] sm:$0xff]
    %v2337 = vld [vmem:[#allocation8 + $0x128] sm:$0xff]
    %v2338 = vld [vmem:[#allocation8 + $0x130] sm:$0xff]
    %v2339 = vld [vmem:[#allocation8 + $0x138] sm:$0xff]
    %v2340 = vld [vmem:[#allocation8 + $0x140] sm:$0xff]
    %v2341 = vld [vmem:[#allocation8 + $0x148] sm:$0xff]
    %v2342 = vld [vmem:[#allocation8 + $0x150] sm:$0xff]
    %v2343 = vld [vmem:[#allocation8 + $0x158] sm:$0xff]
    %v2344 = vld [vmem:[#allocation8 + $0x160] sm:$0xff]
    %v2345 = vld [vmem:[#allocation8 + $0x168] sm:$0xff]
    %v2346 = vld [vmem:[#allocation8 + $0x170] sm:$0xff]
    %v2347 = vld [vmem:[#allocation8 + $0x178] sm:$0xff]
    %v2348 = vld [vmem:[#allocation8 + $0x180] sm:$0xff]
    %v2349 = vld [vmem:[#allocation8 + $0x188] sm:$0xff]
    %v2350 = vld [vmem:[#allocation8 + $0x190] sm:$0xff]
    %v2351 = vld [vmem:[#allocation8 + $0x198] sm:$0xff]
    %v2352 = vld [vmem:[#allocation8 + $0x1a0] sm:$0xff]
    %v2353 = vld [vmem:[#allocation8 + $0x1a8] sm:$0xff]
    %v2354 = vld [vmem:[#allocation8 + $0x1b0] sm:$0xff]
    %v2355 = vld [vmem:[#allocation8 + $0x1b8] sm:$0xff]
    %v2356 = vld [vmem:[#allocation8 + $0x1c0] sm:$0xff]
    %v2357 = vld [vmem:[#allocation8 + $0x1c8] sm:$0xff]
    %v2358 = vld [vmem:[#allocation8 + $0x1d0] sm:$0xff]
    %v2359 = vld [vmem:[#allocation8 + $0x1d8] sm:$0xff]
    %v2360 = vld [vmem:[#allocation8 + $0x1e0] sm:$0xff]
    %v2361 = vld [vmem:[#allocation8 + $0x1e8] sm:$0xff]
    %v2362 = vld [vmem:[#allocation8 + $0x1f0] sm:$0xff]
    %v2363 = vld [vmem:[#allocation8 + $0x1f8] sm:$0xff]
    %v2364 = vld [vmem:[#allocation8 + $0x200] sm:$0xff]
    %v2365 = vld [vmem:[#allocation8 + $0x208] sm:$0xff]
    %v2366 = vld [vmem:[#allocation8 + $0x210] sm:$0xff]
    %v2367 = vld [vmem:[#allocation8 + $0x218] sm:$0xff]
    %v2368 = vld [vmem:[#allocation8 + $0x220] sm:$0xff]
    %v2369 = vld [vmem:[#allocation8 + $0x228] sm:$0xff]
    %v2370 = vld [vmem:[#allocation8 + $0x230] sm:$0xff]
    %v2371 = vld [vmem:[#allocation8 + $0x238] sm:$0xff]
    %v2372 = vld [vmem:[#allocation8 + $0x240] sm:$0xff]
    %v2373 = vld [vmem:[#allocation8 + $0x248] sm:$0xff]
    %v2374 = vld [vmem:[#allocation8 + $0x250] sm:$0xff]
    %v2375 = vld [vmem:[#allocation8 + $0x258] sm:$0xff]
    %v2376 = vld [vmem:[#allocation8 + $0x260] sm:$0xff]
    %v2377 = vld [vmem:[#allocation8 + $0x268] sm:$0xff]
    %v2378 = vld [vmem:[#allocation8 + $0x270] sm:$0xff]
    %v2379 = vld [vmem:[#allocation8 + $0x278] sm:$0xff]
    %v2380 = vld [vmem:[#allocation8 + $0x280] sm:$0xff]
    %v2381 = vld [vmem:[#allocation8 + $0x288] sm:$0xff]
    %v2382 = vld [vmem:[#allocation8 + $0x290] sm:$0xff]
    %v2383 = vld [vmem:[#allocation8 + $0x298] sm:$0xff]
    %v2384 = vld [vmem:[#allocation8 + $0x2a0] sm:$0xff]
    %v2385 = vld [vmem:[#allocation8 + $0x2a8] sm:$0xff]
    %v2386 = vld [vmem:[#allocation8 + $0x2b0] sm:$0xff]
    %v2387 = vld [vmem:[#allocation8 + $0x2b8] sm:$0xff]
    %v2388 = vld [vmem:[#allocation8 + $0x2c0] sm:$0xff]
    %v2389 = vld [vmem:[#allocation8 + $0x2c8] sm:$0xff]
    %v2390 = vld [vmem:[#allocation8 + $0x2d0] sm:$0xff]
    %v2391 = vld [vmem:[#allocation8 + $0x2d8] sm:$0xff]
    %v2392 = vld [vmem:[#allocation8 + $0x2e0] sm:$0xff]
    %v2393 = vld [vmem:[#allocation8 + $0x2e8] sm:$0xff]
    %v2394 = vld [vmem:[#allocation8 + $0x2f0] sm:$0xff]
    %v2395 = vld [vmem:[#allocation8 + $0x2f8] sm:$0xff]
    %v2396 = vld [vmem:[#allocation8 + $0x300] sm:$0xff]
    %v2397 = vld [vmem:[#allocation8 + $0x308] sm:$0xff]
    %v2398 = vld [vmem:[#allocation8 + $0x310] sm:$0xff]
    %v2399 = vld [vmem:[#allocation8 + $0x318] sm:$0xff]
    %v2400 = vld [vmem:[#allocation8 + $0x320] sm:$0xff]
    %v2401 = vld [vmem:[#allocation8 + $0x328] sm:$0xff]
    %v2402 = vld [vmem:[#allocation8 + $0x330] sm:$0xff]
    %v2403 = vld [vmem:[#allocation8 + $0x338] sm:$0xff]
    %v2404 = vld [vmem:[#allocation8 + $0x340] sm:$0xff]
    %v2405 = vld [vmem:[#allocation8 + $0x348] sm:$0xff]
    %v2406 = vld [vmem:[#allocation8 + $0x350] sm:$0xff]
    %v2407 = vld [vmem:[#allocation8 + $0x358] sm:$0xff]
    %v2408 = vld [vmem:[#allocation8 + $0x360] sm:$0xff]
    %v2409 = vld [vmem:[#allocation8 + $0x368] sm:$0xff]
    %v2410 = vld [vmem:[#allocation8 + $0x370] sm:$0xff]
    %v2411 = vld [vmem:[#allocation8 + $0x378] sm:$0xff]
    %v2412 = vld [vmem:[#allocation8 + $0x380] sm:$0xff]
    %v2413 = vld [vmem:[#allocation8 + $0x388] sm:$0xff]
    %v2414 = vld [vmem:[#allocation8 + $0x390] sm:$0xff]
    %v2415 = vld [vmem:[#allocation8 + $0x398] sm:$0xff]
    %v2416 = vld [vmem:[#allocation8 + $0x3a0] sm:$0xff]
    %v2417 = vld [vmem:[#allocation8 + $0x3a8] sm:$0xff]
    %v2418 = vld [vmem:[#allocation8 + $0x3b0] sm:$0xff]
    %v2419 = vld [vmem:[#allocation8 + $0x3b8] sm:$0xff]
    %v2420 = vld [vmem:[#allocation8 + $0x3c0] sm:$0xff]
    %v2421 = vld [vmem:[#allocation8 + $0x3c8] sm:$0xff]
    %v2422 = vld [vmem:[#allocation8 + $0x3d0] sm:$0xff]
    %v2423 = vld [vmem:[#allocation8 + $0x3d8] sm:$0xff]
    %v2424 = vld [vmem:[#allocation8 + $0x3e0] sm:$0xff]
    %v2425 = vld [vmem:[#allocation8 + $0x3e8] sm:$0xff]
    %v2426 = vld [vmem:[#allocation8 + $0x3f0] sm:$0xff]
    %v2427 = vld [vmem:[#allocation8 + $0x3f8] sm:$0xff]
    %v2428 = vld [vmem:[#allocation8 + $0x400] sm:$0xff]
    %v2429 = vld [vmem:[#allocation8 + $0x408] sm:$0xff]
    %v2430 = vld [vmem:[#allocation8 + $0x410] sm:$0xff]
    %v2431 = vld [vmem:[#allocation8 + $0x418] sm:$0xff]
    %v2432 = vld [vmem:[#allocation8 + $0x420] sm:$0xff]
    %v2433 = vld [vmem:[#allocation8 + $0x428] sm:$0xff]
    %v2434 = vld [vmem:[#allocation8 + $0x430] sm:$0xff]
    %v2435 = vld [vmem:[#allocation8 + $0x438] sm:$0xff]
    %v2436 = vld [vmem:[#allocation8 + $0x440] sm:$0xff]
    %v2437 = vld [vmem:[#allocation8 + $0x448] sm:$0xff]
    %v2438 = vld [vmem:[#allocation8 + $0x450] sm:$0xff]
    %v2439 = vld [vmem:[#allocation8 + $0x458] sm:$0xff]
    %v2440 = vld [vmem:[#allocation8 + $0x460] sm:$0xff]
    %v2441 = vld [vmem:[#allocation8 + $0x468] sm:$0xff]
    %v2442 = vld [vmem:[#allocation8 + $0x470] sm:$0xff]
    %v2443 = vld [vmem:[#allocation8 + $0x478] sm:$0xff]
    %v2444 = vld [vmem:[#allocation8 + $0x480] sm:$0xff]
    %v2445 = vld [vmem:[#allocation8 + $0x488] sm:$0xff]
    %v2446 = vld [vmem:[#allocation8 + $0x490] sm:$0xff]
    %v2447 = vld [vmem:[#allocation8 + $0x498] sm:$0xff]
    %v2448 = vld [vmem:[#allocation8 + $0x4a0] sm:$0xff]
    %v2449 = vld [vmem:[#allocation8 + $0x4a8] sm:$0xff]
    %v2450 = vld [vmem:[#allocation8 + $0x4b0] sm:$0xff]
    %v2451 = vld [vmem:[#allocation8 + $0x4b8] sm:$0xff]
    %v2452 = vld [vmem:[#allocation8 + $0x4c0] sm:$0xff]
    %v2453 = vld [vmem:[#allocation8 + $0x4c8] sm:$0xff]
    %v2454 = vld [vmem:[#allocation8 + $0x4d0] sm:$0xff]
    %v2455 = vld [vmem:[#allocation8 + $0x4d8] sm:$0xff]
    %v2456 = vld [vmem:[#allocation8 + $0x4e0] sm:$0xff]
    %v2457 = vld [vmem:[#allocation8 + $0x4e8] sm:$0xff]
    %v2458 = vld [vmem:[#allocation8 + $0x4f0] sm:$0xff]
    %v2459 = vld [vmem:[#allocation8 + $0x4f8] sm:$0xff]
    %v2460 = vld [vmem:[#allocation8 + $0x500] sm:$0xff]
    %v2461 = vld [vmem:[#allocation8 + $0x508] sm:$0xff]
    %v2462 = vld [vmem:[#allocation8 + $0x510] sm:$0xff]
    %v2463 = vld [vmem:[#allocation8 + $0x518] sm:$0xff]
    %v2464 = vld [vmem:[#allocation8 + $0x520] sm:$0xff]
    %v2465 = vld [vmem:[#allocation8 + $0x528] sm:$0xff]
    %v2466 = vld [vmem:[#allocation8 + $0x530] sm:$0xff]
    %v2467 = vld [vmem:[#allocation8 + $0x538] sm:$0xff]
    %v2468 = vld [vmem:[#allocation8 + $0x540] sm:$0xff]
    %v2469 = vld [vmem:[#allocation8 + $0x548] sm:$0xff]
    %v2470 = vld [vmem:[#allocation8 + $0x550] sm:$0xff]
    %v2471 = vld [vmem:[#allocation8 + $0x558] sm:$0xff]
    %v2472 = vld [vmem:[#allocation8 + $0x560] sm:$0xff]
    %v2473 = vld [vmem:[#allocation8 + $0x568] sm:$0xff]
    %v2474 = vld [vmem:[#allocation8 + $0x570] sm:$0xff]
    %v2475 = vld [vmem:[#allocation8 + $0x578] sm:$0xff]
    %v2476 = vld [vmem:[#allocation8 + $0x580] sm:$0xff]
    %v2477 = vld [vmem:[#allocation8 + $0x588] sm:$0xff]
    %v2478 = vld [vmem:[#allocation8 + $0x590] sm:$0xff]
    %v2479 = vld [vmem:[#allocation8 + $0x598] sm:$0xff]
    %v2480 = vld [vmem:[#allocation8 + $0x5a0] sm:$0xff]
    %v2481 = vld [vmem:[#allocation8 + $0x5a8] sm:$0xff]
    %v2482 = vld [vmem:[#allocation8 + $0x5b0] sm:$0xff]
    %v2483 = vld [vmem:[#allocation8 + $0x5b8] sm:$0xff]
    %v2484 = vld [vmem:[#allocation8 + $0x5c0] sm:$0xff]
    %v2485 = vld [vmem:[#allocation8 + $0x5c8] sm:$0xff]
    %v2486 = vld [vmem:[#allocation8 + $0x5d0] sm:$0xff]
    %v2487 = vld [vmem:[#allocation8 + $0x5d8] sm:$0xff]
    %v2488 = vld [vmem:[#allocation8 + $0x5e0] sm:$0xff]
    %v2489 = vld [vmem:[#allocation8 + $0x5e8] sm:$0xff]
    %v2490 = vld [vmem:[#allocation8 + $0x5f0] sm:$0xff]
    %v2491 = vld [vmem:[#allocation8 + $0x5f8] sm:$0xff]
    %v2492 = vld [vmem:[#allocation10] sm:$0xf]
    %v2494 = vlaneseq
    %v2495 = vshrl.u32 %v2494, 7
    %v2496 = vsub.s32 0, %v2495
    %v2497 = vrot.slane %v2492, %v2496
    %v2498 = vlaneseq
    %v2499 = vshrl.u32 %v2498, 7
    %v2500 = vsub.s32 1, %v2499
    %v2501 = vrot.slane %v2492, %v2500
    %v2502 = vlaneseq
    %v2503 = vshrl.u32 %v2502, 7
    %v2504 = vsub.s32 2, %v2503
    %v2505 = vrot.slane %v2492, %v2504
    %v2506 = vlaneseq
    %v2507 = vshrl.u32 %v2506, 7
    %v2508 = vsub.s32 3, %v2507
    %v2509 = vrot.slane %v2492, %v2508
    %v2706 = vunpack.c.l.b16 %v2300
    %v2707 = vunpack.c.h.b16 %v2300
    %v2708 = vunpack.c.l.b16 %v2301
    %v2709 = vunpack.c.h.b16 %v2301
    %v2710 = vunpack.c.l.b16 %v2302
    %v2711 = vunpack.c.h.b16 %v2302
    %v2712 = vunpack.c.l.b16 %v2303
    %v2713 = vunpack.c.h.b16 %v2303
    %v2714 = vunpack.c.l.b16 %v2304
    %v2715 = vunpack.c.h.b16 %v2304
    %v2716 = vunpack.c.l.b16 %v2305
    %v2717 = vunpack.c.h.b16 %v2305
    %v2718 = vunpack.c.l.b16 %v2306
    %v2719 = vunpack.c.h.b16 %v2306
    %v2720 = vunpack.c.l.b16 %v2307
    %v2721 = vunpack.c.h.b16 %v2307
    %v2722 = vunpack.c.l.b16 %v2308
    %v2723 = vunpack.c.h.b16 %v2308
    %v2724 = vunpack.c.l.b16 %v2309
    %v2725 = vunpack.c.h.b16 %v2309
    %v2726 = vunpack.c.l.b16 %v2310
    %v2727 = vunpack.c.h.b16 %v2310
    %v2728 = vunpack.c.l.b16 %v2311
    %v2729 = vunpack.c.h.b16 %v2311
    %v2730 = vunpack.c.l.b16 %v2312
    %v2731 = vunpack.c.h.b16 %v2312
    %v2732 = vunpack.c.l.b16 %v2313
    %v2733 = vunpack.c.h.b16 %v2313
    %v2734 = vunpack.c.l.b16 %v2314
    %v2735 = vunpack.c.h.b16 %v2314
    %v2736 = vunpack.c.l.b16 %v2315
    %v2737 = vunpack.c.h.b16 %v2315
    %v2738 = vunpack.c.l.b16 %v2316
    %v2739 = vunpack.c.h.b16 %v2316
    %v2740 = vunpack.c.l.b16 %v2317
    %v2741 = vunpack.c.h.b16 %v2317
    %v2742 = vunpack.c.l.b16 %v2318
    %v2743 = vunpack.c.h.b16 %v2318
    %v2744 = vunpack.c.l.b16 %v2319
    %v2745 = vunpack.c.h.b16 %v2319
    %v2746 = vunpack.c.l.b16 %v2320
    %v2747 = vunpack.c.h.b16 %v2320
    %v2748 = vunpack.c.l.b16 %v2321
    %v2749 = vunpack.c.h.b16 %v2321
    %v2750 = vunpack.c.l.b16 %v2322
    %v2751 = vunpack.c.h.b16 %v2322
    %v2752 = vunpack.c.l.b16 %v2323
    %v2753 = vunpack.c.h.b16 %v2323
    %v2754 = vunpack.c.l.b16 %v2324
    %v2755 = vunpack.c.h.b16 %v2324
    %v2756 = vunpack.c.l.b16 %v2325
    %v2757 = vunpack.c.h.b16 %v2325
    %v2758 = vunpack.c.l.b16 %v2326
    %v2759 = vunpack.c.h.b16 %v2326
    %v2760 = vunpack.c.l.b16 %v2327
    %v2761 = vunpack.c.h.b16 %v2327
    %v2762 = vunpack.c.l.b16 %v2328
    %v2763 = vunpack.c.h.b16 %v2328
    %v2764 = vunpack.c.l.b16 %v2329
    %v2765 = vunpack.c.h.b16 %v2329
    %v2766 = vunpack.c.l.b16 %v2330
    %v2767 = vunpack.c.h.b16 %v2330
    %v2768 = vunpack.c.l.b16 %v2331
    %v2769 = vunpack.c.h.b16 %v2331
    %v2770 = vunpack.c.l.b16 %v2332
    %v2771 = vunpack.c.h.b16 %v2332
    %v2772 = vunpack.c.l.b16 %v2333
    %v2773 = vunpack.c.h.b16 %v2333
    %v2774 = vunpack.c.l.b16 %v2334
    %v2775 = vunpack.c.h.b16 %v2334
    %v2776 = vunpack.c.l.b16 %v2335
    %v2777 = vunpack.c.h.b16 %v2335
    %v2778 = vunpack.c.l.b16 %v2336
    %v2779 = vunpack.c.h.b16 %v2336
    %v2780 = vunpack.c.l.b16 %v2337
    %v2781 = vunpack.c.h.b16 %v2337
    %v2782 = vunpack.c.l.b16 %v2338
    %v2783 = vunpack.c.h.b16 %v2338
    %v2784 = vunpack.c.l.b16 %v2339
    %v2785 = vunpack.c.h.b16 %v2339
    %v2786 = vunpack.c.l.b16 %v2340
    %v2787 = vunpack.c.h.b16 %v2340
    %v2788 = vunpack.c.l.b16 %v2341
    %v2789 = vunpack.c.h.b16 %v2341
    %v2790 = vunpack.c.l.b16 %v2342
    %v2791 = vunpack.c.h.b16 %v2342
    %v2792 = vunpack.c.l.b16 %v2343
    %v2793 = vunpack.c.h.b16 %v2343
    %v2794 = vunpack.c.l.b16 %v2344
    %v2795 = vunpack.c.h.b16 %v2344
    %v2796 = vunpack.c.l.b16 %v2345
    %v2797 = vunpack.c.h.b16 %v2345
    %v2798 = vunpack.c.l.b16 %v2346
    %v2799 = vunpack.c.h.b16 %v2346
    %v2800 = vunpack.c.l.b16 %v2347
    %v2801 = vunpack.c.h.b16 %v2347
    %v2802 = vunpack.c.l.b16 %v2348
    %v2803 = vunpack.c.h.b16 %v2348
    %v2804 = vunpack.c.l.b16 %v2349
    %v2805 = vunpack.c.h.b16 %v2349
    %v2806 = vunpack.c.l.b16 %v2350
    %v2807 = vunpack.c.h.b16 %v2350
    %v2808 = vunpack.c.l.b16 %v2351
    %v2809 = vunpack.c.h.b16 %v2351
    %v2810 = vunpack.c.l.b16 %v2352
    %v2811 = vunpack.c.h.b16 %v2352
    %v2812 = vunpack.c.l.b16 %v2353
    %v2813 = vunpack.c.h.b16 %v2353
    %v2814 = vunpack.c.l.b16 %v2354
    %v2815 = vunpack.c.h.b16 %v2354
    %v2816 = vunpack.c.l.b16 %v2355
    %v2817 = vunpack.c.h.b16 %v2355
    %v2818 = vunpack.c.l.b16 %v2356
    %v2819 = vunpack.c.h.b16 %v2356
    %v2820 = vunpack.c.l.b16 %v2357
    %v2821 = vunpack.c.h.b16 %v2357
    %v2822 = vunpack.c.l.b16 %v2358
    %v2823 = vunpack.c.h.b16 %v2358
    %v2824 = vunpack.c.l.b16 %v2359
    %v2825 = vunpack.c.h.b16 %v2359
    %v2826 = vunpack.c.l.b16 %v2360
    %v2827 = vunpack.c.h.b16 %v2360
    %v2828 = vunpack.c.l.b16 %v2361
    %v2829 = vunpack.c.h.b16 %v2361
    %v2830 = vunpack.c.l.b16 %v2362
    %v2831 = vunpack.c.h.b16 %v2362
    %v2832 = vunpack.c.l.b16 %v2363
    %v2833 = vunpack.c.h.b16 %v2363
    %v2834 = vunpack.c.l.b16 %v2364
    %v2835 = vunpack.c.h.b16 %v2364
    %v2836 = vunpack.c.l.b16 %v2365
    %v2837 = vunpack.c.h.b16 %v2365
    %v2838 = vunpack.c.l.b16 %v2366
    %v2839 = vunpack.c.h.b16 %v2366
    %v2840 = vunpack.c.l.b16 %v2367
    %v2841 = vunpack.c.h.b16 %v2367
    %v2842 = vunpack.c.l.b16 %v2368
    %v2843 = vunpack.c.h.b16 %v2368
    %v2844 = vunpack.c.l.b16 %v2369
    %v2845 = vunpack.c.h.b16 %v2369
    %v2846 = vunpack.c.l.b16 %v2370
    %v2847 = vunpack.c.h.b16 %v2370
    %v2848 = vunpack.c.l.b16 %v2371
    %v2849 = vunpack.c.h.b16 %v2371
    %v2850 = vunpack.c.l.b16 %v2372
    %v2851 = vunpack.c.h.b16 %v2372
    %v2852 = vunpack.c.l.b16 %v2373
    %v2853 = vunpack.c.h.b16 %v2373
    %v2854 = vunpack.c.l.b16 %v2374
    %v2855 = vunpack.c.h.b16 %v2374
    %v2856 = vunpack.c.l.b16 %v2375
    %v2857 = vunpack.c.h.b16 %v2375
    %v2858 = vunpack.c.l.b16 %v2376
    %v2859 = vunpack.c.h.b16 %v2376
    %v2860 = vunpack.c.l.b16 %v2377
    %v2861 = vunpack.c.h.b16 %v2377
    %v2862 = vunpack.c.l.b16 %v2378
    %v2863 = vunpack.c.h.b16 %v2378
    %v2864 = vunpack.c.l.b16 %v2379
    %v2865 = vunpack.c.h.b16 %v2379
    %v2866 = vunpack.c.l.b16 %v2380
    %v2867 = vunpack.c.h.b16 %v2380
    %v2868 = vunpack.c.l.b16 %v2381
    %v2869 = vunpack.c.h.b16 %v2381
    %v2870 = vunpack.c.l.b16 %v2382
    %v2871 = vunpack.c.h.b16 %v2382
    %v2872 = vunpack.c.l.b16 %v2383
    %v2873 = vunpack.c.h.b16 %v2383
    %v2874 = vunpack.c.l.b16 %v2384
    %v2875 = vunpack.c.h.b16 %v2384
    %v2876 = vunpack.c.l.b16 %v2385
    %v2877 = vunpack.c.h.b16 %v2385
    %v2878 = vunpack.c.l.b16 %v2386
    %v2879 = vunpack.c.h.b16 %v2386
    %v2880 = vunpack.c.l.b16 %v2387
    %v2881 = vunpack.c.h.b16 %v2387
    %v2882 = vunpack.c.l.b16 %v2388
    %v2883 = vunpack.c.h.b16 %v2388
    %v2884 = vunpack.c.l.b16 %v2389
    %v2885 = vunpack.c.h.b16 %v2389
    %v2886 = vunpack.c.l.b16 %v2390
    %v2887 = vunpack.c.h.b16 %v2390
    %v2888 = vunpack.c.l.b16 %v2391
    %v2889 = vunpack.c.h.b16 %v2391
    %v2890 = vunpack.c.l.b16 %v2392
    %v2891 = vunpack.c.h.b16 %v2392
    %v2892 = vunpack.c.l.b16 %v2393
    %v2893 = vunpack.c.h.b16 %v2393
    %v2894 = vunpack.c.l.b16 %v2394
    %v2895 = vunpack.c.h.b16 %v2394
    %v2896 = vunpack.c.l.b16 %v2395
    %v2897 = vunpack.c.h.b16 %v2395
    %v2898 = vunpack.c.l.b16 %v2396
    %v2899 = vunpack.c.h.b16 %v2396
    %v2900 = vunpack.c.l.b16 %v2397
    %v2901 = vunpack.c.h.b16 %v2397
    %v2902 = vunpack.c.l.b16 %v2398
    %v2903 = vunpack.c.h.b16 %v2398
    %v2904 = vunpack.c.l.b16 %v2399
    %v2905 = vunpack.c.h.b16 %v2399
    %v2906 = vunpack.c.l.b16 %v2400
    %v2907 = vunpack.c.h.b16 %v2400
    %v2908 = vunpack.c.l.b16 %v2401
    %v2909 = vunpack.c.h.b16 %v2401
    %v2910 = vunpack.c.l.b16 %v2402
    %v2911 = vunpack.c.h.b16 %v2402
    %v2912 = vunpack.c.l.b16 %v2403
    %v2913 = vunpack.c.h.b16 %v2403
    %v2914 = vunpack.c.l.b16 %v2404
    %v2915 = vunpack.c.h.b16 %v2404
    %v2916 = vunpack.c.l.b16 %v2405
    %v2917 = vunpack.c.h.b16 %v2405
    %v2918 = vunpack.c.l.b16 %v2406
    %v2919 = vunpack.c.h.b16 %v2406
    %v2920 = vunpack.c.l.b16 %v2407
    %v2921 = vunpack.c.h.b16 %v2407
    %v2922 = vunpack.c.l.b16 %v2408
    %v2923 = vunpack.c.h.b16 %v2408
    %v2924 = vunpack.c.l.b16 %v2409
    %v2925 = vunpack.c.h.b16 %v2409
    %v2926 = vunpack.c.l.b16 %v2410
    %v2927 = vunpack.c.h.b16 %v2410
    %v2928 = vunpack.c.l.b16 %v2411
    %v2929 = vunpack.c.h.b16 %v2411
    %v2930 = vunpack.c.l.b16 %v2412
    %v2931 = vunpack.c.h.b16 %v2412
    %v2932 = vunpack.c.l.b16 %v2413
    %v2933 = vunpack.c.h.b16 %v2413
    %v2934 = vunpack.c.l.b16 %v2414
    %v2935 = vunpack.c.h.b16 %v2414
    %v2936 = vunpack.c.l.b16 %v2415
    %v2937 = vunpack.c.h.b16 %v2415
    %v2938 = vunpack.c.l.b16 %v2416
    %v2939 = vunpack.c.h.b16 %v2416
    %v2940 = vunpack.c.l.b16 %v2417
    %v2941 = vunpack.c.h.b16 %v2417
    %v2942 = vunpack.c.l.b16 %v2418
    %v2943 = vunpack.c.h.b16 %v2418
    %v2944 = vunpack.c.l.b16 %v2419
    %v2945 = vunpack.c.h.b16 %v2419
    %v2946 = vunpack.c.l.b16 %v2420
    %v2947 = vunpack.c.h.b16 %v2420
    %v2948 = vunpack.c.l.b16 %v2421
    %v2949 = vunpack.c.h.b16 %v2421
    %v2950 = vunpack.c.l.b16 %v2422
    %v2951 = vunpack.c.h.b16 %v2422
    %v2952 = vunpack.c.l.b16 %v2423
    %v2953 = vunpack.c.h.b16 %v2423
    %v2954 = vunpack.c.l.b16 %v2424
    %v2955 = vunpack.c.h.b16 %v2424
    %v2956 = vunpack.c.l.b16 %v2425
    %v2957 = vunpack.c.h.b16 %v2425
    %v2958 = vunpack.c.l.b16 %v2426
    %v2959 = vunpack.c.h.b16 %v2426
    %v2960 = vunpack.c.l.b16 %v2427
    %v2961 = vunpack.c.h.b16 %v2427
    %v2962 = vunpack.c.l.b16 %v2428
    %v2963 = vunpack.c.h.b16 %v2428
    %v2964 = vunpack.c.l.b16 %v2429
    %v2965 = vunpack.c.h.b16 %v2429
    %v2966 = vunpack.c.l.b16 %v2430
    %v2967 = vunpack.c.h.b16 %v2430
    %v2968 = vunpack.c.l.b16 %v2431
    %v2969 = vunpack.c.h.b16 %v2431
    %v2970 = vunpack.c.l.b16 %v2432
    %v2971 = vunpack.c.h.b16 %v2432
    %v2972 = vunpack.c.l.b16 %v2433
    %v2973 = vunpack.c.h.b16 %v2433
    %v2974 = vunpack.c.l.b16 %v2434
    %v2975 = vunpack.c.h.b16 %v2434
    %v2976 = vunpack.c.l.b16 %v2435
    %v2977 = vunpack.c.h.b16 %v2435
    %v2978 = vunpack.c.l.b16 %v2436
    %v2979 = vunpack.c.h.b16 %v2436
    %v2980 = vunpack.c.l.b16 %v2437
    %v2981 = vunpack.c.h.b16 %v2437
    %v2982 = vunpack.c.l.b16 %v2438
    %v2983 = vunpack.c.h.b16 %v2438
    %v2984 = vunpack.c.l.b16 %v2439
    %v2985 = vunpack.c.h.b16 %v2439
    %v2986 = vunpack.c.l.b16 %v2440
    %v2987 = vunpack.c.h.b16 %v2440
    %v2988 = vunpack.c.l.b16 %v2441
    %v2989 = vunpack.c.h.b16 %v2441
    %v2990 = vunpack.c.l.b16 %v2442
    %v2991 = vunpack.c.h.b16 %v2442
    %v2992 = vunpack.c.l.b16 %v2443
    %v2993 = vunpack.c.h.b16 %v2443
    %v2994 = vunpack.c.l.b16 %v2444
    %v2995 = vunpack.c.h.b16 %v2444
    %v2996 = vunpack.c.l.b16 %v2445
    %v2997 = vunpack.c.h.b16 %v2445
    %v2998 = vunpack.c.l.b16 %v2446
    %v2999 = vunpack.c.h.b16 %v2446
    %v3000 = vunpack.c.l.b16 %v2447
    %v3001 = vunpack.c.h.b16 %v2447
    %v3002 = vunpack.c.l.b16 %v2448
    %v3003 = vunpack.c.h.b16 %v2448
    %v3004 = vunpack.c.l.b16 %v2449
    %v3005 = vunpack.c.h.b16 %v2449
    %v3006 = vunpack.c.l.b16 %v2450
    %v3007 = vunpack.c.h.b16 %v2450
    %v3008 = vunpack.c.l.b16 %v2451
    %v3009 = vunpack.c.h.b16 %v2451
    %v3010 = vunpack.c.l.b16 %v2452
    %v3011 = vunpack.c.h.b16 %v2452
    %v3012 = vunpack.c.l.b16 %v2453
    %v3013 = vunpack.c.h.b16 %v2453
    %v3014 = vunpack.c.l.b16 %v2454
    %v3015 = vunpack.c.h.b16 %v2454
    %v3016 = vunpack.c.l.b16 %v2455
    %v3017 = vunpack.c.h.b16 %v2455
    %v3018 = vunpack.c.l.b16 %v2456
    %v3019 = vunpack.c.h.b16 %v2456
    %v3020 = vunpack.c.l.b16 %v2457
    %v3021 = vunpack.c.h.b16 %v2457
    %v3022 = vunpack.c.l.b16 %v2458
    %v3023 = vunpack.c.h.b16 %v2458
    %v3024 = vunpack.c.l.b16 %v2459
    %v3025 = vunpack.c.h.b16 %v2459
    %v3026 = vunpack.c.l.b16 %v2460
    %v3027 = vunpack.c.h.b16 %v2460
    %v3028 = vunpack.c.l.b16 %v2461
    %v3029 = vunpack.c.h.b16 %v2461
    %v3030 = vunpack.c.l.b16 %v2462
    %v3031 = vunpack.c.h.b16 %v2462
    %v3032 = vunpack.c.l.b16 %v2463
    %v3033 = vunpack.c.h.b16 %v2463
    %v3034 = vunpack.c.l.b16 %v2464
    %v3035 = vunpack.c.h.b16 %v2464
    %v3036 = vunpack.c.l.b16 %v2465
    %v3037 = vunpack.c.h.b16 %v2465
    %v3038 = vunpack.c.l.b16 %v2466
    %v3039 = vunpack.c.h.b16 %v2466
    %v3040 = vunpack.c.l.b16 %v2467
    %v3041 = vunpack.c.h.b16 %v2467
    %v3042 = vunpack.c.l.b16 %v2468
    %v3043 = vunpack.c.h.b16 %v2468
    %v3044 = vunpack.c.l.b16 %v2469
    %v3045 = vunpack.c.h.b16 %v2469
    %v3046 = vunpack.c.l.b16 %v2470
    %v3047 = vunpack.c.h.b16 %v2470
    %v3048 = vunpack.c.l.b16 %v2471
    %v3049 = vunpack.c.h.b16 %v2471
    %v3050 = vunpack.c.l.b16 %v2472
    %v3051 = vunpack.c.h.b16 %v2472
    %v3052 = vunpack.c.l.b16 %v2473
    %v3053 = vunpack.c.h.b16 %v2473
    %v3054 = vunpack.c.l.b16 %v2474
    %v3055 = vunpack.c.h.b16 %v2474
    %v3056 = vunpack.c.l.b16 %v2475
    %v3057 = vunpack.c.h.b16 %v2475
    %v3058 = vunpack.c.l.b16 %v2476
    %v3059 = vunpack.c.h.b16 %v2476
    %v3060 = vunpack.c.l.b16 %v2477
    %v3061 = vunpack.c.h.b16 %v2477
    %v3062 = vunpack.c.l.b16 %v2478
    %v3063 = vunpack.c.h.b16 %v2478
    %v3064 = vunpack.c.l.b16 %v2479
    %v3065 = vunpack.c.h.b16 %v2479
    %v3066 = vunpack.c.l.b16 %v2480
    %v3067 = vunpack.c.h.b16 %v2480
    %v3068 = vunpack.c.l.b16 %v2481
    %v3069 = vunpack.c.h.b16 %v2481
    %v3070 = vunpack.c.l.b16 %v2482
    %v3071 = vunpack.c.h.b16 %v2482
    %v3072 = vunpack.c.l.b16 %v2483
    %v3073 = vunpack.c.h.b16 %v2483
    %v3074 = vunpack.c.l.b16 %v2484
    %v3075 = vunpack.c.h.b16 %v2484
    %v3076 = vunpack.c.l.b16 %v2485
    %v3077 = vunpack.c.h.b16 %v2485
    %v3078 = vunpack.c.l.b16 %v2486
    %v3079 = vunpack.c.h.b16 %v2486
    %v3080 = vunpack.c.l.b16 %v2487
    %v3081 = vunpack.c.h.b16 %v2487
    %v3082 = vunpack.c.l.b16 %v2488
    %v3083 = vunpack.c.h.b16 %v2488
    %v3084 = vunpack.c.l.b16 %v2489
    %v3085 = vunpack.c.h.b16 %v2489
    %v3086 = vunpack.c.l.b16 %v2490
    %v3087 = vunpack.c.h.b16 %v2490
    %v3088 = vunpack.c.l.b16 %v2491
    %v3089 = vunpack.c.h.b16 %v2491
    %v3090 = vpack.c.b16 %v2710, %v2706
    %v3091 = vpack.c.b16 %v2711, %v2707
    %v3092 = vpack.c.b16 %v2712, %v2708
    %v3093 = vpack.c.b16 %v2713, %v2709
    %v3094 = vpack.c.b16 %v2718, %v2714
    %v3095 = vpack.c.b16 %v2719, %v2715
    %v3096 = vpack.c.b16 %v2720, %v2716
    %v3097 = vpack.c.b16 %v2721, %v2717
    %v3098 = vpack.c.b16 %v2726, %v2722
    %v3099 = vpack.c.b16 %v2727, %v2723
    %v3100 = vpack.c.b16 %v2728, %v2724
    %v3101 = vpack.c.b16 %v2729, %v2725
    %v3102 = vpack.c.b16 %v2734, %v2730
    %v3103 = vpack.c.b16 %v2735, %v2731
    %v3104 = vpack.c.b16 %v2736, %v2732
    %v3105 = vpack.c.b16 %v2737, %v2733
    %v3106 = vpack.c.b16 %v2742, %v2738
    %v3107 = vpack.c.b16 %v2743, %v2739
    %v3108 = vpack.c.b16 %v2744, %v2740
    %v3109 = vpack.c.b16 %v2745, %v2741
    %v3110 = vpack.c.b16 %v2750, %v2746
    %v3111 = vpack.c.b16 %v2751, %v2747
    %v3112 = vpack.c.b16 %v2752, %v2748
    %v3113 = vpack.c.b16 %v2753, %v2749
    %v3114 = vpack.c.b16 %v2758, %v2754
    %v3115 = vpack.c.b16 %v2759, %v2755
    %v3116 = vpack.c.b16 %v2760, %v2756
    %v3117 = vpack.c.b16 %v2761, %v2757
    %v3118 = vpack.c.b16 %v2766, %v2762
    %v3119 = vpack.c.b16 %v2767, %v2763
    %v3120 = vpack.c.b16 %v2768, %v2764
    %v3121 = vpack.c.b16 %v2769, %v2765
    %v3122 = vpack.c.b16 %v2774, %v2770
    %v3123 = vpack.c.b16 %v2775, %v2771
    %v3124 = vpack.c.b16 %v2776, %v2772
    %v3125 = vpack.c.b16 %v2777, %v2773
    %v3126 = vpack.c.b16 %v2782, %v2778
    %v3127 = vpack.c.b16 %v2783, %v2779
    %v3128 = vpack.c.b16 %v2784, %v2780
    %v3129 = vpack.c.b16 %v2785, %v2781
    %v3130 = vpack.c.b16 %v2790, %v2786
    %v3131 = vpack.c.b16 %v2791, %v2787
    %v3132 = vpack.c.b16 %v2792, %v2788
    %v3133 = vpack.c.b16 %v2793, %v2789
    %v3134 = vpack.c.b16 %v2798, %v2794
    %v3135 = vpack.c.b16 %v2799, %v2795
    %v3136 = vpack.c.b16 %v2800, %v2796
    %v3137 = vpack.c.b16 %v2801, %v2797
    %v3138 = vpack.c.b16 %v2806, %v2802
    %v3139 = vpack.c.b16 %v2807, %v2803
    %v3140 = vpack.c.b16 %v2808, %v2804
    %v3141 = vpack.c.b16 %v2809, %v2805
    %v3142 = vpack.c.b16 %v2814, %v2810
    %v3143 = vpack.c.b16 %v2815, %v2811
    %v3144 = vpack.c.b16 %v2816, %v2812
    %v3145 = vpack.c.b16 %v2817, %v2813
    %v3146 = vpack.c.b16 %v2822, %v2818
    %v3147 = vpack.c.b16 %v2823, %v2819
    %v3148 = vpack.c.b16 %v2824, %v2820
    %v3149 = vpack.c.b16 %v2825, %v2821
    %v3150 = vpack.c.b16 %v2830, %v2826
    %v3151 = vpack.c.b16 %v2831, %v2827
    %v3152 = vpack.c.b16 %v2832, %v2828
    %v3153 = vpack.c.b16 %v2833, %v2829
    %v3154 = vpack.c.b16 %v2838, %v2834
    %v3155 = vpack.c.b16 %v2839, %v2835
    %v3156 = vpack.c.b16 %v2840, %v2836
    %v3157 = vpack.c.b16 %v2841, %v2837
    %v3158 = vpack.c.b16 %v2846, %v2842
    %v3159 = vpack.c.b16 %v2847, %v2843
    %v3160 = vpack.c.b16 %v2848, %v2844
    %v3161 = vpack.c.b16 %v2849, %v2845
    %v3162 = vpack.c.b16 %v2854, %v2850
    %v3163 = vpack.c.b16 %v2855, %v2851
    %v3164 = vpack.c.b16 %v2856, %v2852
    %v3165 = vpack.c.b16 %v2857, %v2853
    %v3166 = vpack.c.b16 %v2862, %v2858
    %v3167 = vpack.c.b16 %v2863, %v2859
    %v3168 = vpack.c.b16 %v2864, %v2860
    %v3169 = vpack.c.b16 %v2865, %v2861
    %v3170 = vpack.c.b16 %v2870, %v2866
    %v3171 = vpack.c.b16 %v2871, %v2867
    %v3172 = vpack.c.b16 %v2872, %v2868
    %v3173 = vpack.c.b16 %v2873, %v2869
    %v3174 = vpack.c.b16 %v2878, %v2874
    %v3175 = vpack.c.b16 %v2879, %v2875
    %v3176 = vpack.c.b16 %v2880, %v2876
    %v3177 = vpack.c.b16 %v2881, %v2877
    %v3178 = vpack.c.b16 %v2886, %v2882
    %v3179 = vpack.c.b16 %v2887, %v2883
    %v3180 = vpack.c.b16 %v2888, %v2884
    %v3181 = vpack.c.b16 %v2889, %v2885
    %v3182 = vpack.c.b16 %v2894, %v2890
    %v3183 = vpack.c.b16 %v2895, %v2891
    %v3184 = vpack.c.b16 %v2896, %v2892
    %v3185 = vpack.c.b16 %v2897, %v2893
    %v3186 = vpack.c.b16 %v2902, %v2898
    %v3187 = vpack.c.b16 %v2903, %v2899
    %v3188 = vpack.c.b16 %v2904, %v2900
    %v3189 = vpack.c.b16 %v2905, %v2901
    %v3190 = vpack.c.b16 %v2910, %v2906
    %v3191 = vpack.c.b16 %v2911, %v2907
    %v3192 = vpack.c.b16 %v2912, %v2908
    %v3193 = vpack.c.b16 %v2913, %v2909
    %v3194 = vpack.c.b16 %v2918, %v2914
    %v3195 = vpack.c.b16 %v2919, %v2915
    %v3196 = vpack.c.b16 %v2920, %v2916
    %v3197 = vpack.c.b16 %v2921, %v2917
    %v3198 = vpack.c.b16 %v2926, %v2922
    %v3199 = vpack.c.b16 %v2927, %v2923
    %v3200 = vpack.c.b16 %v2928, %v2924
    %v3201 = vpack.c.b16 %v2929, %v2925
    %v3202 = vpack.c.b16 %v2934, %v2930
    %v3203 = vpack.c.b16 %v2935, %v2931
    %v3204 = vpack.c.b16 %v2936, %v2932
    %v3205 = vpack.c.b16 %v2937, %v2933
    %v3206 = vpack.c.b16 %v2942, %v2938
    %v3207 = vpack.c.b16 %v2943, %v2939
    %v3208 = vpack.c.b16 %v2944, %v2940
    %v3209 = vpack.c.b16 %v2945, %v2941
    %v3210 = vpack.c.b16 %v2950, %v2946
    %v3211 = vpack.c.b16 %v2951, %v2947
    %v3212 = vpack.c.b16 %v2952, %v2948
    %v3213 = vpack.c.b16 %v2953, %v2949
    %v3214 = vpack.c.b16 %v2958, %v2954
    %v3215 = vpack.c.b16 %v2959, %v2955
    %v3216 = vpack.c.b16 %v2960, %v2956
    %v3217 = vpack.c.b16 %v2961, %v2957
    %v3218 = vpack.c.b16 %v2966, %v2962
    %v3219 = vpack.c.b16 %v2967, %v2963
    %v3220 = vpack.c.b16 %v2968, %v2964
    %v3221 = vpack.c.b16 %v2969, %v2965
    %v3222 = vpack.c.b16 %v2974, %v2970
    %v3223 = vpack.c.b16 %v2975, %v2971
    %v3224 = vpack.c.b16 %v2976, %v2972
    %v3225 = vpack.c.b16 %v2977, %v2973
    %v3226 = vpack.c.b16 %v2982, %v2978
    %v3227 = vpack.c.b16 %v2983, %v2979
    %v3228 = vpack.c.b16 %v2984, %v2980
    %v3229 = vpack.c.b16 %v2985, %v2981
    %v3230 = vpack.c.b16 %v2990, %v2986
    %v3231 = vpack.c.b16 %v2991, %v2987
    %v3232 = vpack.c.b16 %v2992, %v2988
    %v3233 = vpack.c.b16 %v2993, %v2989
    %v3234 = vpack.c.b16 %v2998, %v2994
    %v3235 = vpack.c.b16 %v2999, %v2995
    %v3236 = vpack.c.b16 %v3000, %v2996
    %v3237 = vpack.c.b16 %v3001, %v2997
    %v3238 = vpack.c.b16 %v3006, %v3002
    %v3239 = vpack.c.b16 %v3007, %v3003
    %v3240 = vpack.c.b16 %v3008, %v3004
    %v3241 = vpack.c.b16 %v3009, %v3005
    %v3242 = vpack.c.b16 %v3014, %v3010
    %v3243 = vpack.c.b16 %v3015, %v3011
    %v3244 = vpack.c.b16 %v3016, %v3012
    %v3245 = vpack.c.b16 %v3017, %v3013
    %v3246 = vpack.c.b16 %v3022, %v3018
    %v3247 = vpack.c.b16 %v3023, %v3019
    %v3248 = vpack.c.b16 %v3024, %v3020
    %v3249 = vpack.c.b16 %v3025, %v3021
    %v3250 = vpack.c.b16 %v3030, %v3026
    %v3251 = vpack.c.b16 %v3031, %v3027
    %v3252 = vpack.c.b16 %v3032, %v3028
    %v3253 = vpack.c.b16 %v3033, %v3029
    %v3254 = vpack.c.b16 %v3038, %v3034
    %v3255 = vpack.c.b16 %v3039, %v3035
    %v3256 = vpack.c.b16 %v3040, %v3036
    %v3257 = vpack.c.b16 %v3041, %v3037
    %v3258 = vpack.c.b16 %v3046, %v3042
    %v3259 = vpack.c.b16 %v3047, %v3043
    %v3260 = vpack.c.b16 %v3048, %v3044
    %v3261 = vpack.c.b16 %v3049, %v3045
    %v3262 = vpack.c.b16 %v3054, %v3050
    %v3263 = vpack.c.b16 %v3055, %v3051
    %v3264 = vpack.c.b16 %v3056, %v3052
    %v3265 = vpack.c.b16 %v3057, %v3053
    %v3266 = vpack.c.b16 %v3062, %v3058
    %v3267 = vpack.c.b16 %v3063, %v3059
    %v3268 = vpack.c.b16 %v3064, %v3060
    %v3269 = vpack.c.b16 %v3065, %v3061
    %v3270 = vpack.c.b16 %v3070, %v3066
    %v3271 = vpack.c.b16 %v3071, %v3067
    %v3272 = vpack.c.b16 %v3072, %v3068
    %v3273 = vpack.c.b16 %v3073, %v3069
    %v3274 = vpack.c.b16 %v3078, %v3074
    %v3275 = vpack.c.b16 %v3079, %v3075
    %v3276 = vpack.c.b16 %v3080, %v3076
    %v3277 = vpack.c.b16 %v3081, %v3077
    %v3278 = vpack.c.b16 %v3086, %v3082
    %v3279 = vpack.c.b16 %v3087, %v3083
    %v3280 = vpack.c.b16 %v3088, %v3084
    %v3281 = vpack.c.b16 %v3089, %v3085
    %3474 = vmatprep.subr.bf16.mxu0 %v3091
    %3475 = vmatpush1.bf16.msra.mxu0 %v3090
    %3476 = vmatprep.subr.bf16.mxu0 %v3095
    %3477 = vmatpush1.bf16.msra.mxu0 %v3094
    %3478 = vmatprep.subr.bf16.mxu0 %v3099
    %3479 = vmatpush1.bf16.msra.mxu0 %v3098
    %3480 = vmatprep.subr.bf16.mxu0 %v3103
    %3481 = vmatpush1.bf16.msra.mxu0 %v3102
    %3482 = vmatprep.subr.bf16.mxu0 %v3107
    %3483 = vmatpush1.bf16.msra.mxu0 %v3106
    %3484 = vmatprep.subr.bf16.mxu0 %v3111
    %3485 = vmatpush1.bf16.msra.mxu0 %v3110
    %3486 = vmatprep.subr.bf16.mxu0 %v3115
    %3487 = vmatpush1.bf16.msra.mxu0 %v3114
    %3488 = vmatprep.subr.bf16.mxu0 %v3119
    %3489 = vmatpush1.bf16.msra.mxu0 %v3118
    %3490 = vmatprep.subr.bf16.mxu0 %v3123
    %3491 = vmatpush1.bf16.msra.mxu0 %v3122
    %3492 = vmatprep.subr.bf16.mxu0 %v3127
    %3493 = vmatpush1.bf16.msra.mxu0 %v3126
    %3494 = vmatprep.subr.bf16.mxu0 %v3131
    %3495 = vmatpush1.bf16.msra.mxu0 %v3130
    %3496 = vmatprep.subr.bf16.mxu0 %v3135
    %3497 = vmatpush1.bf16.msra.mxu0 %v3134
    %3498 = vmatprep.subr.bf16.mxu0 %v3139
    %3499 = vmatpush1.bf16.msra.mxu0 %v3138
    %3500 = vmatprep.subr.bf16.mxu0 %v3143
    %3501 = vmatpush1.bf16.msra.mxu0 %v3142
    %3502 = vmatprep.subr.bf16.mxu0 %v3147
    %3503 = vmatpush1.bf16.msra.mxu0 %v3146
    %3504 = vmatprep.subr.bf16.mxu0 %v3151
    %3505 = vmatpush1.bf16.msra.mxu0 %v3150
    %3506 = vmatprep.mubr.bf16.mxu0 %v2295
    %3507 = vmatmul.mubr.bf16.gmra.mrb[0].mxu0 %v2294
    %v3508 = vpop.f32.mrb[0].mxu0
    %v3509 = vadd.f32 %v2497, %v3508
    %v3510 = vpop.f32.mrb[0].mxu0
    %v3511 = vadd.f32 %v2501, %v3510
    %v3512 = vpop.f32.mrb[0].mxu0
    %v3513 = vadd.f32 %v2497, %v3512
    %v3514 = vpop.f32.mrb[0].mxu0
    %v3515 = vadd.f32 %v2501, %v3514
    %3516 = vdwg.mxu0
    %3517 = vmatprep.subr.bf16.mxu0 %v3155
    %3518 = vmatpush1.bf16.msra.mxu0 %v3154
    %3519 = vmatprep.subr.bf16.mxu0 %v3159
    %3520 = vmatpush1.bf16.msra.mxu0 %v3158
    %3521 = vmatprep.subr.bf16.mxu0 %v3163
    %3522 = vmatpush1.bf16.msra.mxu0 %v3162
    %3523 = vmatprep.subr.bf16.mxu0 %v3167
    %3524 = vmatpush1.bf16.msra.mxu0 %v3166
    %3525 = vmatprep.subr.bf16.mxu0 %v3171
    %3526 = vmatpush1.bf16.msra.mxu0 %v3170
    %3527 = vmatprep.subr.bf16.mxu0 %v3175
    %3528 = vmatpush1.bf16.msra.mxu0 %v3174
    %3529 = vmatprep.subr.bf16.mxu0 %v3179
    %3530 = vmatpush1.bf16.msra.mxu0 %v3178
    %3531 = vmatprep.subr.bf16.mxu0 %v3183
    %3532 = vmatpush1.bf16.msra.mxu0 %v3182
    %3533 = vmatprep.subr.bf16.mxu0 %v3187
    %3534 = vmatpush1.bf16.msra.mxu0 %v3186
    %3535 = vmatprep.subr.bf16.mxu0 %v3191
    %3536 = vmatpush1.bf16.msra.mxu0 %v3190
    %3537 = vmatprep.subr.bf16.mxu0 %v3195
    %3538 = vmatpush1.bf16.msra.mxu0 %v3194
    %3539 = vmatprep.subr.bf16.mxu0 %v3199
    %3540 = vmatpush1.bf16.msra.mxu0 %v3198
    %3541 = vmatprep.subr.bf16.mxu0 %v3203
    %3542 = vmatpush1.bf16.msra.mxu0 %v3202
    %3543 = vmatprep.subr.bf16.mxu0 %v3207
    %3544 = vmatpush1.bf16.msra.mxu0 %v3206
    %3545 = vmatprep.subr.bf16.mxu0 %v3211
    %3546 = vmatpush1.bf16.msra.mxu0 %v3210
    %3547 = vmatprep.subr.bf16.mxu0 %v3215
    %3548 = vmatpush1.bf16.msra.mxu0 %v3214
    %3549 = vmatprep.mubr.bf16.mxu0 %v2297
    %3550 = vmatmul.mubr.bf16.gmra.mrb[0].mxu0 %v2296
    %v3551 = vpop.f32.mrb[0].mxu0
    %v3552 = vadd.f32 %v3509, %v3551
    %v3553 = vpop.f32.mrb[0].mxu0
    %v3554 = vadd.f32 %v3511, %v3553
    %v3555 = vpop.f32.mrb[0].mxu0
    %v3556 = vadd.f32 %v3513, %v3555
    %v3557 = vpop.f32.mrb[0].mxu0
    %v3558 = vadd.f32 %v3515, %v3557
    %3559 = vdwg.mxu0
    %3560 = vmatprep.subr.bf16.mxu0 %v3219
    %3561 = vmatpush1.bf16.msra.mxu0 %v3218
    %3562 = vmatprep.subr.bf16.mxu0 %v3223
    %3563 = vmatpush1.bf16.msra.mxu0 %v3222
    %3564 = vmatprep.subr.bf16.mxu0 %v3227
    %3565 = vmatpush1.bf16.msra.mxu0 %v3226
    %3566 = vmatprep.subr.bf16.mxu0 %v3231
    %3567 = vmatpush1.bf16.msra.mxu0 %v3230
    %3568 = vmatprep.subr.bf16.mxu0 %v3235
    %3569 = vmatpush1.bf16.msra.mxu0 %v3234
    %3570 = vmatprep.subr.bf16.mxu0 %v3239
    %3571 = vmatpush1.bf16.msra.mxu0 %v3238
    %3572 = vmatprep.subr.bf16.mxu0 %v3243
    %3573 = vmatpush1.bf16.msra.mxu0 %v3242
    %3574 = vmatprep.subr.bf16.mxu0 %v3247
    %3575 = vmatpush1.bf16.msra.mxu0 %v3246
    %3576 = vmatprep.subr.bf16.mxu0 %v3251
    %3577 = vmatpush1.bf16.msra.mxu0 %v3250
    %3578 = vmatprep.subr.bf16.mxu0 %v3255
    %3579 = vmatpush1.bf16.msra.mxu0 %v3254
    %3580 = vmatprep.subr.bf16.mxu0 %v3259
    %3581 = vmatpush1.bf16.msra.mxu0 %v3258
    %3582 = vmatprep.subr.bf16.mxu0 %v3263
    %3583 = vmatpush1.bf16.msra.mxu0 %v3262
    %3584 = vmatprep.subr.bf16.mxu0 %v3267
    %3585 = vmatpush1.bf16.msra.mxu0 %v3266
    %3586 = vmatprep.subr.bf16.mxu0 %v3271
    %3587 = vmatpush1.bf16.msra.mxu0 %v3270
    %3588 = vmatprep.subr.bf16.mxu0 %v3275
    %3589 = vmatpush1.bf16.msra.mxu0 %v3274
    %3590 = vmatprep.subr.bf16.mxu0 %v3279
    %3591 = vmatpush1.bf16.msra.mxu0 %v3278
    %3592 = vmatprep.mubr.bf16.mxu0 %v2299
    %3593 = vmatmul.mubr.bf16.gmra.mrb[0].mxu0 %v2298
    %v3594 = vpop.f32.mrb[0].mxu0
    %v3595 = vadd.f32 %v3552, %v3594
    %v3596 = vpop.f32.mrb[0].mxu0
    %v3597 = vadd.f32 %v3554, %v3596
    %v3598 = vpop.f32.mrb[0].mxu0
    %v3599 = vadd.f32 %v3556, %v3598
    %v3600 = vpop.f32.mrb[0].mxu0
    %v3601 = vadd.f32 %v3558, %v3600
    %3602 = vdwg.mxu0
    %3603 = vmatprep.subr.bf16.mxu0 %v3093
    %3604 = vmatpush1.bf16.msra.mxu0 %v3092
    %3605 = vmatprep.subr.bf16.mxu0 %v3097
    %3606 = vmatpush1.bf16.msra.mxu0 %v3096
    %3607 = vmatprep.subr.bf16.mxu0 %v3101
    %3608 = vmatpush1.bf16.msra.mxu0 %v3100
    %3609 = vmatprep.subr.bf16.mxu0 %v3105
    %3610 = vmatpush1.bf16.msra.mxu0 %v3104
    %3611 = vmatprep.subr.bf16.mxu0 %v3109
    %3612 = vmatpush1.bf16.msra.mxu0 %v3108
    %3613 = vmatprep.subr.bf16.mxu0 %v3113
    %3614 = vmatpush1.bf16.msra.mxu0 %v3112
    %3615 = vmatprep.subr.bf16.mxu0 %v3117
    %3616 = vmatpush1.bf16.msra.mxu0 %v3116
    %3617 = vmatprep.subr.bf16.mxu0 %v3121
    %3618 = vmatpush1.bf16.msra.mxu0 %v3120
    %3619 = vmatprep.subr.bf16.mxu0 %v3125
    %3620 = vmatpush1.bf16.msra.mxu0 %v3124
    %3621 = vmatprep.subr.bf16.mxu0 %v3129
    %3622 = vmatpush1.bf16.msra.mxu0 %v3128
    %3623 = vmatprep.subr.bf16.mxu0 %v3133
    %3624 = vmatpush1.bf16.msra.mxu0 %v3132
    %3625 = vmatprep.subr.bf16.mxu0 %v3137
    %3626 = vmatpush1.bf16.msra.mxu0 %v3136
    %3627 = vmatprep.subr.bf16.mxu0 %v3141
    %3628 = vmatpush1.bf16.msra.mxu0 %v3140
    %3629 = vmatprep.subr.bf16.mxu0 %v3145
    %3630 = vmatpush1.bf16.msra.mxu0 %v3144
    %3631 = vmatprep.subr.bf16.mxu0 %v3149
    %3632 = vmatpush1.bf16.msra.mxu0 %v3148
    %3633 = vmatprep.subr.bf16.mxu0 %v3153
    %3634 = vmatpush1.bf16.msra.mxu0 %v3152
    %3635 = vmatprep.mubr.bf16.mxu0 %v2295
    %3636 = vmatmul.mubr.bf16.gmra.mrb[0].mxu0 %v2294
    %v3637 = vpop.f32.mrb[0].mxu0
    %v3638 = vadd.f32 %v2505, %v3637
    %v3639 = vpop.f32.mrb[0].mxu0
    %v3640 = vadd.f32 %v2509, %v3639
    %v3641 = vpop.f32.mrb[0].mxu0
    %v3642 = vadd.f32 %v2505, %v3641
    %v3643 = vpop.f32.mrb[0].mxu0
    %v3644 = vadd.f32 %v2509, %v3643
    %3645 = vdwg.mxu0
    %3646 = vmatprep.subr.bf16.mxu0 %v3157
    %3647 = vmatpush1.bf16.msra.mxu0 %v3156
    %3648 = vmatprep.subr.bf16.mxu0 %v3161
    %3649 = vmatpush1.bf16.msra.mxu0 %v3160
    %3650 = vmatprep.subr.bf16.mxu0 %v3165
    %3651 = vmatpush1.bf16.msra.mxu0 %v3164
    %3652 = vmatprep.subr.bf16.mxu0 %v3169
    %3653 = vmatpush1.bf16.msra.mxu0 %v3168
    %3654 = vmatprep.subr.bf16.mxu0 %v3173
    %3655 = vmatpush1.bf16.msra.mxu0 %v3172
    %3656 = vmatprep.subr.bf16.mxu0 %v3177
    %3657 = vmatpush1.bf16.msra.mxu0 %v3176
    %3658 = vmatprep.subr.bf16.mxu0 %v3181
    %3659 = vmatpush1.bf16.msra.mxu0 %v3180
    %3660 = vmatprep.subr.bf16.mxu0 %v3185
    %3661 = vmatpush1.bf16.msra.mxu0 %v3184
    %3662 = vmatprep.subr.bf16.mxu0 %v3189
    %3663 = vmatpush1.bf16.msra.mxu0 %v3188
    %3664 = vmatprep.subr.bf16.mxu0 %v3193
    %3665 = vmatpush1.bf16.msra.mxu0 %v3192
    %3666 = vmatprep.subr.bf16.mxu0 %v3197
    %3667 = vmatpush1.bf16.msra.mxu0 %v3196
    %3668 = vmatprep.subr.bf16.mxu0 %v3201
    %3669 = vmatpush1.bf16.msra.mxu0 %v3200
    %3670 = vmatprep.subr.bf16.mxu0 %v3205
    %3671 = vmatpush1.bf16.msra.mxu0 %v3204
    %3672 = vmatprep.subr.bf16.mxu0 %v3209
    %3673 = vmatpush1.bf16.msra.mxu0 %v3208
    %3674 = vmatprep.subr.bf16.mxu0 %v3213
    %3675 = vmatpush1.bf16.msra.mxu0 %v3212
    %3676 = vmatprep.subr.bf16.mxu0 %v3217
    %3677 = vmatpush1.bf16.msra.mxu0 %v3216
    %3678 = vmatprep.mubr.bf16.mxu0 %v2297
    %3679 = vmatmul.mubr.bf16.gmra.mrb[0].mxu0 %v2296
    %v3680 = vpop.f32.mrb[0].mxu0
    %v3681 = vadd.f32 %v3638, %v3680
    %v3682 = vpop.f32.mrb[0].mxu0
    %v3683 = vadd.f32 %v3640, %v3682
    %v3684 = vpop.f32.mrb[0].mxu0
    %v3685 = vadd.f32 %v3642, %v3684
    %v3686 = vpop.f32.mrb[0].mxu0
    %v3687 = vadd.f32 %v3644, %v3686
    %3688 = vdwg.mxu0
    %3689 = vmatprep.subr.bf16.mxu0 %v3221
    %3690 = vmatpush1.bf16.msra.mxu0 %v3220
    %3691 = vmatprep.subr.bf16.mxu0 %v3225
    %3692 = vmatpush1.bf16.msra.mxu0 %v3224
    %3693 = vmatprep.subr.bf16.mxu0 %v3229
    %3694 = vmatpush1.bf16.msra.mxu0 %v3228
    %3695 = vmatprep.subr.bf16.mxu0 %v3233
    %3696 = vmatpush1.bf16.msra.mxu0 %v3232
    %3697 = vmatprep.subr.bf16.mxu0 %v3237
    %3698 = vmatpush1.bf16.msra.mxu0 %v3236
    %3699 = vmatprep.subr.bf16.mxu0 %v3241
    %3700 = vmatpush1.bf16.msra.mxu0 %v3240
    %3701 = vmatprep.subr.bf16.mxu0 %v3245
    %3702 = vmatpush1.bf16.msra.mxu0 %v3244
    %3703 = vmatprep.subr.bf16.mxu0 %v3249
    %3704 = vmatpush1.bf16.msra.mxu0 %v3248
    %3705 = vmatprep.subr.bf16.mxu0 %v3253
    %3706 = vmatpush1.bf16.msra.mxu0 %v3252
    %3707 = vmatprep.subr.bf16.mxu0 %v3257
    %3708 = vmatpush1.bf16.msra.mxu0 %v3256
    %3709 = vmatprep.subr.bf16.mxu0 %v3261
    %3710 = vmatpush1.bf16.msra.mxu0 %v3260
    %3711 = vmatprep.subr.bf16.mxu0 %v3265
    %3712 = vmatpush1.bf16.msra.mxu0 %v3264
    %3713 = vmatprep.subr.bf16.mxu0 %v3269
    %3714 = vmatpush1.bf16.msra.mxu0 %v3268
    %3715 = vmatprep.subr.bf16.mxu0 %v3273
    %3716 = vmatpush1.bf16.msra.mxu0 %v3272
    %3717 = vmatprep.subr.bf16.mxu0 %v3277
    %3718 = vmatpush1.bf16.msra.mxu0 %v3276
    %3719 = vmatprep.subr.bf16.mxu0 %v3281
    %3720 = vmatpush1.bf16.msra.mxu0 %v3280
    %3721 = vmatprep.mubr.bf16.mxu0 %v2299
    %3722 = vmatmul.mubr.bf16.gmra.mrb[0].mxu0 %v2298
    %v3723 = vpop.f32.mrb[0].mxu0
    %v3724 = vadd.f32 %v3681, %v3723
    %v3725 = vpop.f32.mrb[0].mxu0
    %v3726 = vadd.f32 %v3683, %v3725
    %v3727 = vpop.f32.mrb[0].mxu0
    %v3728 = vadd.f32 %v3685, %v3727
    %v3729 = vpop.f32.mrb[0].mxu0
    %v3730 = vadd.f32 %v3687, %v3729
    %3731 = vdwg.mxu0
    %v3732 = vmax.f32 %v3595, 0.0
    %v3733 = vmax.f32 %v3597, 0.0
    %v3734 = vmax.f32 %v3724, 0.0
    %v3735 = vmax.f32 %v3726, 0.0
    %v3736 = vmax.f32 %v3599, 0.0
    %v3737 = vmax.f32 %v3601, 0.0
    %v3738 = vmax.f32 %v3728, 0.0
    %v3739 = vmax.f32 %v3730, 0.0
    %v3740 = vpack.c.bf16 %v3736, %v3732
    %v3741 = vpack.c.bf16 %v3737, %v3733
    %v3742 = vpack.c.bf16 %v3738, %v3734
    %v3743 = vpack.c.bf16 %v3739, %v3735
    %v3744 = vld [vmem:[#allocation11] sm:$0xf]
    %v3745 = vld [vmem:[#allocation11 + $0x4] sm:$0xf]
    %v3746 = vld [vmem:[#allocation11 + $0x8] sm:$0xf]
    %v3747 = vld [vmem:[#allocation11 + $0xc] sm:$0xf]
    %v3748 = vld [vmem:[#allocation11 + $0x10] sm:$0xf]
    %v3749 = vld [vmem:[#allocation11 + $0x14] sm:$0xf]
    %v3750 = vld [vmem:[#allocation11 + $0x18] sm:$0xf]
    %v3751 = vld [vmem:[#allocation11 + $0x1c] sm:$0xf]
    %v3752 = vld [vmem:[#allocation11 + $0x20] sm:$0xf]
    %v3753 = vld [vmem:[#allocation11 + $0x24] sm:$0xf]
    %v3754 = vld [vmem:[#allocation11 + $0x28] sm:$0xf]
    %v3755 = vld [vmem:[#allocation11 + $0x2c] sm:$0xf]
    %v3756 = vld [vmem:[#allocation11 + $0x30] sm:$0xf]
    %v3757 = vld [vmem:[#allocation11 + $0x34] sm:$0xf]
    %v3758 = vld [vmem:[#allocation11 + $0x38] sm:$0xf]
    %v3759 = vld [vmem:[#allocation11 + $0x3c] sm:$0xf]
    %v3760 = vld [vmem:[#allocation11 + $0x40] sm:$0xf]
    %v3761 = vld [vmem:[#allocation11 + $0x44] sm:$0xf]
    %v3762 = vld [vmem:[#allocation11 + $0x48] sm:$0xf]
    %v3763 = vld [vmem:[#allocation11 + $0x4c] sm:$0xf]
    %v3764 = vld [vmem:[#allocation11 + $0x50] sm:$0xf]
    %v3765 = vld [vmem:[#allocation11 + $0x54] sm:$0xf]
    %v3766 = vld [vmem:[#allocation11 + $0x58] sm:$0xf]
    %v3767 = vld [vmem:[#allocation11 + $0x5c] sm:$0xf]
    %v3768 = vld [vmem:[#allocation11 + $0x60] sm:$0xf]
    %v3769 = vld [vmem:[#allocation11 + $0x64] sm:$0xf]
    %v3770 = vld [vmem:[#allocation11 + $0x68] sm:$0xf]
    %v3771 = vld [vmem:[#allocation11 + $0x6c] sm:$0xf]
    %v3772 = vld [vmem:[#allocation11 + $0x70] sm:$0xf]
    %v3773 = vld [vmem:[#allocation11 + $0x74] sm:$0xf]
    %v3774 = vld [vmem:[#allocation11 + $0x78] sm:$0xf]
    %v3775 = vld [vmem:[#allocation11 + $0x7c] sm:$0xf]
    %v3776 = vld [vmem:[#allocation11 + $0x80] sm:$0xf]
    %v3777 = vld [vmem:[#allocation11 + $0x84] sm:$0xf]
    %v3778 = vld [vmem:[#allocation11 + $0x88] sm:$0xf]
    %v3779 = vld [vmem:[#allocation11 + $0x8c] sm:$0xf]
    %v3780 = vld [vmem:[#allocation11 + $0x90] sm:$0xf]
    %v3781 = vld [vmem:[#allocation11 + $0x94] sm:$0xf]
    %v3782 = vld [vmem:[#allocation11 + $0x98] sm:$0xf]
    %v3783 = vld [vmem:[#allocation11 + $0x9c] sm:$0xf]
    %v3784 = vld [vmem:[#allocation11 + $0xa0] sm:$0xf]
    %v3785 = vld [vmem:[#allocation11 + $0xa4] sm:$0xf]
    %v3786 = vld [vmem:[#allocation11 + $0xa8] sm:$0xf]
    %v3787 = vld [vmem:[#allocation11 + $0xac] sm:$0xf]
    %v3788 = vld [vmem:[#allocation11 + $0xb0] sm:$0xf]
    %v3789 = vld [vmem:[#allocation11 + $0xb4] sm:$0xf]
    %v3790 = vld [vmem:[#allocation11 + $0xb8] sm:$0xf]
    %v3791 = vld [vmem:[#allocation11 + $0xbc] sm:$0xf]
    %v3792 = vld [vmem:[#allocation11 + $0xc0] sm:$0xf]
    %v3793 = vld [vmem:[#allocation11 + $0xc4] sm:$0xf]
    %v3794 = vld [vmem:[#allocation11 + $0xc8] sm:$0xf]
    %v3795 = vld [vmem:[#allocation11 + $0xcc] sm:$0xf]
    %v3796 = vld [vmem:[#allocation11 + $0xd0] sm:$0xf]
    %v3797 = vld [vmem:[#allocation11 + $0xd4] sm:$0xf]
    %v3798 = vld [vmem:[#allocation11 + $0xd8] sm:$0xf]
    %v3799 = vld [vmem:[#allocation11 + $0xdc] sm:$0xf]
    %v3800 = vld [vmem:[#allocation11 + $0xe0] sm:$0xf]
    %v3801 = vld [vmem:[#allocation11 + $0xe4] sm:$0xf]
    %v3802 = vld [vmem:[#allocation11 + $0xe8] sm:$0xf]
    %v3803 = vld [vmem:[#allocation11 + $0xec] sm:$0xf]
    %v3804 = vld [vmem:[#allocation11 + $0xf0] sm:$0xf]
    %v3805 = vld [vmem:[#allocation11 + $0xf4] sm:$0xf]
    %v3806 = vld [vmem:[#allocation11 + $0xf8] sm:$0xf]
    %v3807 = vld [vmem:[#allocation11 + $0xfc] sm:$0xf]
    %v3808 = vld [vmem:[#allocation13] sm:$0x1]
    %v3810 = vlaneseq
    %v3811 = vshrl.u32 %v3810, 7
    %v3812 = vsub.s32 0, %v3811
    %v3813 = vrot.slane %v3808, %v3812
    %v3879 = vunpack.c.l.b16 %v3744
    %v3880 = vunpack.c.l.b16 %v3745
    %v3881 = vunpack.c.l.b16 %v3746
    %v3882 = vunpack.c.l.b16 %v3747
    %v3883 = vunpack.c.l.b16 %v3748
    %v3884 = vunpack.c.l.b16 %v3749
    %v3885 = vunpack.c.l.b16 %v3750
    %v3886 = vunpack.c.l.b16 %v3751
    %v3887 = vunpack.c.l.b16 %v3752
    %v3888 = vunpack.c.l.b16 %v3753
    %v3889 = vunpack.c.l.b16 %v3754
    %v3890 = vunpack.c.l.b16 %v3755
    %v3891 = vunpack.c.l.b16 %v3756
    %v3892 = vunpack.c.l.b16 %v3757
    %v3893 = vunpack.c.l.b16 %v3758
    %v3894 = vunpack.c.l.b16 %v3759
    %v3895 = vunpack.c.l.b16 %v3760
    %v3896 = vunpack.c.l.b16 %v3761
    %v3897 = vunpack.c.l.b16 %v3762
    %v3898 = vunpack.c.l.b16 %v3763
    %v3899 = vunpack.c.l.b16 %v3764
    %v3900 = vunpack.c.l.b16 %v3765
    %v3901 = vunpack.c.l.b16 %v3766
    %v3902 = vunpack.c.l.b16 %v3767
    %v3903 = vunpack.c.l.b16 %v3768
    %v3904 = vunpack.c.l.b16 %v3769
    %v3905 = vunpack.c.l.b16 %v3770
    %v3906 = vunpack.c.l.b16 %v3771
    %v3907 = vunpack.c.l.b16 %v3772
    %v3908 = vunpack.c.l.b16 %v3773
    %v3909 = vunpack.c.l.b16 %v3774
    %v3910 = vunpack.c.l.b16 %v3775
    %v3911 = vunpack.c.l.b16 %v3776
    %v3912 = vunpack.c.l.b16 %v3777
    %v3913 = vunpack.c.l.b16 %v3778
    %v3914 = vunpack.c.l.b16 %v3779
    %v3915 = vunpack.c.l.b16 %v3780
    %v3916 = vunpack.c.l.b16 %v3781
    %v3917 = vunpack.c.l.b16 %v3782
    %v3918 = vunpack.c.l.b16 %v3783
    %v3919 = vunpack.c.l.b16 %v3784
    %v3920 = vunpack.c.l.b16 %v3785
    %v3921 = vunpack.c.l.b16 %v3786
    %v3922 = vunpack.c.l.b16 %v3787
    %v3923 = vunpack.c.l.b16 %v3788
    %v3924 = vunpack.c.l.b16 %v3789
    %v3925 = vunpack.c.l.b16 %v3790
    %v3926 = vunpack.c.l.b16 %v3791
    %v3927 = vunpack.c.l.b16 %v3792
    %v3928 = vunpack.c.l.b16 %v3793
    %v3929 = vunpack.c.l.b16 %v3794
    %v3930 = vunpack.c.l.b16 %v3795
    %v3931 = vunpack.c.l.b16 %v3796
    %v3932 = vunpack.c.l.b16 %v3797
    %v3933 = vunpack.c.l.b16 %v3798
    %v3934 = vunpack.c.l.b16 %v3799
    %v3935 = vunpack.c.l.b16 %v3800
    %v3936 = vunpack.c.l.b16 %v3801
    %v3937 = vunpack.c.l.b16 %v3802
    %v3938 = vunpack.c.l.b16 %v3803
    %v3939 = vunpack.c.l.b16 %v3804
    %v3940 = vunpack.c.l.b16 %v3805
    %v3941 = vunpack.c.l.b16 %v3806
    %v3942 = vunpack.c.l.b16 %v3807
    %v3943 = vpack.c.b16 %v3880, %v3879
    %v3944 = vpack.c.b16 %v3882, %v3881
    %v3945 = vpack.c.b16 %v3884, %v3883
    %v3946 = vpack.c.b16 %v3886, %v3885
    %v3947 = vpack.c.b16 %v3888, %v3887
    %v3948 = vpack.c.b16 %v3890, %v3889
    %v3949 = vpack.c.b16 %v3892, %v3891
    %v3950 = vpack.c.b16 %v3894, %v3893
    %v3951 = vpack.c.b16 %v3896, %v3895
    %v3952 = vpack.c.b16 %v3898, %v3897
    %v3953 = vpack.c.b16 %v3900, %v3899
    %v3954 = vpack.c.b16 %v3902, %v3901
    %v3955 = vpack.c.b16 %v3904, %v3903
    %v3956 = vpack.c.b16 %v3906, %v3905
    %v3957 = vpack.c.b16 %v3908, %v3907
    %v3958 = vpack.c.b16 %v3910, %v3909
    %v3959 = vpack.c.b16 %v3912, %v3911
    %v3960 = vpack.c.b16 %v3914, %v3913
    %v3961 = vpack.c.b16 %v3916, %v3915
    %v3962 = vpack.c.b16 %v3918, %v3917
    %v3963 = vpack.c.b16 %v3920, %v3919
    %v3964 = vpack.c.b16 %v3922, %v3921
    %v3965 = vpack.c.b16 %v3924, %v3923
    %v3966 = vpack.c.b16 %v3926, %v3925
    %v3967 = vpack.c.b16 %v3928, %v3927
    %v3968 = vpack.c.b16 %v3930, %v3929
    %v3969 = vpack.c.b16 %v3932, %v3931
    %v3970 = vpack.c.b16 %v3934, %v3933
    %v3971 = vpack.c.b16 %v3936, %v3935
    %v3972 = vpack.c.b16 %v3938, %v3937
    %v3973 = vpack.c.b16 %v3940, %v3939
    %v3974 = vpack.c.b16 %v3942, %v3941
    %4007 = vmatprep.subr.bf16.mxu0 0
    %4008 = vmatpush1.bf16.msra.mxu0 %v3943
    %4009 = vmatprep.subr.bf16.mxu0 0
    %4010 = vmatpush1.bf16.msra.mxu0 %v3944
    %4011 = vmatprep.subr.bf16.mxu0 0
    %4012 = vmatpush1.bf16.msra.mxu0 %v3945
    %4013 = vmatprep.subr.bf16.mxu0 0
    %4014 = vmatpush1.bf16.msra.mxu0 %v3946
    %4015 = vmatprep.subr.bf16.mxu0 0
    %4016 = vmatpush1.bf16.msra.mxu0 %v3947
    %4017 = vmatprep.subr.bf16.mxu0 0
    %4018 = vmatpush1.bf16.msra.mxu0 %v3948
    %4019 = vmatprep.subr.bf16.mxu0 0
    %4020 = vmatpush1.bf16.msra.mxu0 %v3949
    %4021 = vmatprep.subr.bf16.mxu0 0
    %4022 = vmatpush1.bf16.msra.mxu0 %v3950
    %4023 = vmatprep.subr.bf16.mxu0 0
    %4024 = vmatpush1.bf16.msra.mxu0 %v3951
    %4025 = vmatprep.subr.bf16.mxu0 0
    %4026 = vmatpush1.bf16.msra.mxu0 %v3952
    %4027 = vmatprep.subr.bf16.mxu0 0
    %4028 = vmatpush1.bf16.msra.mxu0 %v3953
    %4029 = vmatprep.subr.bf16.mxu0 0
    %4030 = vmatpush1.bf16.msra.mxu0 %v3954
    %4031 = vmatprep.subr.bf16.mxu0 0
    %4032 = vmatpush1.bf16.msra.mxu0 %v3955
    %4033 = vmatprep.subr.bf16.mxu0 0
    %4034 = vmatpush1.bf16.msra.mxu0 %v3956
    %4035 = vmatprep.subr.bf16.mxu0 0
    %4036 = vmatpush1.bf16.msra.mxu0 %v3957
    %4037 = vmatprep.subr.bf16.mxu0 0
    %4038 = vmatpush1.bf16.msra.mxu0 %v3958
    %4039 = vmatprep.mubr.bf16.mxu0 %v3741
    %4040 = vmatmul.mubr.bf16.gmra.mrb[0].mxu0 %v3740
    %v4041 = vpop.f32.mrb[0].mxu0
    %v4042 = vadd.f32 %v3813, %v4041
    %v4043 = vpop.f32.mrb[0].mxu0
    %v4044 = vpop.f32.mrb[0].mxu0
    %v4045 = vadd.f32 %v3813, %v4044
    %v4046 = vpop.f32.mrb[0].mxu0
    %4047 = vdwg.mxu0
    %4048 = vmatprep.subr.bf16.mxu0 0
    %4049 = vmatpush1.bf16.msra.mxu0 %v3959
    %4050 = vmatprep.subr.bf16.mxu0 0
    %4051 = vmatpush1.bf16.msra.mxu0 %v3960
    %4052 = vmatprep.subr.bf16.mxu0 0
    %4053 = vmatpush1.bf16.msra.mxu0 %v3961
    %4054 = vmatprep.subr.bf16.mxu0 0
    %4055 = vmatpush1.bf16.msra.mxu0 %v3962
    %4056 = vmatprep.subr.bf16.mxu0 0
    %4057 = vmatpush1.bf16.msra.mxu0 %v3963
    %4058 = vmatprep.subr.bf16.mxu0 0
    %4059 = vmatpush1.bf16.msra.mxu0 %v3964
    %4060 = vmatprep.subr.bf16.mxu0 0
    %4061 = vmatpush1.bf16.msra.mxu0 %v3965
    %4062 = vmatprep.subr.bf16.mxu0 0
    %4063 = vmatpush1.bf16.msra.mxu0 %v3966
    %4064 = vmatprep.subr.bf16.mxu0 0
    %4065 = vmatpush1.bf16.msra.mxu0 %v3967
    %4066 = vmatprep.subr.bf16.mxu0 0
    %4067 = vmatpush1.bf16.msra.mxu0 %v3968
    %4068 = vmatprep.subr.bf16.mxu0 0
    %4069 = vmatpush1.bf16.msra.mxu0 %v3969
    %4070 = vmatprep.subr.bf16.mxu0 0
    %4071 = vmatpush1.bf16.msra.mxu0 %v3970
    %4072 = vmatprep.subr.bf16.mxu0 0
    %4073 = vmatpush1.bf16.msra.mxu0 %v3971
    %4074 = vmatprep.subr.bf16.mxu0 0
    %4075 = vmatpush1.bf16.msra.mxu0 %v3972
    %4076 = vmatprep.subr.bf16.mxu0 0
    %4077 = vmatpush1.bf16.msra.mxu0 %v3973
    %4078 = vmatprep.subr.bf16.mxu0 0
    %4079 = vmatpush1.bf16.msra.mxu0 %v3974
    %4080 = vmatprep.mubr.bf16.mxu0 %v3743
    %4081 = vmatmul.mubr.bf16.gmra.mrb[0].mxu0 %v3742
    %v4082 = vpop.f32.mrb[0].mxu0
    %v4083 = vadd.f32 %v4042, %v4082
    %v4084 = vpop.f32.mrb[0].mxu0
    %v4085 = vpop.f32.mrb[0].mxu0
    %v4086 = vadd.f32 %v4045, %v4085
    %v4087 = vpop.f32.mrb[0].mxu0
    %4088 = vdwg.mxu0
    %4089 = vst [vmem:[#allocation14] sm:$0xff] %v4083
    %4090 = vst [vmem:[#allocation14 + $0x8] sm:$0xff] %v4086
    // Predicated region
    $region58: #{tpu_custom_call.1} parent=1 // pred_check
      _
    $region59: #{tpu_custom_call.1} parent=1 // pred_check_branch
      %4092 = sbr.rel (0) target = $region61
    $region60: #{tpu_custom_call.1} parent=1 // pred_region
      %s4094 = ssub.s32 256, 128
      %4095 = vsyncadd [#allocation4], %s4094
      %s4096 = sshll.u32 [#allocation14], 4
      %s4097 = int_to_ptr.vmem [resolvable:$true] %s4096
      %4102 = dma.vmem_to_hbm [thread:$0]  %s4097, 128, %s7, [#allocation4], 128, 128, 8
    $region61: #{tpu_custom_call.1} parent=1 // pred_fallthru
      _
    // Predicated region
    $region62: #{tpu_custom_call.1} parent=1 // pred_check
      _
    $region63: #{tpu_custom_call.1} parent=1 // pred_check_branch
      %4104 = sbr.rel (0) target = $region65
    $region64: #{tpu_custom_call.1} parent=1 // pred_region
      %4105 = dma.done [#allocation4], 256
    $region65: #{tpu_custom_call.1} parent=1 // pred_fallthru
      _
    %4106 = vsyncpa [#allocation3], 1
    %4107 = vsyncpa [#allocation6], 1
    %4108 = vsyncpa [#allocation9], 1
    %4109 = vsyncpa [#allocation12], 1
    %4110 = vsyncpa [#allocation4], 1

</llo_original>
